<compile_context>
chip_gen: v7x
topology: tpu7x:2x2x1
jax: 0.10.0
libtpu: 0.0.40
codegen_flags: <defaults>
</compile_context>

<pallas_src>
import functools
import math

import jax
import jax.numpy as jnp
from jax.experimental import pallas as pl
from jax.experimental.pallas import tpu as pltpu


# ------------------------- in-kernel helpers -------------------------

def _layer_norm(v, g, b, eps):
    mu = jnp.mean(v, axis=-1, keepdims=True)
    var = jnp.mean((v - mu) ** 2, axis=-1, keepdims=True)
    return (v - mu) * jax.lax.rsqrt(var + eps) * g + b


def _bf16_matmul(a, w, bias):
    # bf16 MXU inputs, f32 accumulation, f32 bias add.
    return jnp.dot(a.astype(jnp.bfloat16), w,
                   preferred_element_type=jnp.float32) + bias


# ------------------------- fused encoder kernel -------------------------

def _encoder_kernel(
        # per-batch inputs
        x_ref, bias_ref, pos_ref, opid_ref,
        # embedding LayerNorm
        emb_g_ref, emb_b_ref,
        # stacked transformer layer weights [L, ...]
        qkv_w_ref, qkv_b_ref, wo_ref, bo_ref, ln1_g_ref, ln1_b_ref,
        w1_ref, b1_ref, w2_ref, b2_ref, ln2_g_ref, ln2_b_ref,
        # heads
        pool_w_ref, pool_b_ref, act_w_ref, act_b_ref, dom_w_ref, dom_b_ref,
        # outputs
        seq_ref, pooled_ref, scores_ref, dom_ref, dec_ref,
        *, n_layers, n_heads, max_update, update_id, compute_op_ids, eps):
    S, H = x_ref.shape[1], x_ref.shape[2]
    J = pos_ref.shape[1]
    dh = H // n_heads
    scale = 1.0 / math.sqrt(dh)

    bias = bias_ref[0]                                        # (1, S) mask bias
    x = _layer_norm(x_ref[0], emb_g_ref[...], emb_b_ref[...], eps)   # (S, H)

    # ---- transformer layers: fused QKV, in-kernel head split, FFN ----
    for l in range(n_layers):
        qkv = _bf16_matmul(x, qkv_w_ref[l], qkv_b_ref[l])     # (S, 3H)
        ctx_heads = []
        for hd in range(n_heads):
            qh = qkv[:, hd * dh:(hd + 1) * dh].astype(jnp.bfloat16)
            kh = qkv[:, H + hd * dh:H + (hd + 1) * dh].astype(jnp.bfloat16)
            vh = qkv[:, 2 * H + hd * dh:2 * H + (hd + 1) * dh].astype(jnp.bfloat16)
            s = jax.lax.dot_general(qh, kh, (((1,), (1,)), ((), ())),
                                    preferred_element_type=jnp.float32)
            s = s * scale + bias                              # (S, S)
            m = jnp.max(s, axis=-1, keepdims=True)
            p = jnp.exp(s - m)
            p = p * pl.reciprocal(jnp.sum(p, axis=-1, keepdims=True), approx=True)
            ctx_heads.append(jnp.dot(p.astype(jnp.bfloat16), vh,
                                     preferred_element_type=jnp.float32))
        ctx = jnp.concatenate(ctx_heads, axis=-1)             # (S, H)
        x = _layer_norm(x + _bf16_matmul(ctx, wo_ref[l], bo_ref[l]),
                        ln1_g_ref[l], ln1_b_ref[l], eps)
        ff = jax.nn.gelu(_bf16_matmul(x, w1_ref[l], b1_ref[l]))
        x = _layer_norm(x + _bf16_matmul(ff, w2_ref[l], b2_ref[l]),
                        ln2_g_ref[l], ln2_b_ref[l], eps)

    seq_ref[0] = x

    # ---- pooler + domain head (dropout = identity, eval mode) ----
    pooled = jnp.tanh(jnp.dot(x[0:1, :], pool_w_ref[...],
                              preferred_element_type=jnp.float32) + pool_b_ref[...])
    pooled_ref[0] = pooled
    dom_ref[0] = jnp.dot(pooled, dom_w_ref[...],
                         preferred_element_type=jnp.float32) + dom_b_ref[...]

    # ---- state-position gather: one-hot matmul (exact row copy, no host sync) ----
    pos = pos_ref[0]                                          # (J, 1) int32
    col = jax.lax.broadcasted_iota(jnp.int32, (J, S), 1)
    one_hot = (col == pos).astype(jnp.float32)                # (J, S)
    state_out = jnp.dot(one_hot, x, preferred_element_type=jnp.float32)  # (J, H)

    # ---- action head + softmax over the slot axis (torch: softmax(dim=1)) ----
    logits = jnp.dot(state_out, act_w_ref[...],
                     preferred_element_type=jnp.float32) + act_b_ref[...]  # (J, n_op)
    n_op = logits.shape[-1]
    m = jnp.max(logits, axis=0, keepdims=True)
    e = jnp.exp(logits - m)
    scores = e * pl.reciprocal(jnp.sum(e, axis=0, keepdims=True), approx=True)
    scores_ref[0] = scores

    # ---- op_ids fallback: matches torch `op_ids.scatter_(1, argmax(scores,-1), 1)` ----
    if compute_op_ids:
        mx = jnp.max(scores, axis=-1, keepdims=True)          # (J, 1)
        op_col = jax.lax.broadcasted_iota(jnp.int32, (J, n_op), 1)
        op_idx = jnp.min(jnp.where(scores >= mx, op_col, n_op),
                         axis=-1, keepdims=True)              # (J, 1) first argmax
        slot = jax.lax.broadcasted_iota(jnp.int32, (J, J), 1)
        op_ids = jnp.max((slot == op_idx).astype(jnp.float32),
                         axis=0, keepdims=True)               # (1, J) scatter of ones
    else:
        op_ids = opid_ref[0]                                  # (1, J)

    # ---- decoder_inputs: static-shape ragged gather via a select matrix ----
    is_upd = (op_ids == float(update_id)).astype(jnp.float32)  # (1, J)
    row = jax.lax.broadcasted_iota(jnp.int32, (J, J), 0)
    colj = jax.lax.broadcasted_iota(jnp.int32, (J, J), 1)
    tri = (row <= colj).astype(jnp.float32)                    # (J, J) prefix-sum matrix
    rank = (jnp.dot(is_upd, tri, preferred_element_type=jnp.float32)
            - 1.0).astype(jnp.int32)                           # (1, J) 0-based update rank
    u_iota = jax.lax.broadcasted_iota(jnp.int32, (max_update, J), 0)
    sel = is_upd * (u_iota == rank).astype(jnp.float32)        # (U, J) 0/1 select
    dec_ref[0] = jnp.dot(sel, state_out, preferred_element_type=jnp.float32)


# ------------------------- model setup & wrapper -------------------------

class Config:
    vocab_size = 100
    max_position = 64
    type_vocab = 2
    hidden = 32
    n_heads = 4
    intermediate = 64
    n_layers = 2


def init_params(key, cfg, n_op, n_domain):
    H, I, L = cfg.hidden, cfg.intermediate, cfg.n_layers
    keys = iter(jax.random.split(key, 32))

    def w(shape, dtype=jnp.float32, scale=0.02):
        return (scale * jax.random.normal(next(keys), shape)).astype(dtype)

    return {
        "word_emb": w((cfg.vocab_size, H)),
        "pos_emb": w((cfg.max_position, H)),
        "type_emb": w((cfg.type_vocab, H)),
        "emb_ln_g": jnp.ones((1, H), jnp.float32),
        "emb_ln_b": jnp.zeros((1, H), jnp.float32),
        # stacked transformer layers; fused QKV; matmul weights in bf16
        "qkv_w": w((L, H, 3 * H), jnp.bfloat16),
        "qkv_b": jnp.zeros((L, 1, 3 * H), jnp.float32),
        "wo": w((L, H, H), jnp.bfloat16),
        "bo": jnp.zeros((L, 1, H), jnp.float32),
        "ln1_g": jnp.ones((L, 1, H), jnp.float32),
        "ln1_b": jnp.zeros((L, 1, H), jnp.float32),
        "w1": w((L, H, I), jnp.bfloat16),
        "b1": jnp.zeros((L, 1, I), jnp.float32),
        "w2": w((L, I, H), jnp.bfloat16),
        "b2": jnp.zeros((L, 1, H), jnp.float32),
        "ln2_g": jnp.ones((L, 1, H), jnp.float32),
        "ln2_b": jnp.zeros((L, 1, H), jnp.float32),
        "pool_w": w((H, H)), "pool_b": jnp.zeros((1, H), jnp.float32),
        "action_w": w((H, n_op)), "action_b": jnp.zeros((1, n_op), jnp.float32),
        "domain_w": w((H, n_domain)), "domain_b": jnp.zeros((1, n_domain), jnp.float32),
    }


def encoder_forward(params, cfg, n_op, n_domain, update_id,
                    input_ids, token_type_ids, state_positions, attention_mask,
                    op_ids=None, max_update=None, exclude_domain=False):
    B, S = input_ids.shape
    H = cfg.hidden
    J = state_positions.shape[1]
    if max_update is None:
        # TODO(synk): torch derives max_update from data via .item() (a host
        # sync); use the static upper bound J so the forward stays on-device.
        max_update = J

    # Embedding lookups + hoisted additive attention-mask bias (reused by all layers).
    x_emb = (params["word_emb"][input_ids]
             + params["pos_emb"][jnp.arange(S)][None, :, :]
             + params["type_emb"][token_type_ids]).astype(jnp.float32)
    mask_bias = ((1.0 - attention_mask.astype(jnp.float32)) * -10000.0
                 ).reshape(B, 1, S)
    pos_in = state_positions.astype(jnp.int32).reshape(B, J, 1)
    compute_op_ids = op_ids is None
    op_in = (jnp.zeros((B, 1, J), jnp.float32) if compute_op_ids
             else op_ids.astype(jnp.float32).reshape(B, 1, J))

    kernel = functools.partial(
        _encoder_kernel, n_layers=cfg.n_layers, n_heads=cfg.n_heads,
        max_update=max_update, update_id=update_id,
        compute_op_ids=compute_op_ids, eps=1e-12)

    def batch_spec(shape):
        nd = len(shape)
        return pl.BlockSpec((1,) + tuple(shape[1:]),
                            lambda b, nd=nd: (b,) + (0,) * (nd - 1))

    def full_spec(arr):
        nd = arr.ndim
        return pl.BlockSpec(arr.shape, lambda b, nd=nd: (0,) * nd)

    weight_names = ["emb_ln_g", "emb_ln_b",
                    "qkv_w", "qkv_b", "wo", "bo", "ln1_g", "ln1_b",
                    "w1", "b1", "w2", "b2", "ln2_g", "ln2_b",
                    "pool_w", "pool_b", "action_w", "action_b",
                    "domain_w", "domain_b"]
    weights = [params[n] for n in weight_names]

    out_shapes = (
        jax.ShapeDtypeStruct((B, S, H), jnp.float32),            # sequence_output
        jax.ShapeDtypeStruct((B, 1, H), jnp.float32),            # pooled_output
        jax.ShapeDtypeStruct((B, J, n_op), jnp.float32),         # state_scores
        jax.ShapeDtypeStruct((B, 1, n_domain), jnp.float32),     # domain_scores
        jax.ShapeDtypeStruct((B, max_update, H), jnp.float32),   # decoder_inputs
    )
    out_specs = (batch_spec((B, S, H)), batch_spec((B, 1, H)),
                 batch_spec((B, J, n_op)), batch_spec((B, 1, n_domain)),
                 batch_spec((B, max_update, H)))
    in_specs = ([batch_spec((B, S, H)), batch_spec((B, 1, S)),
                 batch_spec((B, J, 1)), batch_spec((B, 1, J))]
                + [full_spec(w) for w in weights])

    seq_out, pooled3, state_scores, dom3, dec = pl.pallas_call(
        kernel,
        out_shape=out_shapes,
        grid=(B,),
        in_specs=in_specs,
        out_specs=out_specs,
        compiler_params=pltpu.CompilerParams(
            dimension_semantics=("parallel",)),
    )(x_emb, mask_bias, pos_in, op_in, *weights)

    pooled = pooled3[:, 0, :]                                    # (B, H)
    if exclude_domain:
        domain_scores = jnp.zeros((1,), jnp.float32)             # torch.zeros(1)
    else:
        domain_scores = dom3[:, 0, :]                            # (B, n_domain)
    # torch returns pooled_output.unsqueeze(0) -> (1, B, H)
    return domain_scores, state_scores, dec, seq_out, pooled[None]


if __name__ == "__main__":
    cfg = Config()
    n_op, n_domain, update_id = 4, 5, 1
    B, S, J = 2, 16, 6

    key = jax.random.PRNGKey(0)
    kp, k1, k2, k3 = jax.random.split(key, 4)
    params = init_params(kp, cfg, n_op, n_domain)

    input_ids = jax.random.randint(k1, (B, S), 0, cfg.vocab_size)
    token_type_ids = jax.random.randint(k2, (B, S), 0, cfg.type_vocab)
    attention_mask = jnp.ones((B, S), jnp.int32)
    state_positions = jnp.sort(jax.random.randint(k3, (B, J), 0, S), axis=1)

    @jax.jit
    def fwd(p, ids, tt, sp, am):
        return encoder_forward(p, cfg, n_op, n_domain, update_id,
                               ids, tt, sp, am, op_ids=None, max_update=None)

    outs = fwd(params, input_ids, token_type_ids, state_positions, attention_mask)
    outs = jax.block_until_ready(outs)

    domain_scores, state_scores, decoder_inputs, seq_out, pooled = outs
    assert domain_scores.shape == (B, n_domain)
    assert state_scores.shape == (B, J, n_op)
    assert decoder_inputs.shape == (B, J, cfg.hidden)
    assert seq_out.shape == (B, S, cfg.hidden)
    assert pooled.shape == (1, B, cfg.hidden)
    for o in outs:
        assert bool(jnp.all(jnp.isfinite(o)))
    print("KERNEL_OK")
</pallas_src>

<mosaic_0001>
module attributes {stable_mosaic.version = 11 : i64} {
  func.func @_encoder_kernel(%arg0: i32, %arg1: memref<1x16x32xf32, #tpu.memory_space<vmem>>, %arg2: memref<1x1x16xf32, #tpu.memory_space<vmem>>, %arg3: memref<1x6x1xi32, #tpu.memory_space<vmem>>, %arg4: memref<1x1x6xf32, #tpu.memory_space<vmem>>, %arg5: memref<1x32xf32, #tpu.memory_space<vmem>>, %arg6: memref<1x32xf32, #tpu.memory_space<vmem>>, %arg7: memref<2x32x96xbf16, #tpu.memory_space<vmem>>, %arg8: memref<2x1x96xf32, #tpu.memory_space<vmem>>, %arg9: memref<2x32x32xbf16, #tpu.memory_space<vmem>>, %arg10: memref<2x1x32xf32, #tpu.memory_space<vmem>>, %arg11: memref<2x1x32xf32, #tpu.memory_space<vmem>>, %arg12: memref<2x1x32xf32, #tpu.memory_space<vmem>>, %arg13: memref<2x32x64xbf16, #tpu.memory_space<vmem>>, %arg14: memref<2x1x64xf32, #tpu.memory_space<vmem>>, %arg15: memref<2x64x32xbf16, #tpu.memory_space<vmem>>, %arg16: memref<2x1x32xf32, #tpu.memory_space<vmem>>, %arg17: memref<2x1x32xf32, #tpu.memory_space<vmem>>, %arg18: memref<2x1x32xf32, #tpu.memory_space<vmem>>, %arg19: memref<32x32xf32, #tpu.memory_space<vmem>>, %arg20: memref<1x32xf32, #tpu.memory_space<vmem>>, %arg21: memref<32x4xf32, #tpu.memory_space<vmem>>, %arg22: memref<1x4xf32, #tpu.memory_space<vmem>>, %arg23: memref<32x5xf32, #tpu.memory_space<vmem>>, %arg24: memref<1x5xf32, #tpu.memory_space<vmem>>, %arg25: memref<1x16x32xf32, #tpu.memory_space<vmem>>, %arg26: memref<1x1x32xf32, #tpu.memory_space<vmem>>, %arg27: memref<1x6x4xf32, #tpu.memory_space<vmem>>, %arg28: memref<1x1x5xf32, #tpu.memory_space<vmem>>, %arg29: memref<1x6x32xf32, #tpu.memory_space<vmem>>) attributes {dimension_semantics = [#tpu.dimension_semantics<parallel>], iteration_bounds = array<i64: 2>, scalar_prefetch = 0 : i64, scratch_operands = 0 : i64, tpu.core_type = #tpu.core_type<tc>, window_params = [{transform_indices = @transform_0, window_bounds = array<i64: 1, 16, 32>}, {transform_indices = @transform_1, window_bounds = array<i64: 1, 1, 16>}, {transform_indices = @transform_2, window_bounds = array<i64: 1, 6, 1>}, {transform_indices = @transform_3, window_bounds = array<i64: 1, 1, 6>}, {pipeline_mode = #tpu.pipeline_mode<synchronous>, transform_indices = @transform_4, window_bounds = array<i64: 1, 32>}, {pipeline_mode = #tpu.pipeline_mode<synchronous>, transform_indices = @transform_5, window_bounds = array<i64: 1, 32>}, {pipeline_mode = #tpu.pipeline_mode<synchronous>, transform_indices = @transform_6, window_bounds = array<i64: 2, 32, 96>}, {pipeline_mode = #tpu.pipeline_mode<synchronous>, transform_indices = @transform_7, window_bounds = array<i64: 2, 1, 96>}, {pipeline_mode = #tpu.pipeline_mode<synchronous>, transform_indices = @transform_8, window_bounds = array<i64: 2, 32, 32>}, {pipeline_mode = #tpu.pipeline_mode<synchronous>, transform_indices = @transform_9, window_bounds = array<i64: 2, 1, 32>}, {pipeline_mode = #tpu.pipeline_mode<synchronous>, transform_indices = @transform_10, window_bounds = array<i64: 2, 1, 32>}, {pipeline_mode = #tpu.pipeline_mode<synchronous>, transform_indices = @transform_11, window_bounds = array<i64: 2, 1, 32>}, {pipeline_mode = #tpu.pipeline_mode<synchronous>, transform_indices = @transform_12, window_bounds = array<i64: 2, 32, 64>}, {pipeline_mode = #tpu.pipeline_mode<synchronous>, transform_indices = @transform_13, window_bounds = array<i64: 2, 1, 64>}, {pipeline_mode = #tpu.pipeline_mode<synchronous>, transform_indices = @transform_14, window_bounds = array<i64: 2, 64, 32>}, {pipeline_mode = #tpu.pipeline_mode<synchronous>, transform_indices = @transform_15, window_bounds = array<i64: 2, 1, 32>}, {pipeline_mode = #tpu.pipeline_mode<synchronous>, transform_indices = @transform_16, window_bounds = array<i64: 2, 1, 32>}, {pipeline_mode = #tpu.pipeline_mode<synchronous>, transform_indices = @transform_17, window_bounds = array<i64: 2, 1, 32>}, {pipeline_mode = #tpu.pipeline_mode<synchronous>, transform_indices = @transform_18, window_bounds = array<i64: 32, 32>}, {pipeline_mode = #tpu.pipeline_mode<synchronous>, transform_indices = @transform_19, window_bounds = array<i64: 1, 32>}, {pipeline_mode = #tpu.pipeline_mode<synchronous>, transform_indices = @transform_20, window_bounds = array<i64: 32, 4>}, {pipeline_mode = #tpu.pipeline_mode<synchronous>, transform_indices = @transform_21, window_bounds = array<i64: 1, 4>}, {pipeline_mode = #tpu.pipeline_mode<synchronous>, transform_indices = @transform_22, window_bounds = array<i64: 32, 5>}, {pipeline_mode = #tpu.pipeline_mode<synchronous>, transform_indices = @transform_23, window_bounds = array<i64: 1, 5>}, {transform_indices = @transform_24, window_bounds = array<i64: 1, 16, 32>}, {transform_indices = @transform_25, window_bounds = array<i64: 1, 1, 32>}, {transform_indices = @transform_26, window_bounds = array<i64: 1, 6, 4>}, {transform_indices = @transform_27, window_bounds = array<i64: 1, 1, 5>}, {transform_indices = @transform_28, window_bounds = array<i64: 1, 6, 32>}]} {
    %c0 = arith.constant 0 : index
    %c0_0 = arith.constant 0 : index
    %c0_1 = arith.constant 0 : index
    %0 = vector.load %arg2[%c0, %c0_0, %c0_1] : memref<1x1x16xf32, #tpu.memory_space<vmem>>, vector<1x1x16xf32>
    %1 = vector.shape_cast %0 : vector<1x1x16xf32> to vector<1x16xf32>
    %c0_2 = arith.constant 0 : index
    %c0_3 = arith.constant 0 : index
    %c0_4 = arith.constant 0 : index
    %2 = vector.load %arg1[%c0_2, %c0_3, %c0_4] : memref<1x16x32xf32, #tpu.memory_space<vmem>>, vector<1x16x32xf32>
    %3 = vector.shape_cast %2 : vector<1x16x32xf32> to vector<16x32xf32>
    %c0_5 = arith.constant 0 : index
    %c0_6 = arith.constant 0 : index
    %4 = vector.load %arg5[%c0_5, %c0_6] : memref<1x32xf32, #tpu.memory_space<vmem>>, vector<1x32xf32>
    %c0_7 = arith.constant 0 : index
    %c0_8 = arith.constant 0 : index
    %5 = vector.load %arg6[%c0_7, %c0_8] : memref<1x32xf32, #tpu.memory_space<vmem>>, vector<1x32xf32>
    %cst = arith.constant dense<0.000000e+00> : vector<16xf32>
    %6 = vector.multi_reduction <add>, %3, %cst [1] : vector<16x32xf32> to vector<16xf32>
    %7 = vector.shape_cast %6 : vector<16xf32> to vector<16x1xf32>
    %cst_9 = arith.constant 3.200000e+01 : f32
    %8 = vector.broadcast %cst_9 : f32 to vector<16x1xf32>
    %9 = arith.divf %7, %8 : vector<16x1xf32>
    %10 = vector.broadcast %9 : vector<16x1xf32> to vector<16x32xf32>
    %11 = arith.subf %3, %10 : vector<16x32xf32>
    %12 = arith.mulf %11, %11 : vector<16x32xf32>
    %cst_10 = arith.constant dense<0.000000e+00> : vector<16xf32>
    %13 = vector.multi_reduction <add>, %12, %cst_10 [1] : vector<16x32xf32> to vector<16xf32>
    %14 = vector.shape_cast %13 : vector<16xf32> to vector<16x1xf32>
    %cst_11 = arith.constant 3.200000e+01 : f32
    %15 = vector.broadcast %cst_11 : f32 to vector<16x1xf32>
    %16 = arith.divf %14, %15 : vector<16x1xf32>
    %17 = vector.broadcast %9 : vector<16x1xf32> to vector<16x32xf32>
    %18 = arith.subf %3, %17 : vector<16x32xf32>
    %cst_12 = arith.constant 9.99999996E-13 : f32
    %19 = vector.broadcast %cst_12 : f32 to vector<16x1xf32>
    %20 = arith.addf %16, %19 : vector<16x1xf32>
    %21 = math.rsqrt %20 : vector<16x1xf32>
    %22 = vector.broadcast %21 : vector<16x1xf32> to vector<16x32xf32>
    %23 = arith.mulf %18, %22 : vector<16x32xf32>
    %24 = vector.broadcast %4 : vector<1x32xf32> to vector<16x32xf32>
    %25 = arith.mulf %23, %24 : vector<16x32xf32>
    %26 = vector.broadcast %5 : vector<1x32xf32> to vector<16x32xf32>
    %27 = arith.addf %25, %26 : vector<16x32xf32>
    %c0_13 = arith.constant 0 : index
    %c0_14 = arith.constant 0 : index
    %c0_15 = arith.constant 0 : index
    %28 = vector.load %arg7[%c0_13, %c0_14, %c0_15] : memref<2x32x96xbf16, #tpu.memory_space<vmem>>, vector<1x32x96xbf16>
    %29 = vector.shape_cast %28 : vector<1x32x96xbf16> to vector<32x96xbf16>
    %c0_16 = arith.constant 0 : index
    %c0_17 = arith.constant 0 : index
    %c0_18 = arith.constant 0 : index
    %30 = vector.load %arg8[%c0_16, %c0_17, %c0_18] : memref<2x1x96xf32, #tpu.memory_space<vmem>>, vector<1x1x96xf32>
    %31 = vector.shape_cast %30 : vector<1x1x96xf32> to vector<1x96xf32>
    %32 = arith.truncf %27 : vector<16x32xf32> to vector<16x32xbf16>
    %cst_19 = arith.constant dense<0.000000e+00> : vector<16x96xf32>
    %33 = tpu.matmul %32, %29, %cst_19 {dimension_numbers = #tpu.dot_dimension_numbers<[1], [0], [0], [1], [0, 0, 1, 1], [], []>} : vector<16x32xbf16>, vector<32x96xbf16>, vector<16x96xf32> -> vector<16x96xf32>
    %34 = vector.broadcast %31 : vector<1x96xf32> to vector<16x96xf32>
    %35 = arith.addf %33, %34 : vector<16x96xf32>
    %36 = vector.extract_strided_slice %35 {offsets = [0, 0], sizes = [16, 8], strides = [1, 1]} : vector<16x96xf32> to vector<16x8xf32>
    %37 = arith.truncf %36 : vector<16x8xf32> to vector<16x8xbf16>
    %38 = vector.extract_strided_slice %35 {offsets = [0, 32], sizes = [16, 8], strides = [1, 1]} : vector<16x96xf32> to vector<16x8xf32>
    %39 = arith.truncf %38 : vector<16x8xf32> to vector<16x8xbf16>
    %40 = vector.extract_strided_slice %35 {offsets = [0, 64], sizes = [16, 8], strides = [1, 1]} : vector<16x96xf32> to vector<16x8xf32>
    %41 = arith.truncf %40 : vector<16x8xf32> to vector<16x8xbf16>
    %cst_20 = arith.constant dense<0.000000e+00> : vector<16x16xf32>
    %42 = tpu.matmul %37, %39, %cst_20 {dimension_numbers = #tpu.dot_dimension_numbers<[1], [1], [0], [0], [0, 0, 1, 0], [], []>} : vector<16x8xbf16>, vector<16x8xbf16>, vector<16x16xf32> -> vector<16x16xf32>
    %cst_21 = arith.constant 0.353553385 : f32
    %43 = vector.broadcast %cst_21 : f32 to vector<16x16xf32>
    %44 = arith.mulf %42, %43 : vector<16x16xf32>
    %45 = vector.broadcast %1 : vector<1x16xf32> to vector<16x16xf32>
    %46 = arith.addf %44, %45 : vector<16x16xf32>
    %cst_22 = arith.constant dense<0xFF800000> : vector<16xf32>
    %47 = vector.multi_reduction <maximumf>, %46, %cst_22 [1] : vector<16x16xf32> to vector<16xf32>
    %48 = vector.shape_cast %47 : vector<16xf32> to vector<16x1xf32>
    %49 = vector.broadcast %48 : vector<16x1xf32> to vector<16x16xf32>
    %50 = arith.subf %46, %49 : vector<16x16xf32>
    %51 = math.exp %50 : vector<16x16xf32>
    %cst_23 = arith.constant dense<0.000000e+00> : vector<16xf32>
    %52 = vector.multi_reduction <add>, %51, %cst_23 [1] : vector<16x16xf32> to vector<16xf32>
    %53 = vector.shape_cast %52 : vector<16xf32> to vector<16x1xf32>
    %54 = tpu.reciprocal %53 {approx = true} : vector<16x1xf32> -> vector<16x1xf32>
    %55 = vector.broadcast %54 : vector<16x1xf32> to vector<16x16xf32>
    %56 = arith.mulf %51, %55 : vector<16x16xf32>
    %57 = arith.truncf %56 : vector<16x16xf32> to vector<16x16xbf16>
    %cst_24 = arith.constant dense<0.000000e+00> : vector<16x8xf32>
    %58 = tpu.matmul %57, %41, %cst_24 {dimension_numbers = #tpu.dot_dimension_numbers<[1], [0], [0], [1], [0, 0, 1, 1], [], []>} : vector<16x16xbf16>, vector<16x8xbf16>, vector<16x8xf32> -> vector<16x8xf32>
    %59 = vector.extract_strided_slice %35 {offsets = [0, 8], sizes = [16, 8], strides = [1, 1]} : vector<16x96xf32> to vector<16x8xf32>
    %60 = arith.truncf %59 : vector<16x8xf32> to vector<16x8xbf16>
    %61 = vector.extract_strided_slice %35 {offsets = [0, 40], sizes = [16, 8], strides = [1, 1]} : vector<16x96xf32> to vector<16x8xf32>
    %62 = arith.truncf %61 : vector<16x8xf32> to vector<16x8xbf16>
    %63 = vector.extract_strided_slice %35 {offsets = [0, 72], sizes = [16, 8], strides = [1, 1]} : vector<16x96xf32> to vector<16x8xf32>
    %64 = arith.truncf %63 : vector<16x8xf32> to vector<16x8xbf16>
    %cst_25 = arith.constant dense<0.000000e+00> : vector<16x16xf32>
    %65 = tpu.matmul %60, %62, %cst_25 {dimension_numbers = #tpu.dot_dimension_numbers<[1], [1], [0], [0], [0, 0, 1, 0], [], []>} : vector<16x8xbf16>, vector<16x8xbf16>, vector<16x16xf32> -> vector<16x16xf32>
    %cst_26 = arith.constant 0.353553385 : f32
    %66 = vector.broadcast %cst_26 : f32 to vector<16x16xf32>
    %67 = arith.mulf %65, %66 : vector<16x16xf32>
    %68 = vector.broadcast %1 : vector<1x16xf32> to vector<16x16xf32>
    %69 = arith.addf %67, %68 : vector<16x16xf32>
    %cst_27 = arith.constant dense<0xFF800000> : vector<16xf32>
    %70 = vector.multi_reduction <maximumf>, %69, %cst_27 [1] : vector<16x16xf32> to vector<16xf32>
    %71 = vector.shape_cast %70 : vector<16xf32> to vector<16x1xf32>
    %72 = vector.broadcast %71 : vector<16x1xf32> to vector<16x16xf32>
    %73 = arith.subf %69, %72 : vector<16x16xf32>
    %74 = math.exp %73 : vector<16x16xf32>
    %cst_28 = arith.constant dense<0.000000e+00> : vector<16xf32>
    %75 = vector.multi_reduction <add>, %74, %cst_28 [1] : vector<16x16xf32> to vector<16xf32>
    %76 = vector.shape_cast %75 : vector<16xf32> to vector<16x1xf32>
    %77 = tpu.reciprocal %76 {approx = true} : vector<16x1xf32> -> vector<16x1xf32>
    %78 = vector.broadcast %77 : vector<16x1xf32> to vector<16x16xf32>
    %79 = arith.mulf %74, %78 : vector<16x16xf32>
    %80 = arith.truncf %79 : vector<16x16xf32> to vector<16x16xbf16>
    %cst_29 = arith.constant dense<0.000000e+00> : vector<16x8xf32>
    %81 = tpu.matmul %80, %64, %cst_29 {dimension_numbers = #tpu.dot_dimension_numbers<[1], [0], [0], [1], [0, 0, 1, 1], [], []>} : vector<16x16xbf16>, vector<16x8xbf16>, vector<16x8xf32> -> vector<16x8xf32>
    %82 = vector.extract_strided_slice %35 {offsets = [0, 16], sizes = [16, 8], strides = [1, 1]} : vector<16x96xf32> to vector<16x8xf32>
    %83 = arith.truncf %82 : vector<16x8xf32> to vector<16x8xbf16>
    %84 = vector.extract_strided_slice %35 {offsets = [0, 48], sizes = [16, 8], strides = [1, 1]} : vector<16x96xf32> to vector<16x8xf32>
    %85 = arith.truncf %84 : vector<16x8xf32> to vector<16x8xbf16>
    %86 = vector.extract_strided_slice %35 {offsets = [0, 80], sizes = [16, 8], strides = [1, 1]} : vector<16x96xf32> to vector<16x8xf32>
    %87 = arith.truncf %86 : vector<16x8xf32> to vector<16x8xbf16>
    %cst_30 = arith.constant dense<0.000000e+00> : vector<16x16xf32>
    %88 = tpu.matmul %83, %85, %cst_30 {dimension_numbers = #tpu.dot_dimension_numbers<[1], [1], [0], [0], [0, 0, 1, 0], [], []>} : vector<16x8xbf16>, vector<16x8xbf16>, vector<16x16xf32> -> vector<16x16xf32>
    %cst_31 = arith.constant 0.353553385 : f32
    %89 = vector.broadcast %cst_31 : f32 to vector<16x16xf32>
    %90 = arith.mulf %88, %89 : vector<16x16xf32>
    %91 = vector.broadcast %1 : vector<1x16xf32> to vector<16x16xf32>
    %92 = arith.addf %90, %91 : vector<16x16xf32>
    %cst_32 = arith.constant dense<0xFF800000> : vector<16xf32>
    %93 = vector.multi_reduction <maximumf>, %92, %cst_32 [1] : vector<16x16xf32> to vector<16xf32>
    %94 = vector.shape_cast %93 : vector<16xf32> to vector<16x1xf32>
    %95 = vector.broadcast %94 : vector<16x1xf32> to vector<16x16xf32>
    %96 = arith.subf %92, %95 : vector<16x16xf32>
    %97 = math.exp %96 : vector<16x16xf32>
    %cst_33 = arith.constant dense<0.000000e+00> : vector<16xf32>
    %98 = vector.multi_reduction <add>, %97, %cst_33 [1] : vector<16x16xf32> to vector<16xf32>
    %99 = vector.shape_cast %98 : vector<16xf32> to vector<16x1xf32>
    %100 = tpu.reciprocal %99 {approx = true} : vector<16x1xf32> -> vector<16x1xf32>
    %101 = vector.broadcast %100 : vector<16x1xf32> to vector<16x16xf32>
    %102 = arith.mulf %97, %101 : vector<16x16xf32>
    %103 = arith.truncf %102 : vector<16x16xf32> to vector<16x16xbf16>
    %cst_34 = arith.constant dense<0.000000e+00> : vector<16x8xf32>
    %104 = tpu.matmul %103, %87, %cst_34 {dimension_numbers = #tpu.dot_dimension_numbers<[1], [0], [0], [1], [0, 0, 1, 1], [], []>} : vector<16x16xbf16>, vector<16x8xbf16>, vector<16x8xf32> -> vector<16x8xf32>
    %105 = vector.extract_strided_slice %35 {offsets = [0, 24], sizes = [16, 8], strides = [1, 1]} : vector<16x96xf32> to vector<16x8xf32>
    %106 = arith.truncf %105 : vector<16x8xf32> to vector<16x8xbf16>
    %107 = vector.extract_strided_slice %35 {offsets = [0, 56], sizes = [16, 8], strides = [1, 1]} : vector<16x96xf32> to vector<16x8xf32>
    %108 = arith.truncf %107 : vector<16x8xf32> to vector<16x8xbf16>
    %109 = vector.extract_strided_slice %35 {offsets = [0, 88], sizes = [16, 8], strides = [1, 1]} : vector<16x96xf32> to vector<16x8xf32>
    %110 = arith.truncf %109 : vector<16x8xf32> to vector<16x8xbf16>
    %cst_35 = arith.constant dense<0.000000e+00> : vector<16x16xf32>
    %111 = tpu.matmul %106, %108, %cst_35 {dimension_numbers = #tpu.dot_dimension_numbers<[1], [1], [0], [0], [0, 0, 1, 0], [], []>} : vector<16x8xbf16>, vector<16x8xbf16>, vector<16x16xf32> -> vector<16x16xf32>
    %cst_36 = arith.constant 0.353553385 : f32
    %112 = vector.broadcast %cst_36 : f32 to vector<16x16xf32>
    %113 = arith.mulf %111, %112 : vector<16x16xf32>
    %114 = vector.broadcast %1 : vector<1x16xf32> to vector<16x16xf32>
    %115 = arith.addf %113, %114 : vector<16x16xf32>
    %cst_37 = arith.constant dense<0xFF800000> : vector<16xf32>
    %116 = vector.multi_reduction <maximumf>, %115, %cst_37 [1] : vector<16x16xf32> to vector<16xf32>
    %117 = vector.shape_cast %116 : vector<16xf32> to vector<16x1xf32>
    %118 = vector.broadcast %117 : vector<16x1xf32> to vector<16x16xf32>
    %119 = arith.subf %115, %118 : vector<16x16xf32>
    %120 = math.exp %119 : vector<16x16xf32>
    %cst_38 = arith.constant dense<0.000000e+00> : vector<16xf32>
    %121 = vector.multi_reduction <add>, %120, %cst_38 [1] : vector<16x16xf32> to vector<16xf32>
    %122 = vector.shape_cast %121 : vector<16xf32> to vector<16x1xf32>
    %123 = tpu.reciprocal %122 {approx = true} : vector<16x1xf32> -> vector<16x1xf32>
    %124 = vector.broadcast %123 : vector<16x1xf32> to vector<16x16xf32>
    %125 = arith.mulf %120, %124 : vector<16x16xf32>
    %126 = arith.truncf %125 : vector<16x16xf32> to vector<16x16xbf16>
    %cst_39 = arith.constant dense<0.000000e+00> : vector<16x8xf32>
    %127 = tpu.matmul %126, %110, %cst_39 {dimension_numbers = #tpu.dot_dimension_numbers<[1], [0], [0], [1], [0, 0, 1, 1], [], []>} : vector<16x16xbf16>, vector<16x8xbf16>, vector<16x8xf32> -> vector<16x8xf32>
    %128 = tpu.concatenate %58, %81, %104, %127 in 1 : vector<16x8xf32>, vector<16x8xf32>, vector<16x8xf32>, vector<16x8xf32> -> vector<16x32xf32>
    %c0_40 = arith.constant 0 : index
    %c0_41 = arith.constant 0 : index
    %c0_42 = arith.constant 0 : index
    %129 = vector.load %arg9[%c0_40, %c0_41, %c0_42] : memref<2x32x32xbf16, #tpu.memory_space<vmem>>, vector<1x32x32xbf16>
    %130 = vector.shape_cast %129 : vector<1x32x32xbf16> to vector<32x32xbf16>
    %c0_43 = arith.constant 0 : index
    %c0_44 = arith.constant 0 : index
    %c0_45 = arith.constant 0 : index
    %131 = vector.load %arg10[%c0_43, %c0_44, %c0_45] : memref<2x1x32xf32, #tpu.memory_space<vmem>>, vector<1x1x32xf32>
    %132 = vector.shape_cast %131 : vector<1x1x32xf32> to vector<1x32xf32>
    %133 = arith.truncf %128 : vector<16x32xf32> to vector<16x32xbf16>
    %cst_46 = arith.constant dense<0.000000e+00> : vector<16x32xf32>
    %134 = tpu.matmul %133, %130, %cst_46 {dimension_numbers = #tpu.dot_dimension_numbers<[1], [0], [0], [1], [0, 0, 1, 1], [], []>} : vector<16x32xbf16>, vector<32x32xbf16>, vector<16x32xf32> -> vector<16x32xf32>
    %135 = vector.broadcast %132 : vector<1x32xf32> to vector<16x32xf32>
    %136 = arith.addf %134, %135 : vector<16x32xf32>
    %137 = arith.addf %27, %136 : vector<16x32xf32>
    %c0_47 = arith.constant 0 : index
    %c0_48 = arith.constant 0 : index
    %c0_49 = arith.constant 0 : index
    %138 = vector.load %arg11[%c0_47, %c0_48, %c0_49] : memref<2x1x32xf32, #tpu.memory_space<vmem>>, vector<1x1x32xf32>
    %139 = vector.shape_cast %138 : vector<1x1x32xf32> to vector<1x32xf32>
    %c0_50 = arith.constant 0 : index
    %c0_51 = arith.constant 0 : index
    %c0_52 = arith.constant 0 : index
    %140 = vector.load %arg12[%c0_50, %c0_51, %c0_52] : memref<2x1x32xf32, #tpu.memory_space<vmem>>, vector<1x1x32xf32>
    %141 = vector.shape_cast %140 : vector<1x1x32xf32> to vector<1x32xf32>
    %cst_53 = arith.constant dense<0.000000e+00> : vector<16xf32>
    %142 = vector.multi_reduction <add>, %137, %cst_53 [1] : vector<16x32xf32> to vector<16xf32>
    %143 = vector.shape_cast %142 : vector<16xf32> to vector<16x1xf32>
    %cst_54 = arith.constant 3.200000e+01 : f32
    %144 = vector.broadcast %cst_54 : f32 to vector<16x1xf32>
    %145 = arith.divf %143, %144 : vector<16x1xf32>
    %146 = vector.broadcast %145 : vector<16x1xf32> to vector<16x32xf32>
    %147 = arith.subf %137, %146 : vector<16x32xf32>
    %148 = arith.mulf %147, %147 : vector<16x32xf32>
    %cst_55 = arith.constant dense<0.000000e+00> : vector<16xf32>
    %149 = vector.multi_reduction <add>, %148, %cst_55 [1] : vector<16x32xf32> to vector<16xf32>
    %150 = vector.shape_cast %149 : vector<16xf32> to vector<16x1xf32>
    %cst_56 = arith.constant 3.200000e+01 : f32
    %151 = vector.broadcast %cst_56 : f32 to vector<16x1xf32>
    %152 = arith.divf %150, %151 : vector<16x1xf32>
    %153 = vector.broadcast %145 : vector<16x1xf32> to vector<16x32xf32>
    %154 = arith.subf %137, %153 : vector<16x32xf32>
    %cst_57 = arith.constant 9.99999996E-13 : f32
    %155 = vector.broadcast %cst_57 : f32 to vector<16x1xf32>
    %156 = arith.addf %152, %155 : vector<16x1xf32>
    %157 = math.rsqrt %156 : vector<16x1xf32>
    %158 = vector.broadcast %157 : vector<16x1xf32> to vector<16x32xf32>
    %159 = arith.mulf %154, %158 : vector<16x32xf32>
    %160 = vector.broadcast %139 : vector<1x32xf32> to vector<16x32xf32>
    %161 = arith.mulf %159, %160 : vector<16x32xf32>
    %162 = vector.broadcast %141 : vector<1x32xf32> to vector<16x32xf32>
    %163 = arith.addf %161, %162 : vector<16x32xf32>
    %c0_58 = arith.constant 0 : index
    %c0_59 = arith.constant 0 : index
    %c0_60 = arith.constant 0 : index
    %164 = vector.load %arg13[%c0_58, %c0_59, %c0_60] : memref<2x32x64xbf16, #tpu.memory_space<vmem>>, vector<1x32x64xbf16>
    %165 = vector.shape_cast %164 : vector<1x32x64xbf16> to vector<32x64xbf16>
    %c0_61 = arith.constant 0 : index
    %c0_62 = arith.constant 0 : index
    %c0_63 = arith.constant 0 : index
    %166 = vector.load %arg14[%c0_61, %c0_62, %c0_63] : memref<2x1x64xf32, #tpu.memory_space<vmem>>, vector<1x1x64xf32>
    %167 = vector.shape_cast %166 : vector<1x1x64xf32> to vector<1x64xf32>
    %168 = arith.truncf %163 : vector<16x32xf32> to vector<16x32xbf16>
    %cst_64 = arith.constant dense<0.000000e+00> : vector<16x64xf32>
    %169 = tpu.matmul %168, %165, %cst_64 {dimension_numbers = #tpu.dot_dimension_numbers<[1], [0], [0], [1], [0, 0, 1, 1], [], []>} : vector<16x32xbf16>, vector<32x64xbf16>, vector<16x64xf32> -> vector<16x64xf32>
    %170 = vector.broadcast %167 : vector<1x64xf32> to vector<16x64xf32>
    %171 = arith.addf %169, %170 : vector<16x64xf32>
    %172 = arith.mulf %171, %171 : vector<16x64xf32>
    %173 = arith.mulf %171, %172 : vector<16x64xf32>
    %cst_65 = arith.constant 4.471500e-02 : f32
    %174 = vector.broadcast %cst_65 : f32 to vector<16x64xf32>
    %175 = arith.mulf %174, %173 : vector<16x64xf32>
    %176 = arith.addf %171, %175 : vector<16x64xf32>
    %cst_66 = arith.constant 0.797884583 : f32
    %177 = vector.broadcast %cst_66 : f32 to vector<16x64xf32>
    %178 = arith.mulf %177, %176 : vector<16x64xf32>
    %179 = math.tanh %178 : vector<16x64xf32>
    %cst_67 = arith.constant 1.000000e+00 : f32
    %180 = vector.broadcast %cst_67 : f32 to vector<16x64xf32>
    %181 = arith.addf %180, %179 : vector<16x64xf32>
    %cst_68 = arith.constant 5.000000e-01 : f32
    %182 = vector.broadcast %cst_68 : f32 to vector<16x64xf32>
    %183 = arith.mulf %182, %181 : vector<16x64xf32>
    %184 = arith.mulf %171, %183 : vector<16x64xf32>
    %c0_69 = arith.constant 0 : index
    %c0_70 = arith.constant 0 : index
    %c0_71 = arith.constant 0 : index
    %185 = vector.load %arg15[%c0_69, %c0_70, %c0_71] : memref<2x64x32xbf16, #tpu.memory_space<vmem>>, vector<1x64x32xbf16>
    %186 = vector.shape_cast %185 : vector<1x64x32xbf16> to vector<64x32xbf16>
    %c0_72 = arith.constant 0 : index
    %c0_73 = arith.constant 0 : index
    %c0_74 = arith.constant 0 : index
    %187 = vector.load %arg16[%c0_72, %c0_73, %c0_74] : memref<2x1x32xf32, #tpu.memory_space<vmem>>, vector<1x1x32xf32>
    %188 = vector.shape_cast %187 : vector<1x1x32xf32> to vector<1x32xf32>
    %189 = arith.truncf %184 : vector<16x64xf32> to vector<16x64xbf16>
    %cst_75 = arith.constant dense<0.000000e+00> : vector<16x32xf32>
    %190 = tpu.matmul %189, %186, %cst_75 {dimension_numbers = #tpu.dot_dimension_numbers<[1], [0], [0], [1], [0, 0, 1, 1], [], []>} : vector<16x64xbf16>, vector<64x32xbf16>, vector<16x32xf32> -> vector<16x32xf32>
    %191 = vector.broadcast %188 : vector<1x32xf32> to vector<16x32xf32>
    %192 = arith.addf %190, %191 : vector<16x32xf32>
    %193 = arith.addf %163, %192 : vector<16x32xf32>
    %c0_76 = arith.constant 0 : index
    %c0_77 = arith.constant 0 : index
    %c0_78 = arith.constant 0 : index
    %194 = vector.load %arg17[%c0_76, %c0_77, %c0_78] : memref<2x1x32xf32, #tpu.memory_space<vmem>>, vector<1x1x32xf32>
    %195 = vector.shape_cast %194 : vector<1x1x32xf32> to vector<1x32xf32>
    %c0_79 = arith.constant 0 : index
    %c0_80 = arith.constant 0 : index
    %c0_81 = arith.constant 0 : index
    %196 = vector.load %arg18[%c0_79, %c0_80, %c0_81] : memref<2x1x32xf32, #tpu.memory_space<vmem>>, vector<1x1x32xf32>
    %197 = vector.shape_cast %196 : vector<1x1x32xf32> to vector<1x32xf32>
    %cst_82 = arith.constant dense<0.000000e+00> : vector<16xf32>
    %198 = vector.multi_reduction <add>, %193, %cst_82 [1] : vector<16x32xf32> to vector<16xf32>
    %199 = vector.shape_cast %198 : vector<16xf32> to vector<16x1xf32>
    %cst_83 = arith.constant 3.200000e+01 : f32
    %200 = vector.broadcast %cst_83 : f32 to vector<16x1xf32>
    %201 = arith.divf %199, %200 : vector<16x1xf32>
    %202 = vector.broadcast %201 : vector<16x1xf32> to vector<16x32xf32>
    %203 = arith.subf %193, %202 : vector<16x32xf32>
    %204 = arith.mulf %203, %203 : vector<16x32xf32>
    %cst_84 = arith.constant dense<0.000000e+00> : vector<16xf32>
    %205 = vector.multi_reduction <add>, %204, %cst_84 [1] : vector<16x32xf32> to vector<16xf32>
    %206 = vector.shape_cast %205 : vector<16xf32> to vector<16x1xf32>
    %cst_85 = arith.constant 3.200000e+01 : f32
    %207 = vector.broadcast %cst_85 : f32 to vector<16x1xf32>
    %208 = arith.divf %206, %207 : vector<16x1xf32>
    %209 = vector.broadcast %201 : vector<16x1xf32> to vector<16x32xf32>
    %210 = arith.subf %193, %209 : vector<16x32xf32>
    %cst_86 = arith.constant 9.99999996E-13 : f32
    %211 = vector.broadcast %cst_86 : f32 to vector<16x1xf32>
    %212 = arith.addf %208, %211 : vector<16x1xf32>
    %213 = math.rsqrt %212 : vector<16x1xf32>
    %214 = vector.broadcast %213 : vector<16x1xf32> to vector<16x32xf32>
    %215 = arith.mulf %210, %214 : vector<16x32xf32>
    %216 = vector.broadcast %195 : vector<1x32xf32> to vector<16x32xf32>
    %217 = arith.mulf %215, %216 : vector<16x32xf32>
    %218 = vector.broadcast %197 : vector<1x32xf32> to vector<16x32xf32>
    %219 = arith.addf %217, %218 : vector<16x32xf32>
    %c1 = arith.constant 1 : index
    %c0_87 = arith.constant 0 : index
    %c0_88 = arith.constant 0 : index
    %220 = vector.load %arg7[%c1, %c0_87, %c0_88] : memref<2x32x96xbf16, #tpu.memory_space<vmem>>, vector<1x32x96xbf16>
    %221 = vector.shape_cast %220 : vector<1x32x96xbf16> to vector<32x96xbf16>
    %c1_89 = arith.constant 1 : index
    %c0_90 = arith.constant 0 : index
    %c0_91 = arith.constant 0 : index
    %222 = vector.load %arg8[%c1_89, %c0_90, %c0_91] : memref<2x1x96xf32, #tpu.memory_space<vmem>>, vector<1x1x96xf32>
    %223 = vector.shape_cast %222 : vector<1x1x96xf32> to vector<1x96xf32>
    %224 = arith.truncf %219 : vector<16x32xf32> to vector<16x32xbf16>
    %cst_92 = arith.constant dense<0.000000e+00> : vector<16x96xf32>
    %225 = tpu.matmul %224, %221, %cst_92 {dimension_numbers = #tpu.dot_dimension_numbers<[1], [0], [0], [1], [0, 0, 1, 1], [], []>} : vector<16x32xbf16>, vector<32x96xbf16>, vector<16x96xf32> -> vector<16x96xf32>
    %226 = vector.broadcast %223 : vector<1x96xf32> to vector<16x96xf32>
    %227 = arith.addf %225, %226 : vector<16x96xf32>
    %228 = vector.extract_strided_slice %227 {offsets = [0, 0], sizes = [16, 8], strides = [1, 1]} : vector<16x96xf32> to vector<16x8xf32>
    %229 = arith.truncf %228 : vector<16x8xf32> to vector<16x8xbf16>
    %230 = vector.extract_strided_slice %227 {offsets = [0, 32], sizes = [16, 8], strides = [1, 1]} : vector<16x96xf32> to vector<16x8xf32>
    %231 = arith.truncf %230 : vector<16x8xf32> to vector<16x8xbf16>
    %232 = vector.extract_strided_slice %227 {offsets = [0, 64], sizes = [16, 8], strides = [1, 1]} : vector<16x96xf32> to vector<16x8xf32>
    %233 = arith.truncf %232 : vector<16x8xf32> to vector<16x8xbf16>
    %cst_93 = arith.constant dense<0.000000e+00> : vector<16x16xf32>
    %234 = tpu.matmul %229, %231, %cst_93 {dimension_numbers = #tpu.dot_dimension_numbers<[1], [1], [0], [0], [0, 0, 1, 0], [], []>} : vector<16x8xbf16>, vector<16x8xbf16>, vector<16x16xf32> -> vector<16x16xf32>
    %cst_94 = arith.constant 0.353553385 : f32
    %235 = vector.broadcast %cst_94 : f32 to vector<16x16xf32>
    %236 = arith.mulf %234, %235 : vector<16x16xf32>
    %237 = vector.broadcast %1 : vector<1x16xf32> to vector<16x16xf32>
    %238 = arith.addf %236, %237 : vector<16x16xf32>
    %cst_95 = arith.constant dense<0xFF800000> : vector<16xf32>
    %239 = vector.multi_reduction <maximumf>, %238, %cst_95 [1] : vector<16x16xf32> to vector<16xf32>
    %240 = vector.shape_cast %239 : vector<16xf32> to vector<16x1xf32>
    %241 = vector.broadcast %240 : vector<16x1xf32> to vector<16x16xf32>
    %242 = arith.subf %238, %241 : vector<16x16xf32>
    %243 = math.exp %242 : vector<16x16xf32>
    %cst_96 = arith.constant dense<0.000000e+00> : vector<16xf32>
    %244 = vector.multi_reduction <add>, %243, %cst_96 [1] : vector<16x16xf32> to vector<16xf32>
    %245 = vector.shape_cast %244 : vector<16xf32> to vector<16x1xf32>
    %246 = tpu.reciprocal %245 {approx = true} : vector<16x1xf32> -> vector<16x1xf32>
    %247 = vector.broadcast %246 : vector<16x1xf32> to vector<16x16xf32>
    %248 = arith.mulf %243, %247 : vector<16x16xf32>
    %249 = arith.truncf %248 : vector<16x16xf32> to vector<16x16xbf16>
    %cst_97 = arith.constant dense<0.000000e+00> : vector<16x8xf32>
    %250 = tpu.matmul %249, %233, %cst_97 {dimension_numbers = #tpu.dot_dimension_numbers<[1], [0], [0], [1], [0, 0, 1, 1], [], []>} : vector<16x16xbf16>, vector<16x8xbf16>, vector<16x8xf32> -> vector<16x8xf32>
    %251 = vector.extract_strided_slice %227 {offsets = [0, 8], sizes = [16, 8], strides = [1, 1]} : vector<16x96xf32> to vector<16x8xf32>
    %252 = arith.truncf %251 : vector<16x8xf32> to vector<16x8xbf16>
    %253 = vector.extract_strided_slice %227 {offsets = [0, 40], sizes = [16, 8], strides = [1, 1]} : vector<16x96xf32> to vector<16x8xf32>
    %254 = arith.truncf %253 : vector<16x8xf32> to vector<16x8xbf16>
    %255 = vector.extract_strided_slice %227 {offsets = [0, 72], sizes = [16, 8], strides = [1, 1]} : vector<16x96xf32> to vector<16x8xf32>
    %256 = arith.truncf %255 : vector<16x8xf32> to vector<16x8xbf16>
    %cst_98 = arith.constant dense<0.000000e+00> : vector<16x16xf32>
    %257 = tpu.matmul %252, %254, %cst_98 {dimension_numbers = #tpu.dot_dimension_numbers<[1], [1], [0], [0], [0, 0, 1, 0], [], []>} : vector<16x8xbf16>, vector<16x8xbf16>, vector<16x16xf32> -> vector<16x16xf32>
    %cst_99 = arith.constant 0.353553385 : f32
    %258 = vector.broadcast %cst_99 : f32 to vector<16x16xf32>
    %259 = arith.mulf %257, %258 : vector<16x16xf32>
    %260 = vector.broadcast %1 : vector<1x16xf32> to vector<16x16xf32>
    %261 = arith.addf %259, %260 : vector<16x16xf32>
    %cst_100 = arith.constant dense<0xFF800000> : vector<16xf32>
    %262 = vector.multi_reduction <maximumf>, %261, %cst_100 [1] : vector<16x16xf32> to vector<16xf32>
    %263 = vector.shape_cast %262 : vector<16xf32> to vector<16x1xf32>
    %264 = vector.broadcast %263 : vector<16x1xf32> to vector<16x16xf32>
    %265 = arith.subf %261, %264 : vector<16x16xf32>
    %266 = math.exp %265 : vector<16x16xf32>
    %cst_101 = arith.constant dense<0.000000e+00> : vector<16xf32>
    %267 = vector.multi_reduction <add>, %266, %cst_101 [1] : vector<16x16xf32> to vector<16xf32>
    %268 = vector.shape_cast %267 : vector<16xf32> to vector<16x1xf32>
    %269 = tpu.reciprocal %268 {approx = true} : vector<16x1xf32> -> vector<16x1xf32>
    %270 = vector.broadcast %269 : vector<16x1xf32> to vector<16x16xf32>
    %271 = arith.mulf %266, %270 : vector<16x16xf32>
    %272 = arith.truncf %271 : vector<16x16xf32> to vector<16x16xbf16>
    %cst_102 = arith.constant dense<0.000000e+00> : vector<16x8xf32>
    %273 = tpu.matmul %272, %256, %cst_102 {dimension_numbers = #tpu.dot_dimension_numbers<[1], [0], [0], [1], [0, 0, 1, 1], [], []>} : vector<16x16xbf16>, vector<16x8xbf16>, vector<16x8xf32> -> vector<16x8xf32>
    %274 = vector.extract_strided_slice %227 {offsets = [0, 16], sizes = [16, 8], strides = [1, 1]} : vector<16x96xf32> to vector<16x8xf32>
    %275 = arith.truncf %274 : vector<16x8xf32> to vector<16x8xbf16>
    %276 = vector.extract_strided_slice %227 {offsets = [0, 48], sizes = [16, 8], strides = [1, 1]} : vector<16x96xf32> to vector<16x8xf32>
    %277 = arith.truncf %276 : vector<16x8xf32> to vector<16x8xbf16>
    %278 = vector.extract_strided_slice %227 {offsets = [0, 80], sizes = [16, 8], strides = [1, 1]} : vector<16x96xf32> to vector<16x8xf32>
    %279 = arith.truncf %278 : vector<16x8xf32> to vector<16x8xbf16>
    %cst_103 = arith.constant dense<0.000000e+00> : vector<16x16xf32>
    %280 = tpu.matmul %275, %277, %cst_103 {dimension_numbers = #tpu.dot_dimension_numbers<[1], [1], [0], [0], [0, 0, 1, 0], [], []>} : vector<16x8xbf16>, vector<16x8xbf16>, vector<16x16xf32> -> vector<16x16xf32>
    %cst_104 = arith.constant 0.353553385 : f32
    %281 = vector.broadcast %cst_104 : f32 to vector<16x16xf32>
    %282 = arith.mulf %280, %281 : vector<16x16xf32>
    %283 = vector.broadcast %1 : vector<1x16xf32> to vector<16x16xf32>
    %284 = arith.addf %282, %283 : vector<16x16xf32>
    %cst_105 = arith.constant dense<0xFF800000> : vector<16xf32>
    %285 = vector.multi_reduction <maximumf>, %284, %cst_105 [1] : vector<16x16xf32> to vector<16xf32>
    %286 = vector.shape_cast %285 : vector<16xf32> to vector<16x1xf32>
    %287 = vector.broadcast %286 : vector<16x1xf32> to vector<16x16xf32>
    %288 = arith.subf %284, %287 : vector<16x16xf32>
    %289 = math.exp %288 : vector<16x16xf32>
    %cst_106 = arith.constant dense<0.000000e+00> : vector<16xf32>
    %290 = vector.multi_reduction <add>, %289, %cst_106 [1] : vector<16x16xf32> to vector<16xf32>
    %291 = vector.shape_cast %290 : vector<16xf32> to vector<16x1xf32>
    %292 = tpu.reciprocal %291 {approx = true} : vector<16x1xf32> -> vector<16x1xf32>
    %293 = vector.broadcast %292 : vector<16x1xf32> to vector<16x16xf32>
    %294 = arith.mulf %289, %293 : vector<16x16xf32>
    %295 = arith.truncf %294 : vector<16x16xf32> to vector<16x16xbf16>
    %cst_107 = arith.constant dense<0.000000e+00> : vector<16x8xf32>
    %296 = tpu.matmul %295, %279, %cst_107 {dimension_numbers = #tpu.dot_dimension_numbers<[1], [0], [0], [1], [0, 0, 1, 1], [], []>} : vector<16x16xbf16>, vector<16x8xbf16>, vector<16x8xf32> -> vector<16x8xf32>
    %297 = vector.extract_strided_slice %227 {offsets = [0, 24], sizes = [16, 8], strides = [1, 1]} : vector<16x96xf32> to vector<16x8xf32>
    %298 = arith.truncf %297 : vector<16x8xf32> to vector<16x8xbf16>
    %299 = vector.extract_strided_slice %227 {offsets = [0, 56], sizes = [16, 8], strides = [1, 1]} : vector<16x96xf32> to vector<16x8xf32>
    %300 = arith.truncf %299 : vector<16x8xf32> to vector<16x8xbf16>
    %301 = vector.extract_strided_slice %227 {offsets = [0, 88], sizes = [16, 8], strides = [1, 1]} : vector<16x96xf32> to vector<16x8xf32>
    %302 = arith.truncf %301 : vector<16x8xf32> to vector<16x8xbf16>
    %cst_108 = arith.constant dense<0.000000e+00> : vector<16x16xf32>
    %303 = tpu.matmul %298, %300, %cst_108 {dimension_numbers = #tpu.dot_dimension_numbers<[1], [1], [0], [0], [0, 0, 1, 0], [], []>} : vector<16x8xbf16>, vector<16x8xbf16>, vector<16x16xf32> -> vector<16x16xf32>
    %cst_109 = arith.constant 0.353553385 : f32
    %304 = vector.broadcast %cst_109 : f32 to vector<16x16xf32>
    %305 = arith.mulf %303, %304 : vector<16x16xf32>
    %306 = vector.broadcast %1 : vector<1x16xf32> to vector<16x16xf32>
    %307 = arith.addf %305, %306 : vector<16x16xf32>
    %cst_110 = arith.constant dense<0xFF800000> : vector<16xf32>
    %308 = vector.multi_reduction <maximumf>, %307, %cst_110 [1] : vector<16x16xf32> to vector<16xf32>
    %309 = vector.shape_cast %308 : vector<16xf32> to vector<16x1xf32>
    %310 = vector.broadcast %309 : vector<16x1xf32> to vector<16x16xf32>
    %311 = arith.subf %307, %310 : vector<16x16xf32>
    %312 = math.exp %311 : vector<16x16xf32>
    %cst_111 = arith.constant dense<0.000000e+00> : vector<16xf32>
    %313 = vector.multi_reduction <add>, %312, %cst_111 [1] : vector<16x16xf32> to vector<16xf32>
    %314 = vector.shape_cast %313 : vector<16xf32> to vector<16x1xf32>
    %315 = tpu.reciprocal %314 {approx = true} : vector<16x1xf32> -> vector<16x1xf32>
    %316 = vector.broadcast %315 : vector<16x1xf32> to vector<16x16xf32>
    %317 = arith.mulf %312, %316 : vector<16x16xf32>
    %318 = arith.truncf %317 : vector<16x16xf32> to vector<16x16xbf16>
    %cst_112 = arith.constant dense<0.000000e+00> : vector<16x8xf32>
    %319 = tpu.matmul %318, %302, %cst_112 {dimension_numbers = #tpu.dot_dimension_numbers<[1], [0], [0], [1], [0, 0, 1, 1], [], []>} : vector<16x16xbf16>, vector<16x8xbf16>, vector<16x8xf32> -> vector<16x8xf32>
    %320 = tpu.concatenate %250, %273, %296, %319 in 1 : vector<16x8xf32>, vector<16x8xf32>, vector<16x8xf32>, vector<16x8xf32> -> vector<16x32xf32>
    %c1_113 = arith.constant 1 : index
    %c0_114 = arith.constant 0 : index
    %c0_115 = arith.constant 0 : index
    %321 = vector.load %arg9[%c1_113, %c0_114, %c0_115] : memref<2x32x32xbf16, #tpu.memory_space<vmem>>, vector<1x32x32xbf16>
    %322 = vector.shape_cast %321 : vector<1x32x32xbf16> to vector<32x32xbf16>
    %c1_116 = arith.constant 1 : index
    %c0_117 = arith.constant 0 : index
    %c0_118 = arith.constant 0 : index
    %323 = vector.load %arg10[%c1_116, %c0_117, %c0_118] : memref<2x1x32xf32, #tpu.memory_space<vmem>>, vector<1x1x32xf32>
    %324 = vector.shape_cast %323 : vector<1x1x32xf32> to vector<1x32xf32>
    %325 = arith.truncf %320 : vector<16x32xf32> to vector<16x32xbf16>
    %cst_119 = arith.constant dense<0.000000e+00> : vector<16x32xf32>
    %326 = tpu.matmul %325, %322, %cst_119 {dimension_numbers = #tpu.dot_dimension_numbers<[1], [0], [0], [1], [0, 0, 1, 1], [], []>} : vector<16x32xbf16>, vector<32x32xbf16>, vector<16x32xf32> -> vector<16x32xf32>
    %327 = vector.broadcast %324 : vector<1x32xf32> to vector<16x32xf32>
    %328 = arith.addf %326, %327 : vector<16x32xf32>
    %329 = arith.addf %219, %328 : vector<16x32xf32>
    %c1_120 = arith.constant 1 : index
    %c0_121 = arith.constant 0 : index
    %c0_122 = arith.constant 0 : index
    %330 = vector.load %arg11[%c1_120, %c0_121, %c0_122] : memref<2x1x32xf32, #tpu.memory_space<vmem>>, vector<1x1x32xf32>
    %331 = vector.shape_cast %330 : vector<1x1x32xf32> to vector<1x32xf32>
    %c1_123 = arith.constant 1 : index
    %c0_124 = arith.constant 0 : index
    %c0_125 = arith.constant 0 : index
    %332 = vector.load %arg12[%c1_123, %c0_124, %c0_125] : memref<2x1x32xf32, #tpu.memory_space<vmem>>, vector<1x1x32xf32>
    %333 = vector.shape_cast %332 : vector<1x1x32xf32> to vector<1x32xf32>
    %cst_126 = arith.constant dense<0.000000e+00> : vector<16xf32>
    %334 = vector.multi_reduction <add>, %329, %cst_126 [1] : vector<16x32xf32> to vector<16xf32>
    %335 = vector.shape_cast %334 : vector<16xf32> to vector<16x1xf32>
    %cst_127 = arith.constant 3.200000e+01 : f32
    %336 = vector.broadcast %cst_127 : f32 to vector<16x1xf32>
    %337 = arith.divf %335, %336 : vector<16x1xf32>
    %338 = vector.broadcast %337 : vector<16x1xf32> to vector<16x32xf32>
    %339 = arith.subf %329, %338 : vector<16x32xf32>
    %340 = arith.mulf %339, %339 : vector<16x32xf32>
    %cst_128 = arith.constant dense<0.000000e+00> : vector<16xf32>
    %341 = vector.multi_reduction <add>, %340, %cst_128 [1] : vector<16x32xf32> to vector<16xf32>
    %342 = vector.shape_cast %341 : vector<16xf32> to vector<16x1xf32>
    %cst_129 = arith.constant 3.200000e+01 : f32
    %343 = vector.broadcast %cst_129 : f32 to vector<16x1xf32>
    %344 = arith.divf %342, %343 : vector<16x1xf32>
    %345 = vector.broadcast %337 : vector<16x1xf32> to vector<16x32xf32>
    %346 = arith.subf %329, %345 : vector<16x32xf32>
    %cst_130 = arith.constant 9.99999996E-13 : f32
    %347 = vector.broadcast %cst_130 : f32 to vector<16x1xf32>
    %348 = arith.addf %344, %347 : vector<16x1xf32>
    %349 = math.rsqrt %348 : vector<16x1xf32>
    %350 = vector.broadcast %349 : vector<16x1xf32> to vector<16x32xf32>
    %351 = arith.mulf %346, %350 : vector<16x32xf32>
    %352 = vector.broadcast %331 : vector<1x32xf32> to vector<16x32xf32>
    %353 = arith.mulf %351, %352 : vector<16x32xf32>
    %354 = vector.broadcast %333 : vector<1x32xf32> to vector<16x32xf32>
    %355 = arith.addf %353, %354 : vector<16x32xf32>
    %c1_131 = arith.constant 1 : index
    %c0_132 = arith.constant 0 : index
    %c0_133 = arith.constant 0 : index
    %356 = vector.load %arg13[%c1_131, %c0_132, %c0_133] : memref<2x32x64xbf16, #tpu.memory_space<vmem>>, vector<1x32x64xbf16>
    %357 = vector.shape_cast %356 : vector<1x32x64xbf16> to vector<32x64xbf16>
    %c1_134 = arith.constant 1 : index
    %c0_135 = arith.constant 0 : index
    %c0_136 = arith.constant 0 : index
    %358 = vector.load %arg14[%c1_134, %c0_135, %c0_136] : memref<2x1x64xf32, #tpu.memory_space<vmem>>, vector<1x1x64xf32>
    %359 = vector.shape_cast %358 : vector<1x1x64xf32> to vector<1x64xf32>
    %360 = arith.truncf %355 : vector<16x32xf32> to vector<16x32xbf16>
    %cst_137 = arith.constant dense<0.000000e+00> : vector<16x64xf32>
    %361 = tpu.matmul %360, %357, %cst_137 {dimension_numbers = #tpu.dot_dimension_numbers<[1], [0], [0], [1], [0, 0, 1, 1], [], []>} : vector<16x32xbf16>, vector<32x64xbf16>, vector<16x64xf32> -> vector<16x64xf32>
    %362 = vector.broadcast %359 : vector<1x64xf32> to vector<16x64xf32>
    %363 = arith.addf %361, %362 : vector<16x64xf32>
    %364 = arith.mulf %363, %363 : vector<16x64xf32>
    %365 = arith.mulf %363, %364 : vector<16x64xf32>
    %cst_138 = arith.constant 4.471500e-02 : f32
    %366 = vector.broadcast %cst_138 : f32 to vector<16x64xf32>
    %367 = arith.mulf %366, %365 : vector<16x64xf32>
    %368 = arith.addf %363, %367 : vector<16x64xf32>
    %cst_139 = arith.constant 0.797884583 : f32
    %369 = vector.broadcast %cst_139 : f32 to vector<16x64xf32>
    %370 = arith.mulf %369, %368 : vector<16x64xf32>
    %371 = math.tanh %370 : vector<16x64xf32>
    %cst_140 = arith.constant 1.000000e+00 : f32
    %372 = vector.broadcast %cst_140 : f32 to vector<16x64xf32>
    %373 = arith.addf %372, %371 : vector<16x64xf32>
    %cst_141 = arith.constant 5.000000e-01 : f32
    %374 = vector.broadcast %cst_141 : f32 to vector<16x64xf32>
    %375 = arith.mulf %374, %373 : vector<16x64xf32>
    %376 = arith.mulf %363, %375 : vector<16x64xf32>
    %c1_142 = arith.constant 1 : index
    %c0_143 = arith.constant 0 : index
    %c0_144 = arith.constant 0 : index
    %377 = vector.load %arg15[%c1_142, %c0_143, %c0_144] : memref<2x64x32xbf16, #tpu.memory_space<vmem>>, vector<1x64x32xbf16>
    %378 = vector.shape_cast %377 : vector<1x64x32xbf16> to vector<64x32xbf16>
    %c1_145 = arith.constant 1 : index
    %c0_146 = arith.constant 0 : index
    %c0_147 = arith.constant 0 : index
    %379 = vector.load %arg16[%c1_145, %c0_146, %c0_147] : memref<2x1x32xf32, #tpu.memory_space<vmem>>, vector<1x1x32xf32>
    %380 = vector.shape_cast %379 : vector<1x1x32xf32> to vector<1x32xf32>
    %381 = arith.truncf %376 : vector<16x64xf32> to vector<16x64xbf16>
    %cst_148 = arith.constant dense<0.000000e+00> : vector<16x32xf32>
    %382 = tpu.matmul %381, %378, %cst_148 {dimension_numbers = #tpu.dot_dimension_numbers<[1], [0], [0], [1], [0, 0, 1, 1], [], []>} : vector<16x64xbf16>, vector<64x32xbf16>, vector<16x32xf32> -> vector<16x32xf32>
    %383 = vector.broadcast %380 : vector<1x32xf32> to vector<16x32xf32>
    %384 = arith.addf %382, %383 : vector<16x32xf32>
    %385 = arith.addf %355, %384 : vector<16x32xf32>
    %c1_149 = arith.constant 1 : index
    %c0_150 = arith.constant 0 : index
    %c0_151 = arith.constant 0 : index
    %386 = vector.load %arg17[%c1_149, %c0_150, %c0_151] : memref<2x1x32xf32, #tpu.memory_space<vmem>>, vector<1x1x32xf32>
    %387 = vector.shape_cast %386 : vector<1x1x32xf32> to vector<1x32xf32>
    %c1_152 = arith.constant 1 : index
    %c0_153 = arith.constant 0 : index
    %c0_154 = arith.constant 0 : index
    %388 = vector.load %arg18[%c1_152, %c0_153, %c0_154] : memref<2x1x32xf32, #tpu.memory_space<vmem>>, vector<1x1x32xf32>
    %389 = vector.shape_cast %388 : vector<1x1x32xf32> to vector<1x32xf32>
    %cst_155 = arith.constant dense<0.000000e+00> : vector<16xf32>
    %390 = vector.multi_reduction <add>, %385, %cst_155 [1] : vector<16x32xf32> to vector<16xf32>
    %391 = vector.shape_cast %390 : vector<16xf32> to vector<16x1xf32>
    %cst_156 = arith.constant 3.200000e+01 : f32
    %392 = vector.broadcast %cst_156 : f32 to vector<16x1xf32>
    %393 = arith.divf %391, %392 : vector<16x1xf32>
    %394 = vector.broadcast %393 : vector<16x1xf32> to vector<16x32xf32>
    %395 = arith.subf %385, %394 : vector<16x32xf32>
    %396 = arith.mulf %395, %395 : vector<16x32xf32>
    %cst_157 = arith.constant dense<0.000000e+00> : vector<16xf32>
    %397 = vector.multi_reduction <add>, %396, %cst_157 [1] : vector<16x32xf32> to vector<16xf32>
    %398 = vector.shape_cast %397 : vector<16xf32> to vector<16x1xf32>
    %cst_158 = arith.constant 3.200000e+01 : f32
    %399 = vector.broadcast %cst_158 : f32 to vector<16x1xf32>
    %400 = arith.divf %398, %399 : vector<16x1xf32>
    %401 = vector.broadcast %393 : vector<16x1xf32> to vector<16x32xf32>
    %402 = arith.subf %385, %401 : vector<16x32xf32>
    %cst_159 = arith.constant 9.99999996E-13 : f32
    %403 = vector.broadcast %cst_159 : f32 to vector<16x1xf32>
    %404 = arith.addf %400, %403 : vector<16x1xf32>
    %405 = math.rsqrt %404 : vector<16x1xf32>
    %406 = vector.broadcast %405 : vector<16x1xf32> to vector<16x32xf32>
    %407 = arith.mulf %402, %406 : vector<16x32xf32>
    %408 = vector.broadcast %387 : vector<1x32xf32> to vector<16x32xf32>
    %409 = arith.mulf %407, %408 : vector<16x32xf32>
    %410 = vector.broadcast %389 : vector<1x32xf32> to vector<16x32xf32>
    %411 = arith.addf %409, %410 : vector<16x32xf32>
    %c0_160 = arith.constant 0 : index
    %c0_161 = arith.constant 0 : index
    %c0_162 = arith.constant 0 : index
    %412 = vector.load %arg25[%c0_160, %c0_161, %c0_162] : memref<1x16x32xf32, #tpu.memory_space<vmem>>, vector<1x16x32xf32>
    %413 = vector.shape_cast %412 : vector<1x16x32xf32> to vector<16x32xf32>
    %414 = vector.shape_cast %411 : vector<16x32xf32> to vector<1x16x32xf32>
    tpu.vector_store %arg25[%c0_160, %c0_161, %c0_162], %414 {strides = array<i32>} : memref<1x16x32xf32, #tpu.memory_space<vmem>>, vector<1x16x32xf32>,
    %415 = vector.extract_strided_slice %411 {offsets = [0, 0], sizes = [1, 32], strides = [1, 1]} : vector<16x32xf32> to vector<1x32xf32>
    %c0_163 = arith.constant 0 : index
    %c0_164 = arith.constant 0 : index
    %416 = vector.load %arg19[%c0_163, %c0_164] : memref<32x32xf32, #tpu.memory_space<vmem>>, vector<32x32xf32>
    %cst_165 = arith.constant dense<0.000000e+00> : vector<1x32xf32>
    %417 = tpu.matmul %415, %416, %cst_165 {dimension_numbers = #tpu.dot_dimension_numbers<[1], [0], [0], [1], [0, 0, 1, 1], [], []>} : vector<1x32xf32>, vector<32x32xf32>, vector<1x32xf32> -> vector<1x32xf32>
    %c0_166 = arith.constant 0 : index
    %c0_167 = arith.constant 0 : index
    %418 = vector.load %arg20[%c0_166, %c0_167] : memref<1x32xf32, #tpu.memory_space<vmem>>, vector<1x32xf32>
    %419 = arith.addf %417, %418 : vector<1x32xf32>
    %420 = math.tanh %419 : vector<1x32xf32>
    %c0_168 = arith.constant 0 : index
    %c0_169 = arith.constant 0 : index
    %c0_170 = arith.constant 0 : index
    %421 = vector.load %arg26[%c0_168, %c0_169, %c0_170] : memref<1x1x32xf32, #tpu.memory_space<vmem>>, vector<1x1x32xf32>
    %422 = vector.shape_cast %421 : vector<1x1x32xf32> to vector<1x32xf32>
    %423 = vector.shape_cast %420 : vector<1x32xf32> to vector<1x1x32xf32>
    tpu.vector_store %arg26[%c0_168, %c0_169, %c0_170], %423 {strides = array<i32>} : memref<1x1x32xf32, #tpu.memory_space<vmem>>, vector<1x1x32xf32>,
    %c0_171 = arith.constant 0 : index
    %c0_172 = arith.constant 0 : index
    %424 = vector.load %arg23[%c0_171, %c0_172] : memref<32x5xf32, #tpu.memory_space<vmem>>, vector<32x5xf32>
    %cst_173 = arith.constant dense<0.000000e+00> : vector<1x5xf32>
    %425 = tpu.matmul %420, %424, %cst_173 {dimension_numbers = #tpu.dot_dimension_numbers<[1], [0], [0], [1], [0, 0, 1, 1], [], []>} : vector<1x32xf32>, vector<32x5xf32>, vector<1x5xf32> -> vector<1x5xf32>
    %c0_174 = arith.constant 0 : index
    %c0_175 = arith.constant 0 : index
    %426 = vector.load %arg24[%c0_174, %c0_175] : memref<1x5xf32, #tpu.memory_space<vmem>>, vector<1x5xf32>
    %427 = arith.addf %425, %426 : vector<1x5xf32>
    %c0_176 = arith.constant 0 : index
    %c0_177 = arith.constant 0 : index
    %c0_178 = arith.constant 0 : index
    %428 = vector.load %arg28[%c0_176, %c0_177, %c0_178] : memref<1x1x5xf32, #tpu.memory_space<vmem>>, vector<1x1x5xf32>
    %429 = vector.shape_cast %428 : vector<1x1x5xf32> to vector<1x5xf32>
    %430 = vector.shape_cast %427 : vector<1x5xf32> to vector<1x1x5xf32>
    tpu.vector_store %arg28[%c0_176, %c0_177, %c0_178], %430 {strides = array<i32>} : memref<1x1x5xf32, #tpu.memory_space<vmem>>, vector<1x1x5xf32>,
    %c0_179 = arith.constant 0 : index
    %c0_180 = arith.constant 0 : index
    %c0_181 = arith.constant 0 : index
    %431 = vector.load %arg3[%c0_179, %c0_180, %c0_181] : memref<1x6x1xi32, #tpu.memory_space<vmem>>, vector<1x6x1xi32>
    %432 = vector.shape_cast %431 : vector<1x6x1xi32> to vector<6x1xi32>
    %433 = tpu.iota {dimensions = array<i32: 1>} : vector<6x16xi32>
    %434 = vector.broadcast %432 : vector<6x1xi32> to vector<6x16xi32>
    %435 = arith.cmpi eq, %433, %434 : vector<6x16xi32>
    %436 = arith.extui %435 : vector<6x16xi1> to vector<6x16xi32>
    %437 = arith.sitofp %436 : vector<6x16xi32> to vector<6x16xf32>
    %cst_182 = arith.constant dense<0.000000e+00> : vector<6x32xf32>
    %438 = tpu.matmul %437, %411, %cst_182 {dimension_numbers = #tpu.dot_dimension_numbers<[1], [0], [0], [1], [0, 0, 1, 1], [], []>} : vector<6x16xf32>, vector<16x32xf32>, vector<6x32xf32> -> vector<6x32xf32>
    %c0_183 = arith.constant 0 : index
    %c0_184 = arith.constant 0 : index
    %439 = vector.load %arg21[%c0_183, %c0_184] : memref<32x4xf32, #tpu.memory_space<vmem>>, vector<32x4xf32>
    %cst_185 = arith.constant dense<0.000000e+00> : vector<6x4xf32>
    %440 = tpu.matmul %438, %439, %cst_185 {dimension_numbers = #tpu.dot_dimension_numbers<[1], [0], [0], [1], [0, 0, 1, 1], [], []>} : vector<6x32xf32>, vector<32x4xf32>, vector<6x4xf32> -> vector<6x4xf32>
    %c0_186 = arith.constant 0 : index
    %c0_187 = arith.constant 0 : index
    %441 = vector.load %arg22[%c0_186, %c0_187] : memref<1x4xf32, #tpu.memory_space<vmem>>, vector<1x4xf32>
    %442 = vector.broadcast %441 : vector<1x4xf32> to vector<6x4xf32>
    %443 = arith.addf %440, %442 : vector<6x4xf32>
    %cst_188 = arith.constant dense<0xFF800000> : vector<4xf32>
    %444 = vector.multi_reduction <maximumf>, %443, %cst_188 [0] : vector<6x4xf32> to vector<4xf32>
    %445 = vector.shape_cast %444 : vector<4xf32> to vector<1x4xf32>
    %446 = vector.broadcast %445 : vector<1x4xf32> to vector<6x4xf32>
    %447 = arith.subf %443, %446 : vector<6x4xf32>
    %448 = math.exp %447 : vector<6x4xf32>
    %cst_189 = arith.constant dense<0.000000e+00> : vector<4xf32>
    %449 = vector.multi_reduction <add>, %448, %cst_189 [0] : vector<6x4xf32> to vector<4xf32>
    %450 = vector.shape_cast %449 : vector<4xf32> to vector<1x4xf32>
    %451 = tpu.reciprocal %450 {approx = true} : vector<1x4xf32> -> vector<1x4xf32>
    %452 = vector.broadcast %451 : vector<1x4xf32> to vector<6x4xf32>
    %453 = arith.mulf %448, %452 : vector<6x4xf32>
    %c0_190 = arith.constant 0 : index
    %c0_191 = arith.constant 0 : index
    %c0_192 = arith.constant 0 : index
    %454 = vector.load %arg27[%c0_190, %c0_191, %c0_192] : memref<1x6x4xf32, #tpu.memory_space<vmem>>, vector<1x6x4xf32>
    %455 = vector.shape_cast %454 : vector<1x6x4xf32> to vector<6x4xf32>
    %456 = vector.shape_cast %453 : vector<6x4xf32> to vector<1x6x4xf32>
    tpu.vector_store %arg27[%c0_190, %c0_191, %c0_192], %456 {strides = array<i32>} : memref<1x6x4xf32, #tpu.memory_space<vmem>>, vector<1x6x4xf32>,
    %cst_193 = arith.constant dense<0xFF800000> : vector<6xf32>
    %457 = vector.multi_reduction <maximumf>, %453, %cst_193 [1] : vector<6x4xf32> to vector<6xf32>
    %458 = vector.shape_cast %457 : vector<6xf32> to vector<6x1xf32>
    %459 = tpu.iota {dimensions = array<i32: 1>} : vector<6x4xi32>
    %460 = vector.broadcast %458 : vector<6x1xf32> to vector<6x4xf32>
    %461 = arith.cmpf oge, %453, %460 : vector<6x4xf32>
    %c4_i32 = arith.constant 4 : i32
    %462 = vector.broadcast %c4_i32 : i32 to vector<6x4xi32>
    %463 = arith.select %461, %459, %462 : vector<6x4xi1>, vector<6x4xi32>
    %cst_194 = arith.constant dense<2147483647> : vector<6xi32>
    %464 = vector.multi_reduction <minsi>, %463, %cst_194 [1] : vector<6x4xi32> to vector<6xi32>
    %465 = vector.shape_cast %464 : vector<6xi32> to vector<6x1xi32>
    %466 = tpu.iota {dimensions = array<i32: 1>} : vector<6x6xi32>
    %467 = vector.broadcast %465 : vector<6x1xi32> to vector<6x6xi32>
    %468 = arith.cmpi eq, %466, %467 : vector<6x6xi32>
    %469 = arith.extui %468 : vector<6x6xi1> to vector<6x6xi32>
    %470 = arith.sitofp %469 : vector<6x6xi32> to vector<6x6xf32>
    %cst_195 = arith.constant dense<0xFF800000> : vector<6xf32>
    %471 = vector.multi_reduction <maximumf>, %470, %cst_195 [0] : vector<6x6xf32> to vector<6xf32>
    %472 = vector.shape_cast %471 : vector<6xf32> to vector<1x6xf32>
    %cst_196 = arith.constant 1.000000e+00 : f32
    %473 = vector.broadcast %cst_196 : f32 to vector<1x6xf32>
    %474 = arith.cmpf oeq, %472, %473 : vector<1x6xf32>
    %475 = arith.extui %474 : vector<1x6xi1> to vector<1x6xi32>
    %476 = arith.sitofp %475 : vector<1x6xi32> to vector<1x6xf32>
    %477 = tpu.iota {dimensions = array<i32: 0>} : vector<6x6xi32>
    %478 = tpu.iota {dimensions = array<i32: 1>} : vector<6x6xi32>
    %479 = arith.cmpi sle, %477, %478 : vector<6x6xi32>
    %480 = arith.extui %479 : vector<6x6xi1> to vector<6x6xi32>
    %481 = arith.sitofp %480 : vector<6x6xi32> to vector<6x6xf32>
    %cst_197 = arith.constant dense<0.000000e+00> : vector<1x6xf32>
    %482 = tpu.matmul %476, %481, %cst_197 {dimension_numbers = #tpu.dot_dimension_numbers<[1], [0], [0], [1], [0, 0, 1, 1], [], []>} : vector<1x6xf32>, vector<6x6xf32>, vector<1x6xf32> -> vector<1x6xf32>
    %cst_198 = arith.constant 1.000000e+00 : f32
    %483 = vector.broadcast %cst_198 : f32 to vector<1x6xf32>
    %484 = arith.subf %482, %483 : vector<1x6xf32>
    %485 = arith.fptosi %484 : vector<1x6xf32> to vector<1x6xi32>
    %486 = tpu.iota {dimensions = array<i32: 0>} : vector<6x6xi32>
    %487 = vector.broadcast %485 : vector<1x6xi32> to vector<6x6xi32>
    %488 = arith.cmpi eq, %486, %487 : vector<6x6xi32>
    %489 = arith.extui %488 : vector<6x6xi1> to vector<6x6xi32>
    %490 = arith.sitofp %489 : vector<6x6xi32> to vector<6x6xf32>
    %491 = vector.broadcast %476 : vector<1x6xf32> to vector<6x6xf32>
    %492 = arith.mulf %491, %490 : vector<6x6xf32>
    %cst_199 = arith.constant dense<0.000000e+00> : vector<6x32xf32>
    %493 = tpu.matmul %492, %438, %cst_199 {dimension_numbers = #tpu.dot_dimension_numbers<[1], [0], [0], [1], [0, 0, 1, 1], [], []>} : vector<6x6xf32>, vector<6x32xf32>, vector<6x32xf32> -> vector<6x32xf32>
    %c0_200 = arith.constant 0 : index
    %c0_201 = arith.constant 0 : index
    %c0_202 = arith.constant 0 : index
    %494 = vector.load %arg29[%c0_200, %c0_201, %c0_202] : memref<1x6x32xf32, #tpu.memory_space<vmem>>, vector<1x6x32xf32>
    %495 = vector.shape_cast %494 : vector<1x6x32xf32> to vector<6x32xf32>
    %496 = vector.shape_cast %493 : vector<6x32xf32> to vector<1x6x32xf32>
    tpu.vector_store %arg29[%c0_200, %c0_201, %c0_202], %496 {strides = array<i32>} : memref<1x6x32xf32, #tpu.memory_space<vmem>>, vector<1x6x32xf32>,
    return
  }
  func.func @transform_0(%arg0: i32) -> (i32, i32, i32) {
    %c0_i32 = arith.constant 0 : i32
    %c0_i32_0 = arith.constant 0 : i32
    %c0_i32_1 = arith.constant 0 : i32
    return %arg0, %c0_i32, %c0_i32_0 : i32, i32, i32
  }
  func.func @transform_1(%arg0: i32) -> (i32, i32, i32) {
    %c0_i32 = arith.constant 0 : i32
    %c0_i32_0 = arith.constant 0 : i32
    %c0_i32_1 = arith.constant 0 : i32
    return %arg0, %c0_i32, %c0_i32_0 : i32, i32, i32
  }
  func.func @transform_2(%arg0: i32) -> (i32, i32, i32) {
    %c0_i32 = arith.constant 0 : i32
    %c0_i32_0 = arith.constant 0 : i32
    %c0_i32_1 = arith.constant 0 : i32
    return %arg0, %c0_i32, %c0_i32_0 : i32, i32, i32
  }
  func.func @transform_3(%arg0: i32) -> (i32, i32, i32) {
    %c0_i32 = arith.constant 0 : i32
    %c0_i32_0 = arith.constant 0 : i32
    %c0_i32_1 = arith.constant 0 : i32
    return %arg0, %c0_i32, %c0_i32_0 : i32, i32, i32
  }
  func.func @transform_4(%arg0: i32) -> (i32, i32) {
    %c0_i32 = arith.constant 0 : i32
    %c0_i32_0 = arith.constant 0 : i32
    %c0_i32_1 = arith.constant 0 : i32
    return %c0_i32, %c0_i32_0 : i32, i32
  }
  func.func @transform_5(%arg0: i32) -> (i32, i32) {
    %c0_i32 = arith.constant 0 : i32
    %c0_i32_0 = arith.constant 0 : i32
    %c0_i32_1 = arith.constant 0 : i32
    return %c0_i32, %c0_i32_0 : i32, i32
  }
  func.func @transform_6(%arg0: i32) -> (i32, i32, i32) {
    %c0_i32 = arith.constant 0 : i32
    %c0_i32_0 = arith.constant 0 : i32
    %c0_i32_1 = arith.constant 0 : i32
    %c0_i32_2 = arith.constant 0 : i32
    return %c0_i32, %c0_i32_0, %c0_i32_1 : i32, i32, i32
  }
  func.func @transform_7(%arg0: i32) -> (i32, i32, i32) {
    %c0_i32 = arith.constant 0 : i32
    %c0_i32_0 = arith.constant 0 : i32
    %c0_i32_1 = arith.constant 0 : i32
    %c0_i32_2 = arith.constant 0 : i32
    return %c0_i32, %c0_i32_0, %c0_i32_1 : i32, i32, i32
  }
  func.func @transform_8(%arg0: i32) -> (i32, i32, i32) {
    %c0_i32 = arith.constant 0 : i32
    %c0_i32_0 = arith.constant 0 : i32
    %c0_i32_1 = arith.constant 0 : i32
    %c0_i32_2 = arith.constant 0 : i32
    return %c0_i32, %c0_i32_0, %c0_i32_1 : i32, i32, i32
  }
  func.func @transform_9(%arg0: i32) -> (i32, i32, i32) {
    %c0_i32 = arith.constant 0 : i32
    %c0_i32_0 = arith.constant 0 : i32
    %c0_i32_1 = arith.constant 0 : i32
    %c0_i32_2 = arith.constant 0 : i32
    return %c0_i32, %c0_i32_0, %c0_i32_1 : i32, i32, i32
  }
  func.func @transform_10(%arg0: i32) -> (i32, i32, i32) {
    %c0_i32 = arith.constant 0 : i32
    %c0_i32_0 = arith.constant 0 : i32
    %c0_i32_1 = arith.constant 0 : i32
    %c0_i32_2 = arith.constant 0 : i32
    return %c0_i32, %c0_i32_0, %c0_i32_1 : i32, i32, i32
  }
  func.func @transform_11(%arg0: i32) -> (i32, i32, i32) {
    %c0_i32 = arith.constant 0 : i32
    %c0_i32_0 = arith.constant 0 : i32
    %c0_i32_1 = arith.constant 0 : i32
    %c0_i32_2 = arith.constant 0 : i32
    return %c0_i32, %c0_i32_0, %c0_i32_1 : i32, i32, i32
  }
  func.func @transform_12(%arg0: i32) -> (i32, i32, i32) {
    %c0_i32 = arith.constant 0 : i32
    %c0_i32_0 = arith.constant 0 : i32
    %c0_i32_1 = arith.constant 0 : i32
    %c0_i32_2 = arith.constant 0 : i32
    return %c0_i32, %c0_i32_0, %c0_i32_1 : i32, i32, i32
  }
  func.func @transform_13(%arg0: i32) -> (i32, i32, i32) {
    %c0_i32 = arith.constant 0 : i32
    %c0_i32_0 = arith.constant 0 : i32
    %c0_i32_1 = arith.constant 0 : i32
    %c0_i32_2 = arith.constant 0 : i32
    return %c0_i32, %c0_i32_0, %c0_i32_1 : i32, i32, i32
  }
  func.func @transform_14(%arg0: i32) -> (i32, i32, i32) {
    %c0_i32 = arith.constant 0 : i32
    %c0_i32_0 = arith.constant 0 : i32
    %c0_i32_1 = arith.constant 0 : i32
    %c0_i32_2 = arith.constant 0 : i32
    return %c0_i32, %c0_i32_0, %c0_i32_1 : i32, i32, i32
  }
  func.func @transform_15(%arg0: i32) -> (i32, i32, i32) {
    %c0_i32 = arith.constant 0 : i32
    %c0_i32_0 = arith.constant 0 : i32
    %c0_i32_1 = arith.constant 0 : i32
    %c0_i32_2 = arith.constant 0 : i32
    return %c0_i32, %c0_i32_0, %c0_i32_1 : i32, i32, i32
  }
  func.func @transform_16(%arg0: i32) -> (i32, i32, i32) {
    %c0_i32 = arith.constant 0 : i32
    %c0_i32_0 = arith.constant 0 : i32
    %c0_i32_1 = arith.constant 0 : i32
    %c0_i32_2 = arith.constant 0 : i32
    return %c0_i32, %c0_i32_0, %c0_i32_1 : i32, i32, i32
  }
  func.func @transform_17(%arg0: i32) -> (i32, i32, i32) {
    %c0_i32 = arith.constant 0 : i32
    %c0_i32_0 = arith.constant 0 : i32
    %c0_i32_1 = arith.constant 0 : i32
    %c0_i32_2 = arith.constant 0 : i32
    return %c0_i32, %c0_i32_0, %c0_i32_1 : i32, i32, i32
  }
  func.func @transform_18(%arg0: i32) -> (i32, i32) {
    %c0_i32 = arith.constant 0 : i32
    %c0_i32_0 = arith.constant 0 : i32
    %c0_i32_1 = arith.constant 0 : i32
    return %c0_i32, %c0_i32_0 : i32, i32
  }
  func.func @transform_19(%arg0: i32) -> (i32, i32) {
    %c0_i32 = arith.constant 0 : i32
    %c0_i32_0 = arith.constant 0 : i32
    %c0_i32_1 = arith.constant 0 : i32
    return %c0_i32, %c0_i32_0 : i32, i32
  }
  func.func @transform_20(%arg0: i32) -> (i32, i32) {
    %c0_i32 = arith.constant 0 : i32
    %c0_i32_0 = arith.constant 0 : i32
    %c0_i32_1 = arith.constant 0 : i32
    return %c0_i32, %c0_i32_0 : i32, i32
  }
  func.func @transform_21(%arg0: i32) -> (i32, i32) {
    %c0_i32 = arith.constant 0 : i32
    %c0_i32_0 = arith.constant 0 : i32
    %c0_i32_1 = arith.constant 0 : i32
    return %c0_i32, %c0_i32_0 : i32, i32
  }
  func.func @transform_22(%arg0: i32) -> (i32, i32) {
    %c0_i32 = arith.constant 0 : i32
    %c0_i32_0 = arith.constant 0 : i32
    %c0_i32_1 = arith.constant 0 : i32
    return %c0_i32, %c0_i32_0 : i32, i32
  }
  func.func @transform_23(%arg0: i32) -> (i32, i32) {
    %c0_i32 = arith.constant 0 : i32
    %c0_i32_0 = arith.constant 0 : i32
    %c0_i32_1 = arith.constant 0 : i32
    return %c0_i32, %c0_i32_0 : i32, i32
  }
  func.func @transform_24(%arg0: i32) -> (i32, i32, i32) {
    %c0_i32 = arith.constant 0 : i32
    %c0_i32_0 = arith.constant 0 : i32
    %c0_i32_1 = arith.constant 0 : i32
    return %arg0, %c0_i32, %c0_i32_0 : i32, i32, i32
  }
  func.func @transform_25(%arg0: i32) -> (i32, i32, i32) {
    %c0_i32 = arith.constant 0 : i32
    %c0_i32_0 = arith.constant 0 : i32
    %c0_i32_1 = arith.constant 0 : i32
    return %arg0, %c0_i32, %c0_i32_0 : i32, i32, i32
  }
  func.func @transform_26(%arg0: i32) -> (i32, i32, i32) {
    %c0_i32 = arith.constant 0 : i32
    %c0_i32_0 = arith.constant 0 : i32
    %c0_i32_1 = arith.constant 0 : i32
    return %arg0, %c0_i32, %c0_i32_0 : i32, i32, i32
  }
  func.func @transform_27(%arg0: i32) -> (i32, i32, i32) {
    %c0_i32 = arith.constant 0 : i32
    %c0_i32_0 = arith.constant 0 : i32
    %c0_i32_1 = arith.constant 0 : i32
    return %arg0, %c0_i32, %c0_i32_0 : i32, i32, i32
  }
  func.func @transform_28(%arg0: i32) -> (i32, i32, i32) {
    %c0_i32 = arith.constant 0 : i32
    %c0_i32_0 = arith.constant 0 : i32
    %c0_i32_1 = arith.constant 0 : i32
    return %arg0, %c0_i32, %c0_i32_0 : i32, i32, i32
  }
}

</mosaic_0001>

<llo_original>
// kernel: fwd.1
$region0: #{fwd.1}
  #allocation0 [shape = 'u32[]', space=smem, size = 0x4, offset = 0x4, fixed_abs, tag = 'smem constant byte address 0x4 - core index']
  #allocation1 [shape = 'u32[144,128]{1,0:T(1,128)}', space=vmem, size = 0x12000, scoped, tag = 'internal scratch']
  %s0 = inlined_call_operand.vmem [shape: f32[2,16,32], index: 0, kind: input, shape index: {}]
  %s1 = inlined_call_operand.vmem [shape: f32[2,1,16], index: 1, kind: input, shape index: {}]
  %s2 = inlined_call_operand.vmem [shape: s32[2,6,1], index: 2, kind: input, shape index: {}]
  %s3 = inlined_call_operand.vmem [shape: f32[2,1,6], index: 3, kind: input, shape index: {}]
  %s4 = inlined_call_operand.vmem [shape: f32[1,32], index: 4, kind: input, shape index: {}]
  %s5 = inlined_call_operand.vmem [shape: f32[1,32], index: 5, kind: input, shape index: {}]
  %s6 = inlined_call_operand.vmem [shape: bf16[2,32,96], index: 6, kind: input, shape index: {}]
  %s7 = inlined_call_operand.vmem [shape: f32[2,1,96], index: 7, kind: input, shape index: {}]
  %s8 = inlined_call_operand.vmem [shape: bf16[2,32,32], index: 8, kind: input, shape index: {}]
  %s9 = inlined_call_operand.vmem [shape: f32[2,1,32], index: 9, kind: input, shape index: {}]
  %s10 = inlined_call_operand.vmem [shape: f32[2,1,32], index: 10, kind: input, shape index: {}]
  %s11 = inlined_call_operand.vmem [shape: f32[2,1,32], index: 11, kind: input, shape index: {}]
  %s12 = inlined_call_operand.vmem [shape: bf16[2,32,64], index: 12, kind: input, shape index: {}]
  %s13 = inlined_call_operand.vmem [shape: f32[2,1,64], index: 13, kind: input, shape index: {}]
  %s14 = inlined_call_operand.vmem [shape: bf16[2,64,32], index: 14, kind: input, shape index: {}]
  %s15 = inlined_call_operand.vmem [shape: f32[2,1,32], index: 15, kind: input, shape index: {}]
  %s16 = inlined_call_operand.vmem [shape: f32[2,1,32], index: 16, kind: input, shape index: {}]
  %s17 = inlined_call_operand.vmem [shape: f32[2,1,32], index: 17, kind: input, shape index: {}]
  %s18 = inlined_call_operand.vmem [shape: f32[32,32], index: 18, kind: input, shape index: {}]
  %s19 = inlined_call_operand.vmem [shape: f32[1,32], index: 19, kind: input, shape index: {}]
  %s20 = inlined_call_operand.vmem [shape: f32[32,4], index: 20, kind: input, shape index: {}]
  %s21 = inlined_call_operand.vmem [shape: f32[1,4], index: 21, kind: input, shape index: {}]
  %s22 = inlined_call_operand.vmem [shape: f32[32,5], index: 22, kind: input, shape index: {}]
  %s23 = inlined_call_operand.vmem [shape: f32[1,5], index: 23, kind: input, shape index: {}]
  %s24 = inlined_call_operand.hbm [shape: f32[2,16,32], index: 24, kind: output, shape index: {0}]
  %s25 = inlined_call_operand.hbm [shape: f32[2,1,32], index: 25, kind: output, shape index: {1}]
  %s26 = inlined_call_operand.vmem [shape: f32[2,6,4], index: 26, kind: output, shape index: {2}]
  %s27 = inlined_call_operand.hbm [shape: f32[2,1,5], index: 27, kind: output, shape index: {3}]
  %s28 = inlined_call_operand.vmem [shape: f32[2,6,32], index: 28, kind: output, shape index: {4}]
  %29 = xla_tuple %s24, %s25, %s26, %s27, %s28
  %s30 = sld [smem:[#allocation0]]
  $region161: #{fwd.1} parent=0
    _
  %s32 = ssub.s32 1, %s30
  %s33 = scalar_select 0, %s32, %s30
  $region1: #{fwd.1} parent=0
    #allocation2 [shape = 'u8[16384]{0}', space=vmem, size = 0x4000, scoped, tag = 'output window, operand 0']
    #allocation3 [shape = 's32[2]{0}', space=sflag, size = 0x8, scoped, tag = 'scoped memory for fwd.1']
    #allocation4 [shape = 'u8[1024]{0}', space=vmem, size = 0x400, scoped, tag = 'output window, operand 1']
    #allocation5 [shape = 's32[2]{0}', space=sflag, size = 0x8, scoped, tag = 'scoped memory for fwd.1']
    #allocation6 [shape = 'u8[1024]{0}', space=vmem, size = 0x400, scoped, tag = 'output window, operand 3']
    %34 = vsyncpa [#allocation3], 0
    %s35 = scalar_lea.sflag [#allocation3], 1
    %36 = vsyncpa %s35, 0
    %37 = vsyncpa [#allocation5], 0
    %s38 = scalar_lea.sflag [#allocation5], 1
    %39 = vsyncpa %s38, 0
    loop: start=0, step=1, limit=4
    $region2: #{fwd.1} parent=1 // loop_pre_header
      _
    $region3: #{fwd.1} parent=1 // loop_header
      %s41 = sphi 0, %s45
      %p42 = scmp.ge.s32.totalorder %s41, 4
      %s51 = sphi 0, %s53
      %s54 = sphi 0, %s51
      %s55 = sphi 0, %s54
      %s71 = sphi 0, %s55
      %s77 = sphi 0, %s79
      %s80 = sphi 0, %s77
      %s81 = sphi 0, %s80
      %s97 = sphi 0, %s81
      %s103 = sphi 0, %s105
      %s106 = sphi 0, %s103
      %s107 = sphi 0, %s106
      %s123 = sphi 0, %s107
      %s129 = sphi 0, %s131
      %s132 = sphi 0, %s129
      %s133 = sphi 0, %s132
      %s149 = sphi 0, %s133
      %s153 = sphi 0, %s153
      %s155 = sphi 0, %s153
      %s156 = sphi 0, %s155
      %s170 = sphi 0, %s156
      %s174 = sphi 0, %s174
      %s176 = sphi 0, %s174
      %s177 = sphi 0, %s176
      %s191 = sphi 0, %s177
      %s195 = sphi 0, %s195
      %s197 = sphi 0, %s195
      %s198 = sphi 0, %s197
      %s212 = sphi 0, %s198
      %s216 = sphi 0, %s216
      %s218 = sphi 0, %s216
      %s219 = sphi 0, %s218
      %s233 = sphi 0, %s219
      %s237 = sphi 0, %s237
      %s239 = sphi 0, %s237
      %s240 = sphi 0, %s239
      %s254 = sphi 0, %s240
      %s258 = sphi 0, %s258
      %s260 = sphi 0, %s258
      %s261 = sphi 0, %s260
      %s275 = sphi 0, %s261
      %s279 = sphi 0, %s279
      %s281 = sphi 0, %s279
      %s282 = sphi 0, %s281
      %s296 = sphi 0, %s282
      %s300 = sphi 0, %s300
      %s302 = sphi 0, %s300
      %s303 = sphi 0, %s302
      %s317 = sphi 0, %s303
      %s321 = sphi 0, %s321
      %s323 = sphi 0, %s321
      %s324 = sphi 0, %s323
      %s338 = sphi 0, %s324
      %s342 = sphi 0, %s342
      %s344 = sphi 0, %s342
      %s345 = sphi 0, %s344
      %s359 = sphi 0, %s345
      %s363 = sphi 0, %s363
      %s365 = sphi 0, %s363
      %s366 = sphi 0, %s365
      %s380 = sphi 0, %s366
      %s384 = sphi 0, %s384
      %s386 = sphi 0, %s384
      %s387 = sphi 0, %s386
      %s401 = sphi 0, %s387
      %s405 = sphi 0, %s405
      %s407 = sphi 0, %s405
      %s408 = sphi 0, %s407
      %s422 = sphi 0, %s408
      %s426 = sphi 0, %s426
      %s428 = sphi 0, %s426
      %s429 = sphi 0, %s428
      %s443 = sphi 0, %s429
      %s447 = sphi 0, %s447
      %s449 = sphi 0, %s447
      %s450 = sphi 0, %s449
      %s464 = sphi 0, %s450
      %s468 = sphi 0, %s468
      %s470 = sphi 0, %s468
      %s471 = sphi 0, %s470
      %s485 = sphi 0, %s471
      %s489 = sphi 0, %s489
      %s491 = sphi 0, %s489
      %s492 = sphi 0, %s491
      %s506 = sphi 0, %s492
      %s510 = sphi 0, %s510
      %s512 = sphi 0, %s510
      %s513 = sphi 0, %s512
      %s527 = sphi 0, %s513
      %s531 = sphi 0, %s531
      %s533 = sphi 0, %s531
      %s534 = sphi 0, %s533
      %s548 = sphi 0, %s534
      %s552 = sphi 0, %s552
      %s554 = sphi 0, %s552
      %s555 = sphi 0, %s554
      %s569 = sphi 0, %s555
      %s575 = sphi 0, %s577
      %s578 = sphi 0, %s575
      %s579 = sphi 0, %s578
      %s595 = sphi 0, %s579
      %s601 = sphi 0, %s603
      %s604 = sphi 0, %s601
      %s605 = sphi 0, %s604
      %s621 = sphi 0, %s605
      %s627 = sphi 0, %s629
      %s630 = sphi 0, %s627
      %s631 = sphi 0, %s630
      %s647 = sphi 0, %s631
      %s653 = sphi 0, %s655
      %s656 = sphi 0, %s653
      %s657 = sphi 0, %s656
      %s673 = sphi 0, %s657
      %s679 = sphi 0, %s681
      %s682 = sphi 0, %s679
      %s683 = sphi 0, %s682
      %s699 = sphi 0, %s683
    $region4: #{fwd.1} parent=1 // loop_header_branch
      %44 = sbr.rel (%p42) target = $region8
    $region5: #{fwd.1} parent=1 // loop_body
      %s46 = ssub.s32 %s41, 1
      %s47 = ssub.s32 %s41, 2
      %s48 = sadd.s32 %s41, 1
      %s49 = ssub.s32 %s41, %s48
      %p50 = scmp.eq.s32.totalorder %s49, 0
      %s52 = sadd.s32 %s51, 1
      %s53 = scalar_select %p50, %s51, %s52
      %p56 = pneg %p50
      %p57 = scmp.eq.s32.totalorder %s41, 1
      %p58 = por %p56, %p57
      %p59 = scmp.ne.s32.totalorder %s51, %s54
      %p60 = scmp.eq.s32.totalorder %s41, 0
      %p61 = por %p59, %p60
      %p62 = scmp.ne.s32.totalorder %s51, %s54
      %p63 = scmp.eq.s32.totalorder %s46, 1
      %p64 = por %p62, %p63
      %p65 = scmp.ne.s32.totalorder %s54, %s55
      %p66 = scmp.eq.s32.totalorder %s46, 0
      %p67 = por %p65, %p66
      %p68 = scmp.ne.s32.totalorder %s54, %s55
      %p69 = scmp.eq.s32.totalorder %s47, 1
      %p70 = por %p68, %p69
      %p72 = scmp.ne.s32.totalorder %s55, %s71
      %p73 = scmp.eq.s32.totalorder %s47, 0
      %p74 = por %p72, %p73
      %s75 = ssub.s32 %s41, %s48
      %p76 = scmp.eq.s32.totalorder %s75, 0
      %s78 = sadd.s32 %s77, 1
      %s79 = scalar_select %p76, %s77, %s78
      %p82 = pneg %p76
      %p83 = scmp.eq.s32.totalorder %s41, 1
      %p84 = por %p82, %p83
      %p85 = scmp.ne.s32.totalorder %s77, %s80
      %p86 = scmp.eq.s32.totalorder %s41, 0
      %p87 = por %p85, %p86
      %p88 = scmp.ne.s32.totalorder %s77, %s80
      %p89 = scmp.eq.s32.totalorder %s46, 1
      %p90 = por %p88, %p89
      %p91 = scmp.ne.s32.totalorder %s80, %s81
      %p92 = scmp.eq.s32.totalorder %s46, 0
      %p93 = por %p91, %p92
      %p94 = scmp.ne.s32.totalorder %s80, %s81
      %p95 = scmp.eq.s32.totalorder %s47, 1
      %p96 = por %p94, %p95
      %p98 = scmp.ne.s32.totalorder %s81, %s97
      %p99 = scmp.eq.s32.totalorder %s47, 0
      %p100 = por %p98, %p99
      %s101 = ssub.s32 %s41, %s48
      %p102 = scmp.eq.s32.totalorder %s101, 0
      %s104 = sadd.s32 %s103, 1
      %s105 = scalar_select %p102, %s103, %s104
      %p108 = pneg %p102
      %p109 = scmp.eq.s32.totalorder %s41, 1
      %p110 = por %p108, %p109
      %p111 = scmp.ne.s32.totalorder %s103, %s106
      %p112 = scmp.eq.s32.totalorder %s41, 0
      %p113 = por %p111, %p112
      %p114 = scmp.ne.s32.totalorder %s103, %s106
      %p115 = scmp.eq.s32.totalorder %s46, 1
      %p116 = por %p114, %p115
      %p117 = scmp.ne.s32.totalorder %s106, %s107
      %p118 = scmp.eq.s32.totalorder %s46, 0
      %p119 = por %p117, %p118
      %p120 = scmp.ne.s32.totalorder %s106, %s107
      %p121 = scmp.eq.s32.totalorder %s47, 1
      %p122 = por %p120, %p121
      %p124 = scmp.ne.s32.totalorder %s107, %s123
      %p125 = scmp.eq.s32.totalorder %s47, 0
      %p126 = por %p124, %p125
      %s127 = ssub.s32 %s41, %s48
      %p128 = scmp.eq.s32.totalorder %s127, 0
      %s130 = sadd.s32 %s129, 1
      %s131 = scalar_select %p128, %s129, %s130
      %p134 = pneg %p128
      %p135 = scmp.eq.s32.totalorder %s41, 1
      %p136 = por %p134, %p135
      %p137 = scmp.ne.s32.totalorder %s129, %s132
      %p138 = scmp.eq.s32.totalorder %s41, 0
      %p139 = por %p137, %p138
      %p140 = scmp.ne.s32.totalorder %s129, %s132
      %p141 = scmp.eq.s32.totalorder %s46, 1
      %p142 = por %p140, %p141
      %p143 = scmp.ne.s32.totalorder %s132, %s133
      %p144 = scmp.eq.s32.totalorder %s46, 0
      %p145 = por %p143, %p144
      %p146 = scmp.ne.s32.totalorder %s132, %s133
      %p147 = scmp.eq.s32.totalorder %s47, 1
      %p148 = por %p146, %p147
      %p150 = scmp.ne.s32.totalorder %s133, %s149
      %p151 = scmp.eq.s32.totalorder %s47, 0
      %p152 = por %p150, %p151
      %s154 = sadd.s32 %s153, 1
      %p157 = scmp.eq.s32.totalorder %s41, 1
      %p158 = scmp.ne.s32.totalorder %s153, %s155
      %p159 = scmp.eq.s32.totalorder %s41, 0
      %p160 = por %p158, %p159
      %p161 = scmp.ne.s32.totalorder %s153, %s155
      %p162 = scmp.eq.s32.totalorder %s46, 1
      %p163 = por %p161, %p162
      %p164 = scmp.ne.s32.totalorder %s155, %s156
      %p165 = scmp.eq.s32.totalorder %s46, 0
      %p166 = por %p164, %p165
      %p167 = scmp.ne.s32.totalorder %s155, %s156
      %p168 = scmp.eq.s32.totalorder %s47, 1
      %p169 = por %p167, %p168
      %p171 = scmp.ne.s32.totalorder %s156, %s170
      %p172 = scmp.eq.s32.totalorder %s47, 0
      %p173 = por %p171, %p172
      %s175 = sadd.s32 %s174, 1
      %p178 = scmp.eq.s32.totalorder %s41, 1
      %p179 = scmp.ne.s32.totalorder %s174, %s176
      %p180 = scmp.eq.s32.totalorder %s41, 0
      %p181 = por %p179, %p180
      %p182 = scmp.ne.s32.totalorder %s174, %s176
      %p183 = scmp.eq.s32.totalorder %s46, 1
      %p184 = por %p182, %p183
      %p185 = scmp.ne.s32.totalorder %s176, %s177
      %p186 = scmp.eq.s32.totalorder %s46, 0
      %p187 = por %p185, %p186
      %p188 = scmp.ne.s32.totalorder %s176, %s177
      %p189 = scmp.eq.s32.totalorder %s47, 1
      %p190 = por %p188, %p189
      %p192 = scmp.ne.s32.totalorder %s177, %s191
      %p193 = scmp.eq.s32.totalorder %s47, 0
      %p194 = por %p192, %p193
      %s196 = sadd.s32 %s195, 1
      %p199 = scmp.eq.s32.totalorder %s41, 1
      %p200 = scmp.ne.s32.totalorder %s195, %s197
      %p201 = scmp.eq.s32.totalorder %s41, 0
      %p202 = por %p200, %p201
      %p203 = scmp.ne.s32.totalorder %s195, %s197
      %p204 = scmp.eq.s32.totalorder %s46, 1
      %p205 = por %p203, %p204
      %p206 = scmp.ne.s32.totalorder %s197, %s198
      %p207 = scmp.eq.s32.totalorder %s46, 0
      %p208 = por %p206, %p207
      %p209 = scmp.ne.s32.totalorder %s197, %s198
      %p210 = scmp.eq.s32.totalorder %s47, 1
      %p211 = por %p209, %p210
      %p213 = scmp.ne.s32.totalorder %s198, %s212
      %p214 = scmp.eq.s32.totalorder %s47, 0
      %p215 = por %p213, %p214
      %s217 = sadd.s32 %s216, 1
      %p220 = scmp.eq.s32.totalorder %s41, 1
      %p221 = scmp.ne.s32.totalorder %s216, %s218
      %p222 = scmp.eq.s32.totalorder %s41, 0
      %p223 = por %p221, %p222
      %p224 = scmp.ne.s32.totalorder %s216, %s218
      %p225 = scmp.eq.s32.totalorder %s46, 1
      %p226 = por %p224, %p225
      %p227 = scmp.ne.s32.totalorder %s218, %s219
      %p228 = scmp.eq.s32.totalorder %s46, 0
      %p229 = por %p227, %p228
      %p230 = scmp.ne.s32.totalorder %s218, %s219
      %p231 = scmp.eq.s32.totalorder %s47, 1
      %p232 = por %p230, %p231
      %p234 = scmp.ne.s32.totalorder %s219, %s233
      %p235 = scmp.eq.s32.totalorder %s47, 0
      %p236 = por %p234, %p235
      %s238 = sadd.s32 %s237, 1
      %p241 = scmp.eq.s32.totalorder %s41, 1
      %p242 = scmp.ne.s32.totalorder %s237, %s239
      %p243 = scmp.eq.s32.totalorder %s41, 0
      %p244 = por %p242, %p243
      %p245 = scmp.ne.s32.totalorder %s237, %s239
      %p246 = scmp.eq.s32.totalorder %s46, 1
      %p247 = por %p245, %p246
      %p248 = scmp.ne.s32.totalorder %s239, %s240
      %p249 = scmp.eq.s32.totalorder %s46, 0
      %p250 = por %p248, %p249
      %p251 = scmp.ne.s32.totalorder %s239, %s240
      %p252 = scmp.eq.s32.totalorder %s47, 1
      %p253 = por %p251, %p252
      %p255 = scmp.ne.s32.totalorder %s240, %s254
      %p256 = scmp.eq.s32.totalorder %s47, 0
      %p257 = por %p255, %p256
      %s259 = sadd.s32 %s258, 1
      %p262 = scmp.eq.s32.totalorder %s41, 1
      %p263 = scmp.ne.s32.totalorder %s258, %s260
      %p264 = scmp.eq.s32.totalorder %s41, 0
      %p265 = por %p263, %p264
      %p266 = scmp.ne.s32.totalorder %s258, %s260
      %p267 = scmp.eq.s32.totalorder %s46, 1
      %p268 = por %p266, %p267
      %p269 = scmp.ne.s32.totalorder %s260, %s261
      %p270 = scmp.eq.s32.totalorder %s46, 0
      %p271 = por %p269, %p270
      %p272 = scmp.ne.s32.totalorder %s260, %s261
      %p273 = scmp.eq.s32.totalorder %s47, 1
      %p274 = por %p272, %p273
      %p276 = scmp.ne.s32.totalorder %s261, %s275
      %p277 = scmp.eq.s32.totalorder %s47, 0
      %p278 = por %p276, %p277
      %s280 = sadd.s32 %s279, 1
      %p283 = scmp.eq.s32.totalorder %s41, 1
      %p284 = scmp.ne.s32.totalorder %s279, %s281
      %p285 = scmp.eq.s32.totalorder %s41, 0
      %p286 = por %p284, %p285
      %p287 = scmp.ne.s32.totalorder %s279, %s281
      %p288 = scmp.eq.s32.totalorder %s46, 1
      %p289 = por %p287, %p288
      %p290 = scmp.ne.s32.totalorder %s281, %s282
      %p291 = scmp.eq.s32.totalorder %s46, 0
      %p292 = por %p290, %p291
      %p293 = scmp.ne.s32.totalorder %s281, %s282
      %p294 = scmp.eq.s32.totalorder %s47, 1
      %p295 = por %p293, %p294
      %p297 = scmp.ne.s32.totalorder %s282, %s296
      %p298 = scmp.eq.s32.totalorder %s47, 0
      %p299 = por %p297, %p298
      %s301 = sadd.s32 %s300, 1
      %p304 = scmp.eq.s32.totalorder %s41, 1
      %p305 = scmp.ne.s32.totalorder %s300, %s302
      %p306 = scmp.eq.s32.totalorder %s41, 0
      %p307 = por %p305, %p306
      %p308 = scmp.ne.s32.totalorder %s300, %s302
      %p309 = scmp.eq.s32.totalorder %s46, 1
      %p310 = por %p308, %p309
      %p311 = scmp.ne.s32.totalorder %s302, %s303
      %p312 = scmp.eq.s32.totalorder %s46, 0
      %p313 = por %p311, %p312
      %p314 = scmp.ne.s32.totalorder %s302, %s303
      %p315 = scmp.eq.s32.totalorder %s47, 1
      %p316 = por %p314, %p315
      %p318 = scmp.ne.s32.totalorder %s303, %s317
      %p319 = scmp.eq.s32.totalorder %s47, 0
      %p320 = por %p318, %p319
      %s322 = sadd.s32 %s321, 1
      %p325 = scmp.eq.s32.totalorder %s41, 1
      %p326 = scmp.ne.s32.totalorder %s321, %s323
      %p327 = scmp.eq.s32.totalorder %s41, 0
      %p328 = por %p326, %p327
      %p329 = scmp.ne.s32.totalorder %s321, %s323
      %p330 = scmp.eq.s32.totalorder %s46, 1
      %p331 = por %p329, %p330
      %p332 = scmp.ne.s32.totalorder %s323, %s324
      %p333 = scmp.eq.s32.totalorder %s46, 0
      %p334 = por %p332, %p333
      %p335 = scmp.ne.s32.totalorder %s323, %s324
      %p336 = scmp.eq.s32.totalorder %s47, 1
      %p337 = por %p335, %p336
      %p339 = scmp.ne.s32.totalorder %s324, %s338
      %p340 = scmp.eq.s32.totalorder %s47, 0
      %p341 = por %p339, %p340
      %s343 = sadd.s32 %s342, 1
      %p346 = scmp.eq.s32.totalorder %s41, 1
      %p347 = scmp.ne.s32.totalorder %s342, %s344
      %p348 = scmp.eq.s32.totalorder %s41, 0
      %p349 = por %p347, %p348
      %p350 = scmp.ne.s32.totalorder %s342, %s344
      %p351 = scmp.eq.s32.totalorder %s46, 1
      %p352 = por %p350, %p351
      %p353 = scmp.ne.s32.totalorder %s344, %s345
      %p354 = scmp.eq.s32.totalorder %s46, 0
      %p355 = por %p353, %p354
      %p356 = scmp.ne.s32.totalorder %s344, %s345
      %p357 = scmp.eq.s32.totalorder %s47, 1
      %p358 = por %p356, %p357
      %p360 = scmp.ne.s32.totalorder %s345, %s359
      %p361 = scmp.eq.s32.totalorder %s47, 0
      %p362 = por %p360, %p361
      %s364 = sadd.s32 %s363, 1
      %p367 = scmp.eq.s32.totalorder %s41, 1
      %p368 = scmp.ne.s32.totalorder %s363, %s365
      %p369 = scmp.eq.s32.totalorder %s41, 0
      %p370 = por %p368, %p369
      %p371 = scmp.ne.s32.totalorder %s363, %s365
      %p372 = scmp.eq.s32.totalorder %s46, 1
      %p373 = por %p371, %p372
      %p374 = scmp.ne.s32.totalorder %s365, %s366
      %p375 = scmp.eq.s32.totalorder %s46, 0
      %p376 = por %p374, %p375
      %p377 = scmp.ne.s32.totalorder %s365, %s366
      %p378 = scmp.eq.s32.totalorder %s47, 1
      %p379 = por %p377, %p378
      %p381 = scmp.ne.s32.totalorder %s366, %s380
      %p382 = scmp.eq.s32.totalorder %s47, 0
      %p383 = por %p381, %p382
      %s385 = sadd.s32 %s384, 1
      %p388 = scmp.eq.s32.totalorder %s41, 1
      %p389 = scmp.ne.s32.totalorder %s384, %s386
      %p390 = scmp.eq.s32.totalorder %s41, 0
      %p391 = por %p389, %p390
      %p392 = scmp.ne.s32.totalorder %s384, %s386
      %p393 = scmp.eq.s32.totalorder %s46, 1
      %p394 = por %p392, %p393
      %p395 = scmp.ne.s32.totalorder %s386, %s387
      %p396 = scmp.eq.s32.totalorder %s46, 0
      %p397 = por %p395, %p396
      %p398 = scmp.ne.s32.totalorder %s386, %s387
      %p399 = scmp.eq.s32.totalorder %s47, 1
      %p400 = por %p398, %p399
      %p402 = scmp.ne.s32.totalorder %s387, %s401
      %p403 = scmp.eq.s32.totalorder %s47, 0
      %p404 = por %p402, %p403
      %s406 = sadd.s32 %s405, 1
      %p409 = scmp.eq.s32.totalorder %s41, 1
      %p410 = scmp.ne.s32.totalorder %s405, %s407
      %p411 = scmp.eq.s32.totalorder %s41, 0
      %p412 = por %p410, %p411
      %p413 = scmp.ne.s32.totalorder %s405, %s407
      %p414 = scmp.eq.s32.totalorder %s46, 1
      %p415 = por %p413, %p414
      %p416 = scmp.ne.s32.totalorder %s407, %s408
      %p417 = scmp.eq.s32.totalorder %s46, 0
      %p418 = por %p416, %p417
      %p419 = scmp.ne.s32.totalorder %s407, %s408
      %p420 = scmp.eq.s32.totalorder %s47, 1
      %p421 = por %p419, %p420
      %p423 = scmp.ne.s32.totalorder %s408, %s422
      %p424 = scmp.eq.s32.totalorder %s47, 0
      %p425 = por %p423, %p424
      %s427 = sadd.s32 %s426, 1
      %p430 = scmp.eq.s32.totalorder %s41, 1
      %p431 = scmp.ne.s32.totalorder %s426, %s428
      %p432 = scmp.eq.s32.totalorder %s41, 0
      %p433 = por %p431, %p432
      %p434 = scmp.ne.s32.totalorder %s426, %s428
      %p435 = scmp.eq.s32.totalorder %s46, 1
      %p436 = por %p434, %p435
      %p437 = scmp.ne.s32.totalorder %s428, %s429
      %p438 = scmp.eq.s32.totalorder %s46, 0
      %p439 = por %p437, %p438
      %p440 = scmp.ne.s32.totalorder %s428, %s429
      %p441 = scmp.eq.s32.totalorder %s47, 1
      %p442 = por %p440, %p441
      %p444 = scmp.ne.s32.totalorder %s429, %s443
      %p445 = scmp.eq.s32.totalorder %s47, 0
      %p446 = por %p444, %p445
      %s448 = sadd.s32 %s447, 1
      %p451 = scmp.eq.s32.totalorder %s41, 1
      %p452 = scmp.ne.s32.totalorder %s447, %s449
      %p453 = scmp.eq.s32.totalorder %s41, 0
      %p454 = por %p452, %p453
      %p455 = scmp.ne.s32.totalorder %s447, %s449
      %p456 = scmp.eq.s32.totalorder %s46, 1
      %p457 = por %p455, %p456
      %p458 = scmp.ne.s32.totalorder %s449, %s450
      %p459 = scmp.eq.s32.totalorder %s46, 0
      %p460 = por %p458, %p459
      %p461 = scmp.ne.s32.totalorder %s449, %s450
      %p462 = scmp.eq.s32.totalorder %s47, 1
      %p463 = por %p461, %p462
      %p465 = scmp.ne.s32.totalorder %s450, %s464
      %p466 = scmp.eq.s32.totalorder %s47, 0
      %p467 = por %p465, %p466
      %s469 = sadd.s32 %s468, 1
      %p472 = scmp.eq.s32.totalorder %s41, 1
      %p473 = scmp.ne.s32.totalorder %s468, %s470
      %p474 = scmp.eq.s32.totalorder %s41, 0
      %p475 = por %p473, %p474
      %p476 = scmp.ne.s32.totalorder %s468, %s470
      %p477 = scmp.eq.s32.totalorder %s46, 1
      %p478 = por %p476, %p477
      %p479 = scmp.ne.s32.totalorder %s470, %s471
      %p480 = scmp.eq.s32.totalorder %s46, 0
      %p481 = por %p479, %p480
      %p482 = scmp.ne.s32.totalorder %s470, %s471
      %p483 = scmp.eq.s32.totalorder %s47, 1
      %p484 = por %p482, %p483
      %p486 = scmp.ne.s32.totalorder %s471, %s485
      %p487 = scmp.eq.s32.totalorder %s47, 0
      %p488 = por %p486, %p487
      %s490 = sadd.s32 %s489, 1
      %p493 = scmp.eq.s32.totalorder %s41, 1
      %p494 = scmp.ne.s32.totalorder %s489, %s491
      %p495 = scmp.eq.s32.totalorder %s41, 0
      %p496 = por %p494, %p495
      %p497 = scmp.ne.s32.totalorder %s489, %s491
      %p498 = scmp.eq.s32.totalorder %s46, 1
      %p499 = por %p497, %p498
      %p500 = scmp.ne.s32.totalorder %s491, %s492
      %p501 = scmp.eq.s32.totalorder %s46, 0
      %p502 = por %p500, %p501
      %p503 = scmp.ne.s32.totalorder %s491, %s492
      %p504 = scmp.eq.s32.totalorder %s47, 1
      %p505 = por %p503, %p504
      %p507 = scmp.ne.s32.totalorder %s492, %s506
      %p508 = scmp.eq.s32.totalorder %s47, 0
      %p509 = por %p507, %p508
      %s511 = sadd.s32 %s510, 1
      %p514 = scmp.eq.s32.totalorder %s41, 1
      %p515 = scmp.ne.s32.totalorder %s510, %s512
      %p516 = scmp.eq.s32.totalorder %s41, 0
      %p517 = por %p515, %p516
      %p518 = scmp.ne.s32.totalorder %s510, %s512
      %p519 = scmp.eq.s32.totalorder %s46, 1
      %p520 = por %p518, %p519
      %p521 = scmp.ne.s32.totalorder %s512, %s513
      %p522 = scmp.eq.s32.totalorder %s46, 0
      %p523 = por %p521, %p522
      %p524 = scmp.ne.s32.totalorder %s512, %s513
      %p525 = scmp.eq.s32.totalorder %s47, 1
      %p526 = por %p524, %p525
      %p528 = scmp.ne.s32.totalorder %s513, %s527
      %p529 = scmp.eq.s32.totalorder %s47, 0
      %p530 = por %p528, %p529
      %s532 = sadd.s32 %s531, 1
      %p535 = scmp.eq.s32.totalorder %s41, 1
      %p536 = scmp.ne.s32.totalorder %s531, %s533
      %p537 = scmp.eq.s32.totalorder %s41, 0
      %p538 = por %p536, %p537
      %p539 = scmp.ne.s32.totalorder %s531, %s533
      %p540 = scmp.eq.s32.totalorder %s46, 1
      %p541 = por %p539, %p540
      %p542 = scmp.ne.s32.totalorder %s533, %s534
      %p543 = scmp.eq.s32.totalorder %s46, 0
      %p544 = por %p542, %p543
      %p545 = scmp.ne.s32.totalorder %s533, %s534
      %p546 = scmp.eq.s32.totalorder %s47, 1
      %p547 = por %p545, %p546
      %p549 = scmp.ne.s32.totalorder %s534, %s548
      %p550 = scmp.eq.s32.totalorder %s47, 0
      %p551 = por %p549, %p550
      %s553 = sadd.s32 %s552, 1
      %p556 = scmp.eq.s32.totalorder %s41, 1
      %p557 = scmp.ne.s32.totalorder %s552, %s554
      %p558 = scmp.eq.s32.totalorder %s41, 0
      %p559 = por %p557, %p558
      %p560 = scmp.ne.s32.totalorder %s552, %s554
      %p561 = scmp.eq.s32.totalorder %s46, 1
      %p562 = por %p560, %p561
      %p563 = scmp.ne.s32.totalorder %s554, %s555
      %p564 = scmp.eq.s32.totalorder %s46, 0
      %p565 = por %p563, %p564
      %p566 = scmp.ne.s32.totalorder %s554, %s555
      %p567 = scmp.eq.s32.totalorder %s47, 1
      %p568 = por %p566, %p567
      %p570 = scmp.ne.s32.totalorder %s555, %s569
      %p571 = scmp.eq.s32.totalorder %s47, 0
      %p572 = por %p570, %p571
      %s573 = ssub.s32 %s41, %s48
      %p574 = scmp.eq.s32.totalorder %s573, 0
      %s576 = sadd.s32 %s575, 1
      %s577 = scalar_select %p574, %s575, %s576
      %p580 = pneg %p574
      %p581 = scmp.eq.s32.totalorder %s41, 1
      %p582 = por %p580, %p581
      %p583 = scmp.ne.s32.totalorder %s575, %s578
      %p584 = scmp.eq.s32.totalorder %s41, 0
      %p585 = por %p583, %p584
      %p586 = scmp.ne.s32.totalorder %s575, %s578
      %p587 = scmp.eq.s32.totalorder %s46, 1
      %p588 = por %p586, %p587
      %p589 = scmp.ne.s32.totalorder %s578, %s579
      %p590 = scmp.eq.s32.totalorder %s46, 0
      %p591 = por %p589, %p590
      %p592 = scmp.ne.s32.totalorder %s578, %s579
      %p593 = scmp.eq.s32.totalorder %s47, 1
      %p594 = por %p592, %p593
      %p596 = scmp.ne.s32.totalorder %s579, %s595
      %p597 = scmp.eq.s32.totalorder %s47, 0
      %p598 = por %p596, %p597
      %s599 = ssub.s32 %s41, %s48
      %p600 = scmp.eq.s32.totalorder %s599, 0
      %s602 = sadd.s32 %s601, 1
      %s603 = scalar_select %p600, %s601, %s602
      %p606 = pneg %p600
      %p607 = scmp.eq.s32.totalorder %s41, 1
      %p608 = por %p606, %p607
      %p609 = scmp.ne.s32.totalorder %s601, %s604
      %p610 = scmp.eq.s32.totalorder %s41, 0
      %p611 = por %p609, %p610
      %p612 = scmp.ne.s32.totalorder %s601, %s604
      %p613 = scmp.eq.s32.totalorder %s46, 1
      %p614 = por %p612, %p613
      %p615 = scmp.ne.s32.totalorder %s604, %s605
      %p616 = scmp.eq.s32.totalorder %s46, 0
      %p617 = por %p615, %p616
      %p618 = scmp.ne.s32.totalorder %s604, %s605
      %p619 = scmp.eq.s32.totalorder %s47, 1
      %p620 = por %p618, %p619
      %p622 = scmp.ne.s32.totalorder %s605, %s621
      %p623 = scmp.eq.s32.totalorder %s47, 0
      %p624 = por %p622, %p623
      %s625 = ssub.s32 %s41, %s48
      %p626 = scmp.eq.s32.totalorder %s625, 0
      %s628 = sadd.s32 %s627, 1
      %s629 = scalar_select %p626, %s627, %s628
      %p632 = pneg %p626
      %p633 = scmp.eq.s32.totalorder %s41, 1
      %p634 = por %p632, %p633
      %p635 = scmp.ne.s32.totalorder %s627, %s630
      %p636 = scmp.eq.s32.totalorder %s41, 0
      %p637 = por %p635, %p636
      %p638 = scmp.ne.s32.totalorder %s627, %s630
      %p639 = scmp.eq.s32.totalorder %s46, 1
      %p640 = por %p638, %p639
      %p641 = scmp.ne.s32.totalorder %s630, %s631
      %p642 = scmp.eq.s32.totalorder %s46, 0
      %p643 = por %p641, %p642
      %p644 = scmp.ne.s32.totalorder %s630, %s631
      %p645 = scmp.eq.s32.totalorder %s47, 1
      %p646 = por %p644, %p645
      %p648 = scmp.ne.s32.totalorder %s631, %s647
      %p649 = scmp.eq.s32.totalorder %s47, 0
      %p650 = por %p648, %p649
      %s651 = ssub.s32 %s41, %s48
      %p652 = scmp.eq.s32.totalorder %s651, 0
      %s654 = sadd.s32 %s653, 1
      %s655 = scalar_select %p652, %s653, %s654
      %p658 = pneg %p652
      %p659 = scmp.eq.s32.totalorder %s41, 1
      %p660 = por %p658, %p659
      %p661 = scmp.ne.s32.totalorder %s653, %s656
      %p662 = scmp.eq.s32.totalorder %s41, 0
      %p663 = por %p661, %p662
      %p664 = scmp.ne.s32.totalorder %s653, %s656
      %p665 = scmp.eq.s32.totalorder %s46, 1
      %p666 = por %p664, %p665
      %p667 = scmp.ne.s32.totalorder %s656, %s657
      %p668 = scmp.eq.s32.totalorder %s46, 0
      %p669 = por %p667, %p668
      %p670 = scmp.ne.s32.totalorder %s656, %s657
      %p671 = scmp.eq.s32.totalorder %s47, 1
      %p672 = por %p670, %p671
      %p674 = scmp.ne.s32.totalorder %s657, %s673
      %p675 = scmp.eq.s32.totalorder %s47, 0
      %p676 = por %p674, %p675
      %s677 = ssub.s32 %s41, %s48
      %p678 = scmp.eq.s32.totalorder %s677, 0
      %s680 = sadd.s32 %s679, 1
      %s681 = scalar_select %p678, %s679, %s680
      %p684 = pneg %p678
      %p685 = scmp.eq.s32.totalorder %s41, 1
      %p686 = por %p684, %p685
      %p687 = scmp.ne.s32.totalorder %s679, %s682
      %p688 = scmp.eq.s32.totalorder %s41, 0
      %p689 = por %p687, %p688
      %p690 = scmp.ne.s32.totalorder %s679, %s682
      %p691 = scmp.eq.s32.totalorder %s46, 1
      %p692 = por %p690, %p691
      %p693 = scmp.ne.s32.totalorder %s682, %s683
      %p694 = scmp.eq.s32.totalorder %s46, 0
      %p695 = por %p693, %p694
      %p696 = scmp.ne.s32.totalorder %s682, %s683
      %p697 = scmp.eq.s32.totalorder %s47, 1
      %p698 = por %p696, %p697
      %p700 = scmp.ne.s32.totalorder %s683, %s699
      %p701 = scmp.eq.s32.totalorder %s47, 0
      %p702 = por %p700, %p701
      %p703 = scmp.le.s32.totalorder 1, %s41
      %p704 = scmp.lt.s32.totalorder %s41, 3
      %p705 = pnand %p703, %p704
      %p706 = pneg %p705
      // Predicated region
      $region9: #{fwd.1} parent=5 // pred_check
        _
      $region10: #{fwd.1} parent=5 // pred_check_branch
        %708 = sbr.rel (%p705) target = $region12
      $region11: #{fwd.1} parent=5 // pred_region
        %s709 = ssub.s32 %s41, 1
        // Predicated region
        $region13: #{fwd.1} parent=11 // pred_check
          %p710 = pneg %p166
        $region14: #{fwd.1} parent=11 // pred_check_branch
          %712 = sbr.rel (%p710) target = $region16
        $region15: #{fwd.1} parent=11 // pred_region
          _
        $region16: #{fwd.1} parent=11 // pred_fallthru
          _
        // Predicated region
        $region17: #{fwd.1} parent=11 // pred_check
          %p713 = pneg %p187
        $region18: #{fwd.1} parent=11 // pred_check_branch
          %715 = sbr.rel (%p713) target = $region20
        $region19: #{fwd.1} parent=11 // pred_region
          _
        $region20: #{fwd.1} parent=11 // pred_fallthru
          _
        // Predicated region
        $region21: #{fwd.1} parent=11 // pred_check
          %p716 = pneg %p208
        $region22: #{fwd.1} parent=11 // pred_check_branch
          %718 = sbr.rel (%p716) target = $region24
        $region23: #{fwd.1} parent=11 // pred_region
          _
        $region24: #{fwd.1} parent=11 // pred_fallthru
          _
        // Predicated region
        $region25: #{fwd.1} parent=11 // pred_check
          %p719 = pneg %p229
        $region26: #{fwd.1} parent=11 // pred_check_branch
          %721 = sbr.rel (%p719) target = $region28
        $region27: #{fwd.1} parent=11 // pred_region
          _
        $region28: #{fwd.1} parent=11 // pred_fallthru
          _
        // Predicated region
        $region29: #{fwd.1} parent=11 // pred_check
          %p722 = pneg %p250
        $region30: #{fwd.1} parent=11 // pred_check_branch
          %724 = sbr.rel (%p722) target = $region32
        $region31: #{fwd.1} parent=11 // pred_region
          _
        $region32: #{fwd.1} parent=11 // pred_fallthru
          _
        // Predicated region
        $region33: #{fwd.1} parent=11 // pred_check
          %p725 = pneg %p271
        $region34: #{fwd.1} parent=11 // pred_check_branch
          %727 = sbr.rel (%p725) target = $region36
        $region35: #{fwd.1} parent=11 // pred_region
          _
        $region36: #{fwd.1} parent=11 // pred_fallthru
          _
        // Predicated region
        $region37: #{fwd.1} parent=11 // pred_check
          %p728 = pneg %p292
        $region38: #{fwd.1} parent=11 // pred_check_branch
          %730 = sbr.rel (%p728) target = $region40
        $region39: #{fwd.1} parent=11 // pred_region
          _
        $region40: #{fwd.1} parent=11 // pred_fallthru
          _
        // Predicated region
        $region41: #{fwd.1} parent=11 // pred_check
          %p731 = pneg %p313
        $region42: #{fwd.1} parent=11 // pred_check_branch
          %733 = sbr.rel (%p731) target = $region44
        $region43: #{fwd.1} parent=11 // pred_region
          _
        $region44: #{fwd.1} parent=11 // pred_fallthru
          _
        // Predicated region
        $region45: #{fwd.1} parent=11 // pred_check
          %p734 = pneg %p334
        $region46: #{fwd.1} parent=11 // pred_check_branch
          %736 = sbr.rel (%p734) target = $region48
        $region47: #{fwd.1} parent=11 // pred_region
          _
        $region48: #{fwd.1} parent=11 // pred_fallthru
          _
        // Predicated region
        $region49: #{fwd.1} parent=11 // pred_check
          %p737 = pneg %p355
        $region50: #{fwd.1} parent=11 // pred_check_branch
          %739 = sbr.rel (%p737) target = $region52
        $region51: #{fwd.1} parent=11 // pred_region
          _
        $region52: #{fwd.1} parent=11 // pred_fallthru
          _
        // Predicated region
        $region53: #{fwd.1} parent=11 // pred_check
          %p740 = pneg %p376
        $region54: #{fwd.1} parent=11 // pred_check_branch
          %742 = sbr.rel (%p740) target = $region56
        $region55: #{fwd.1} parent=11 // pred_region
          _
        $region56: #{fwd.1} parent=11 // pred_fallthru
          _
        // Predicated region
        $region57: #{fwd.1} parent=11 // pred_check
          %p743 = pneg %p397
        $region58: #{fwd.1} parent=11 // pred_check_branch
          %745 = sbr.rel (%p743) target = $region60
        $region59: #{fwd.1} parent=11 // pred_region
          _
        $region60: #{fwd.1} parent=11 // pred_fallthru
          _
        // Predicated region
        $region61: #{fwd.1} parent=11 // pred_check
          %p746 = pneg %p418
        $region62: #{fwd.1} parent=11 // pred_check_branch
          %748 = sbr.rel (%p746) target = $region64
        $region63: #{fwd.1} parent=11 // pred_region
          _
        $region64: #{fwd.1} parent=11 // pred_fallthru
          _
        // Predicated region
        $region65: #{fwd.1} parent=11 // pred_check
          %p749 = pneg %p439
        $region66: #{fwd.1} parent=11 // pred_check_branch
          %751 = sbr.rel (%p749) target = $region68
        $region67: #{fwd.1} parent=11 // pred_region
          _
        $region68: #{fwd.1} parent=11 // pred_fallthru
          _
        // Predicated region
        $region69: #{fwd.1} parent=11 // pred_check
          %p752 = pneg %p460
        $region70: #{fwd.1} parent=11 // pred_check_branch
          %754 = sbr.rel (%p752) target = $region72
        $region71: #{fwd.1} parent=11 // pred_region
          _
        $region72: #{fwd.1} parent=11 // pred_fallthru
          _
        // Predicated region
        $region73: #{fwd.1} parent=11 // pred_check
          %p755 = pneg %p481
        $region74: #{fwd.1} parent=11 // pred_check_branch
          %757 = sbr.rel (%p755) target = $region76
        $region75: #{fwd.1} parent=11 // pred_region
          _
        $region76: #{fwd.1} parent=11 // pred_fallthru
          _
        // Predicated region
        $region77: #{fwd.1} parent=11 // pred_check
          %p758 = pneg %p502
        $region78: #{fwd.1} parent=11 // pred_check_branch
          %760 = sbr.rel (%p758) target = $region80
        $region79: #{fwd.1} parent=11 // pred_region
          _
        $region80: #{fwd.1} parent=11 // pred_fallthru
          _
        // Predicated region
        $region81: #{fwd.1} parent=11 // pred_check
          %p761 = pneg %p523
        $region82: #{fwd.1} parent=11 // pred_check_branch
          %763 = sbr.rel (%p761) target = $region84
        $region83: #{fwd.1} parent=11 // pred_region
          _
        $region84: #{fwd.1} parent=11 // pred_fallthru
          _
        // Predicated region
        $region85: #{fwd.1} parent=11 // pred_check
          %p764 = pneg %p544
        $region86: #{fwd.1} parent=11 // pred_check_branch
          %766 = sbr.rel (%p764) target = $region88
        $region87: #{fwd.1} parent=11 // pred_region
          _
        $region88: #{fwd.1} parent=11 // pred_fallthru
          _
        // Predicated region
        $region89: #{fwd.1} parent=11 // pred_check
          %p767 = pneg %p565
        $region90: #{fwd.1} parent=11 // pred_check_branch
          %769 = sbr.rel (%p767) target = $region92
        $region91: #{fwd.1} parent=11 // pred_region
          _
        $region92: #{fwd.1} parent=11 // pred_fallthru
          _
      $region12: #{fwd.1} parent=5 // pred_fallthru
        _
      %p770 = scmp.lt.s32.totalorder %s41, 2
      // Predicated region
      $region93: #{fwd.1} parent=5 // pred_check
        %p771 = pneg %p770
      $region94: #{fwd.1} parent=5 // pred_check_branch
        %773 = sbr.rel (%p771) target = $region96
      $region95: #{fwd.1} parent=5 // pred_region
        // Predicated region
        $region97: #{fwd.1} parent=95 // pred_check
          %p774 = pneg %p61
        $region98: #{fwd.1} parent=95 // pred_check_branch
          %776 = sbr.rel (%p774) target = $region100
        $region99: #{fwd.1} parent=95 // pred_region
          %p777 = scmp.lt.s32.totalorder %s41, 1
          %s778 = scalar_select %p777, %s41, 1
          %s779 = smul.addr %s778, 2
          %s780 = smul.addr %s779, 8
          %s781 = scalar_lea.vmem %s0, %s780
        $region100: #{fwd.1} parent=95 // pred_fallthru
          _
        // Predicated region
        $region101: #{fwd.1} parent=95 // pred_check
          %p782 = pneg %p87
        $region102: #{fwd.1} parent=95 // pred_check_branch
          %784 = sbr.rel (%p782) target = $region104
        $region103: #{fwd.1} parent=95 // pred_region
          %p785 = scmp.lt.s32.totalorder %s41, 1
          %s786 = scalar_select %p785, %s41, 1
          %s787 = scalar_lea.vmem %s1, %s786
        $region104: #{fwd.1} parent=95 // pred_fallthru
          _
        // Predicated region
        $region105: #{fwd.1} parent=95 // pred_check
          %p788 = pneg %p113
        $region106: #{fwd.1} parent=95 // pred_check_branch
          %790 = sbr.rel (%p788) target = $region108
        $region107: #{fwd.1} parent=95 // pred_region
          %p791 = scmp.lt.s32.totalorder %s41, 1
          %s792 = scalar_select %p791, %s41, 1
          %s793 = smul.addr %s792, 8
          %s794 = scalar_lea.vmem %s2, %s793
        $region108: #{fwd.1} parent=95 // pred_fallthru
          _
        // Predicated region
        $region109: #{fwd.1} parent=95 // pred_check
          %p795 = pneg %p139
        $region110: #{fwd.1} parent=95 // pred_check_branch
          %797 = sbr.rel (%p795) target = $region112
        $region111: #{fwd.1} parent=95 // pred_region
          %p798 = scmp.lt.s32.totalorder %s41, 1
          %s799 = scalar_select %p798, %s41, 1
          %s800 = scalar_lea.vmem %s3, %s799
        $region112: #{fwd.1} parent=95 // pred_fallthru
          _
      $region96: #{fwd.1} parent=5 // pred_fallthru
        _
      %p801 = scmp.le.s32.totalorder 1, %s41
      %p802 = scmp.lt.s32.totalorder %s41, 3
      %p803 = pnand %p801, %p802
      %p804 = pneg %p803
      // Predicated region
      $region113: #{fwd.1} parent=5 // pred_check
        _
      $region114: #{fwd.1} parent=5 // pred_check_branch
        %806 = sbr.rel (%p803) target = $region116
      $region115: #{fwd.1} parent=5 // pred_region
        %s807 = ssub.s32 %s41, 1
        %p808 = scmp.lt.s32.totalorder %s46, 1
        %s809 = scalar_select %p808, %s46, 1
        %s810 = smul.addr %s809, 2
        %s811 = smul.addr %s810, 8
        %s812 = scalar_lea.vmem %s0, %s811
        %p813 = pneg %p67
        %p814 = pneg %p64
        %p815 = scmp.lt.s32.totalorder %s46, 1
        %s816 = scalar_select %p815, %s46, 1
        %s817 = scalar_lea.vmem %s1, %s816
        %p818 = pneg %p93
        %p819 = pneg %p90
        %p820 = scmp.lt.s32.totalorder %s46, 1
        %s821 = scalar_select %p820, %s46, 1
        %s822 = smul.addr %s821, 8
        %s823 = scalar_lea.vmem %s2, %s822
        %p824 = pneg %p119
        %p825 = pneg %p116
        %p826 = scmp.lt.s32.totalorder %s46, 1
        %s827 = scalar_select %p826, %s46, 1
        %s828 = scalar_lea.vmem %s3, %s827
        %p829 = pneg %p145
        %p830 = pneg %p142
        %p831 = pneg %p166
        %p832 = pneg %p163
        %p833 = pneg %p187
        %p834 = pneg %p184
        %p835 = pneg %p208
        %p836 = pneg %p205
        %p837 = pneg %p229
        %p838 = pneg %p226
        %p839 = pneg %p250
        %p840 = pneg %p247
        %p841 = pneg %p271
        %p842 = pneg %p268
        %p843 = pneg %p292
        %p844 = pneg %p289
        %p845 = pneg %p313
        %p846 = pneg %p310
        %p847 = pneg %p334
        %p848 = pneg %p331
        %p849 = pneg %p355
        %p850 = pneg %p352
        %p851 = pneg %p376
        %p852 = pneg %p373
        %p853 = pneg %p397
        %p854 = pneg %p394
        %p855 = pneg %p418
        %p856 = pneg %p415
        %p857 = pneg %p439
        %p858 = pneg %p436
        %p859 = pneg %p460
        %p860 = pneg %p457
        %p861 = pneg %p481
        %p862 = pneg %p478
        %p863 = pneg %p502
        %p864 = pneg %p499
        %p865 = pneg %p523
        %p866 = pneg %p520
        %p867 = pneg %p544
        %p868 = pneg %p541
        %p869 = pneg %p565
        %p870 = pneg %p562
        %p871 = pneg %p591
        %p872 = pneg %p588
        %s873 = sand.u32 %s578, 1
        %s874 = scalar_lea.sflag [#allocation3], %s873
        %s875 = sand.u32 %s578, 1
        %s876 = smul.addr %s875, 16
        %s877 = scalar_lea.vmem [#allocation2], %s876
        %p878 = pneg %p617
        %p879 = pneg %p614
        %s880 = sand.u32 %s46, 1
        %s881 = scalar_lea.sflag [#allocation5], %s880
        %s882 = sand.u32 %s604, 1
        %s883 = scalar_lea.vmem [#allocation4], %s882
        %p884 = pneg %p643
        %p885 = pneg %p640
        %p886 = scmp.lt.s32.totalorder %s46, 1
        %s887 = scalar_select %p886, %s46, 1
        %s888 = smul.addr %s887, 8
        %s889 = scalar_lea.vmem %s26, %s888
        %p890 = pneg %p669
        %p891 = pneg %p666
        %s892 = sand.u32 %s46, 1
        %s893 = scalar_lea.sflag [#allocation5], %s892
        %s894 = sand.u32 %s656, 1
        %s895 = scalar_lea.vmem [#allocation6], %s894
        %p896 = pneg %p695
        %p897 = pneg %p692
        %p898 = scmp.lt.s32.totalorder %s46, 1
        %s899 = scalar_select %p898, %s46, 1
        %s900 = smul.addr %s899, 8
        %s901 = scalar_lea.vmem %s28, %s900
        %p902 = scmp.lt.s32.totalorder %s46, 1
        %s903 = scalar_select %p902, %s46, 1
        %s904 = smul.addr %s903, 2
        %s905 = smul.addr %s904, 8
        %s906 = scalar_lea.vmem %s0, %s905
        %p907 = scmp.lt.s32.totalorder %s46, 1
        %s908 = scalar_select %p907, %s46, 1
        %s909 = scalar_lea.vmem %s1, %s908
        %p910 = scmp.lt.s32.totalorder %s46, 1
        %s911 = scalar_select %p910, %s46, 1
        %s912 = smul.addr %s911, 8
        %s913 = scalar_lea.vmem %s2, %s912
        %p914 = scmp.lt.s32.totalorder %s46, 1
        %s915 = scalar_select %p914, %s46, 1
        %s916 = scalar_lea.vmem %s3, %s915
        %p917 = scmp.lt.s32.totalorder %s46, 1
        %s918 = scalar_select %p917, %s46, 1
        %s919 = smul.addr %s918, 8
        %s920 = scalar_lea.vmem %s26, %s919
        %p921 = scmp.lt.s32.totalorder %s46, 1
        %s922 = scalar_select %p921, %s46, 1
        %s923 = smul.addr %s922, 8
        %s924 = scalar_lea.vmem %s28, %s923
        %v926 = vld [vmem:[%s909] sm:$0x1]
        %v927 = vld [vmem:[%s906] sm:$0xff]
        %v928 = vld [vmem:[%s906 + $0x8] sm:$0xff]
        %v929 = vld [vmem:[%s4] sm:$0x1]
        %v930 = vld [vmem:[%s5] sm:$0x1]
        %vm931 = vcmask 261120
        %v932 = vsel %vm931, %v927, 0.0
        %933 = vadd.xlane.f32.xlu0 %v932
        %v934 = vpop.xlane.xlu0 %933
        %v935 = vsel %vm931, %v928, 0.0
        %936 = vadd.xlane.f32.xlu0 %v935
        %v937 = vpop.xlane.xlu0 %936
        %v938 = vrcp.pop 32.0
        %v939 = vmul.f32 %v934, %v938
        %v940 = vmul.f32 %v937, %v938
        %v941 = vsub.f32 %v927, %v939
        %v942 = vsub.f32 %v928, %v940
        %v943 = vmul.f32 %v941, %v941
        %v944 = vmul.f32 %v942, %v942
        %v945 = vsel %vm931, %v943, 0.0
        %946 = vadd.xlane.f32.xlu0 %v945
        %v947 = vpop.xlane.xlu0 %946
        %v948 = vsel %vm931, %v944, 0.0
        %949 = vadd.xlane.f32.xlu0 %v948
        %v950 = vpop.xlane.xlu0 %949
        %v951 = vmul.f32 %v947, %v938
        %v952 = vmul.f32 %v950, %v938
        %v953 = vadd.f32 %v951, 1e-12
        %v954 = vadd.f32 %v952, 1e-12
        %v955 = vrsqrt.pop %v953
        %v956 = vrsqrt.pop %v954
        %v957 = vmul.f32 %v941, %v955
        %v958 = vmul.f32 %v942, %v956
        %v960 = vlaneseq
        %v961 = vshrl.u32 %v960, 7
        %v962 = vsub.s32 0, %v961
        %v963 = vrot.slane %v929, %v962
        %v965 = vmul.f32 %v957, %v963
        %v966 = vmul.f32 %v958, %v963
        %v968 = vlaneseq
        %v969 = vshrl.u32 %v968, 7
        %v970 = vsub.s32 0, %v969
        %v971 = vrot.slane %v930, %v970
        %v973 = vadd.f32 %v965, %v971
        %v974 = vadd.f32 %v966, %v971
        %v975 = vld [vmem:[%s6] sm:$0xf]
        %v976 = vld [vmem:[%s6 + $0x4] sm:$0xf]
        %v977 = vld [vmem:[%s6 + $0x8] sm:$0xf]
        %v978 = vld [vmem:[%s6 + $0xc] sm:$0xf]
        %v979 = vld [vmem:[%s7] sm:$0x1]
        %v980 = vpack.c.bf16 %v974, %v973
        %v982 = vlaneseq
        %v983 = vshrl.u32 %v982, 7
        %v984 = vsub.s32 0, %v983
        %v985 = vrot.slane %v979, %v984
        %v991 = vunpack.c.l.b16 %v975
        %v992 = vunpack.c.l.b16 %v976
        %v993 = vunpack.c.l.b16 %v977
        %v994 = vunpack.c.l.b16 %v978
        %v995 = vpack.c.b16 %v992, %v991
        %v996 = vpack.c.b16 %v994, %v993
        %v1000 = vsel %vm931, %v980, 0
        %1002 = vmatprep.subr.bf16.mxu0 0
        %1003 = vmatpush1.bf16.msra.mxu0 %v995
        %1004 = vmatprep.subr.bf16.mxu0 0
        %1005 = vmatpush1.bf16.msra.mxu0 %v996
        %1006 = vmatprep.subr.bf16.mxu0 0
        %1007 = vmatpush1.bf16.msra.mxu0 0
        %1008 = vmatprep.subr.bf16.mxu0 0
        %1009 = vmatpush1.bf16.msra.mxu0 0
        %1010 = vmatprep.subr.bf16.mxu0 0
        %1011 = vmatpush1.bf16.msra.mxu0 0
        %1012 = vmatprep.subr.bf16.mxu0 0
        %1013 = vmatpush1.bf16.msra.mxu0 0
        %1014 = vmatprep.subr.bf16.mxu0 0
        %1015 = vmatpush1.bf16.msra.mxu0 0
        %1016 = vmatprep.subr.bf16.mxu0 0
        %1017 = vmatpush1.bf16.msra.mxu0 0
        %1018 = vmatprep.subr.bf16.mxu0 0
        %1019 = vmatpush1.bf16.msra.mxu0 0
        %1020 = vmatprep.subr.bf16.mxu0 0
        %1021 = vmatpush1.bf16.msra.mxu0 0
        %1022 = vmatprep.subr.bf16.mxu0 0
        %1023 = vmatpush1.bf16.msra.mxu0 0
        %1024 = vmatprep.subr.bf16.mxu0 0
        %1025 = vmatpush1.bf16.msra.mxu0 0
        %1026 = vmatprep.subr.bf16.mxu0 0
        %1027 = vmatpush1.bf16.msra.mxu0 0
        %1028 = vmatprep.subr.bf16.mxu0 0
        %1029 = vmatpush1.bf16.msra.mxu0 0
        %1030 = vmatprep.subr.bf16.mxu0 0
        %1031 = vmatpush1.bf16.msra.mxu0 0
        %1032 = vmatprep.subr.bf16.mxu0 0
        %1033 = vmatpush1.bf16.msra.mxu0 0
        %1034 = vmatprep.mubr.bf16.mxu0 0
        %1035 = vmatmul.mubr.bf16.gmra.mrb[0].mxu0 %v1000
        %v1036 = vpop.f32.mrb[0].mxu0
        %v1037 = vadd.f32 %v985, %v1036
        %v1038 = vpop.f32.mrb[0].mxu0
        %v1039 = vpop.f32.mrb[0].mxu0
        %v1040 = vadd.f32 %v985, %v1039
        %v1041 = vpop.f32.mrb[0].mxu0
        %1042 = vdwg.mxu0
        %v1043 = vpack.c.bf16 %v1040, %v1037
        %1045 = vrot.lane.b32.xlu0 %v1043, 96
        %v1046 = vpop.permute.xlu0 %1045
        %vm1047 = vcmask 64512
        %v1049 = vsel %vm1047, %v1043, 0
        %v1052 = vsel %vm1047, %v1046, 0
        %1054 = vmatprep.subr.bf16.mxu0 0
        %1055 = vmatpush1.bf16.xpose.msra.mxu0 %v1052
        %1056 = vmatprep.subr.bf16.mxu0 0
        %1057 = vmatpush1.bf16.xpose.msra.mxu0 0
        %1058 = vmatprep.subr.bf16.mxu0 0
        %1059 = vmatpush1.bf16.xpose.msra.mxu0 0
        %1060 = vmatprep.subr.bf16.mxu0 0
        %1061 = vmatpush1.bf16.xpose.msra.mxu0 0
        %1062 = vmatprep.subr.bf16.mxu0 0
        %1063 = vmatpush1.bf16.xpose.msra.mxu0 0
        %1064 = vmatprep.subr.bf16.mxu0 0
        %1065 = vmatpush1.bf16.xpose.msra.mxu0 0
        %1066 = vmatprep.subr.bf16.mxu0 0
        %1067 = vmatpush1.bf16.xpose.msra.mxu0 0
        %1068 = vmatprep.subr.bf16.mxu0 0
        %1069 = vmatpush1.bf16.xpose.msra.mxu0 0
        %1070 = vmatprep.subr.bf16.mxu0 0
        %1071 = vmatpush1.bf16.xpose.msra.mxu0 0
        %1072 = vmatprep.subr.bf16.mxu0 0
        %1073 = vmatpush1.bf16.xpose.msra.mxu0 0
        %1074 = vmatprep.subr.bf16.mxu0 0
        %1075 = vmatpush1.bf16.xpose.msra.mxu0 0
        %1076 = vmatprep.subr.bf16.mxu0 0
        %1077 = vmatpush1.bf16.xpose.msra.mxu0 0
        %1078 = vmatprep.subr.bf16.mxu0 0
        %1079 = vmatpush1.bf16.xpose.msra.mxu0 0
        %1080 = vmatprep.subr.bf16.mxu0 0
        %1081 = vmatpush1.bf16.xpose.msra.mxu0 0
        %1082 = vmatprep.subr.bf16.mxu0 0
        %1083 = vmatpush1.bf16.xpose.msra.mxu0 0
        %1084 = vmatprep.subr.bf16.mxu0 0
        %1085 = vmatpush1.bf16.xpose.msra.mxu0 0
        %1086 = vmatprep.mubr.bf16.mxu0 0
        %1087 = vmatmul.mubr.bf16.gmra.mrb[0].mxu0 %v1049
        %v1088 = vpop.f32.mrb[0].mxu0
        %v1089 = vadd.f32 0.0, %v1088
        %v1090 = vpop.f32.mrb[0].mxu0
        %v1091 = vpop.f32.mrb[0].mxu0
        %v1092 = vadd.f32 0.0, %v1091
        %v1093 = vpop.f32.mrb[0].mxu0
        %1094 = vdwg.mxu0
        %v1095 = vmul.f32 %v1089, 0.35355338
        %v1096 = vmul.f32 %v1092, 0.35355338
        %v1098 = vlaneseq
        %v1099 = vshrl.u32 %v1098, 7
        %v1100 = vsub.s32 0, %v1099
        %v1101 = vrot.slane %v926, %v1100
        %v1103 = vadd.f32 %v1095, %v1101
        %v1104 = vadd.f32 %v1096, %v1101
        %vm1105 = vcmask 130048
        %v1106 = vsel %vm1105, %v1103, -inf
        %1107 = vmax.xlane.f32.xlu0 %v1106
        %v1108 = vpop.xlane.xlu0 %1107
        %v1109 = vsel %vm1105, %v1104, -inf
        %1110 = vmax.xlane.f32.xlu0 %v1109
        %v1111 = vpop.xlane.xlu0 %1110
        %v1112 = vsub.f32 %v1103, %v1108
        %v1113 = vsub.f32 %v1104, %v1111
        %v1114 = vmul.f32 %v1112, 1.442695
        %v1115 = vpow.pop %v1114
        %v1116 = vmul.f32 %v1113, 1.442695
        %v1117 = vpow.pop %v1116
        %v1118 = vsel %vm1105, %v1115, 0.0
        %1119 = vadd.xlane.f32.xlu0 %v1118
        %v1120 = vpop.xlane.xlu0 %1119
        %v1121 = vsel %vm1105, %v1117, 0.0
        %1122 = vadd.xlane.f32.xlu0 %v1121
        %v1123 = vpop.xlane.xlu0 %1122
        %v1124 = vrcp.pop %v1120
        %v1125 = vrcp.pop %v1123
        %v1126 = vmul.f32 %v1115, %v1124
        %v1127 = vmul.f32 %v1117, %v1125
        %v1128 = vpack.c.bf16 %v1127, %v1126
        %1129 = vrot.lane.b32.xlu0 %v1043, 64
        %v1130 = vpop.permute.xlu0 %1129
        %v1133 = vsel %vm1105, %v1128, 0
        %1135 = vmatprep.subr.bf16.mxu0 0
        %1136 = vmatpush1.bf16.msra.mxu0 %v1130
        %1137 = vmatprep.subr.bf16.mxu0 0
        %1138 = vmatpush1.bf16.msra.mxu0 0
        %1139 = vmatprep.subr.bf16.mxu0 0
        %1140 = vmatpush1.bf16.msra.mxu0 0
        %1141 = vmatprep.subr.bf16.mxu0 0
        %1142 = vmatpush1.bf16.msra.mxu0 0
        %1143 = vmatprep.subr.bf16.mxu0 0
        %1144 = vmatpush1.bf16.msra.mxu0 0
        %1145 = vmatprep.subr.bf16.mxu0 0
        %1146 = vmatpush1.bf16.msra.mxu0 0
        %1147 = vmatprep.subr.bf16.mxu0 0
        %1148 = vmatpush1.bf16.msra.mxu0 0
        %1149 = vmatprep.subr.bf16.mxu0 0
        %1150 = vmatpush1.bf16.msra.mxu0 0
        %1151 = vmatprep.subr.bf16.mxu0 0
        %1152 = vmatpush1.bf16.msra.mxu0 0
        %1153 = vmatprep.subr.bf16.mxu0 0
        %1154 = vmatpush1.bf16.msra.mxu0 0
        %1155 = vmatprep.subr.bf16.mxu0 0
        %1156 = vmatpush1.bf16.msra.mxu0 0
        %1157 = vmatprep.subr.bf16.mxu0 0
        %1158 = vmatpush1.bf16.msra.mxu0 0
        %1159 = vmatprep.subr.bf16.mxu0 0
        %1160 = vmatpush1.bf16.msra.mxu0 0
        %1161 = vmatprep.subr.bf16.mxu0 0
        %1162 = vmatpush1.bf16.msra.mxu0 0
        %1163 = vmatprep.subr.bf16.mxu0 0
        %1164 = vmatpush1.bf16.msra.mxu0 0
        %1165 = vmatprep.subr.bf16.mxu0 0
        %1166 = vmatpush1.bf16.msra.mxu0 0
        %1167 = vmatprep.mubr.bf16.mxu0 0
        %1168 = vmatmul.mubr.bf16.gmra.mrb[0].mxu0 %v1133
        %v1169 = vpop.f32.mrb[0].mxu0
        %v1170 = vadd.f32 0.0, %v1169
        %v1171 = vpop.f32.mrb[0].mxu0
        %v1172 = vpop.f32.mrb[0].mxu0
        %v1173 = vadd.f32 0.0, %v1172
        %v1174 = vpop.f32.mrb[0].mxu0
        %1175 = vdwg.mxu0
        %1176 = vrot.lane.b32.xlu0 %v1043, 120
        %v1177 = vpop.permute.xlu0 %1176
        %1178 = vrot.lane.b32.xlu0 %v1043, 88
        %v1179 = vpop.permute.xlu0 %1178
        %v1181 = vsel %vm1047, %v1177, 0
        %v1184 = vsel %vm1047, %v1179, 0
        %1186 = vmatprep.subr.bf16.mxu0 0
        %1187 = vmatpush1.bf16.xpose.msra.mxu0 %v1184
        %1188 = vmatprep.subr.bf16.mxu0 0
        %1189 = vmatpush1.bf16.xpose.msra.mxu0 0
        %1190 = vmatprep.subr.bf16.mxu0 0
        %1191 = vmatpush1.bf16.xpose.msra.mxu0 0
        %1192 = vmatprep.subr.bf16.mxu0 0
        %1193 = vmatpush1.bf16.xpose.msra.mxu0 0
        %1194 = vmatprep.subr.bf16.mxu0 0
        %1195 = vmatpush1.bf16.xpose.msra.mxu0 0
        %1196 = vmatprep.subr.bf16.mxu0 0
        %1197 = vmatpush1.bf16.xpose.msra.mxu0 0
        %1198 = vmatprep.subr.bf16.mxu0 0
        %1199 = vmatpush1.bf16.xpose.msra.mxu0 0
        %1200 = vmatprep.subr.bf16.mxu0 0
        %1201 = vmatpush1.bf16.xpose.msra.mxu0 0
        %1202 = vmatprep.subr.bf16.mxu0 0
        %1203 = vmatpush1.bf16.xpose.msra.mxu0 0
        %1204 = vmatprep.subr.bf16.mxu0 0
        %1205 = vmatpush1.bf16.xpose.msra.mxu0 0
        %1206 = vmatprep.subr.bf16.mxu0 0
        %1207 = vmatpush1.bf16.xpose.msra.mxu0 0
        %1208 = vmatprep.subr.bf16.mxu0 0
        %1209 = vmatpush1.bf16.xpose.msra.mxu0 0
        %1210 = vmatprep.subr.bf16.mxu0 0
        %1211 = vmatpush1.bf16.xpose.msra.mxu0 0
        %1212 = vmatprep.subr.bf16.mxu0 0
        %1213 = vmatpush1.bf16.xpose.msra.mxu0 0
        %1214 = vmatprep.subr.bf16.mxu0 0
        %1215 = vmatpush1.bf16.xpose.msra.mxu0 0
        %1216 = vmatprep.subr.bf16.mxu0 0
        %1217 = vmatpush1.bf16.xpose.msra.mxu0 0
        %1218 = vmatprep.mubr.bf16.mxu0 0
        %1219 = vmatmul.mubr.bf16.gmra.mrb[0].mxu0 %v1181
        %v1220 = vpop.f32.mrb[0].mxu0
        %v1221 = vadd.f32 0.0, %v1220
        %v1222 = vpop.f32.mrb[0].mxu0
        %v1223 = vpop.f32.mrb[0].mxu0
        %v1224 = vadd.f32 0.0, %v1223
        %v1225 = vpop.f32.mrb[0].mxu0
        %1226 = vdwg.mxu0
        %v1227 = vmul.f32 %v1221, 0.35355338
        %v1228 = vmul.f32 %v1224, 0.35355338
        %v1229 = vadd.f32 %v1227, %v1101
        %v1230 = vadd.f32 %v1228, %v1101
        %v1231 = vsel %vm1105, %v1229, -inf
        %1232 = vmax.xlane.f32.xlu0 %v1231
        %v1233 = vpop.xlane.xlu0 %1232
        %v1234 = vsel %vm1105, %v1230, -inf
        %1235 = vmax.xlane.f32.xlu0 %v1234
        %v1236 = vpop.xlane.xlu0 %1235
        %v1237 = vsub.f32 %v1229, %v1233
        %v1238 = vsub.f32 %v1230, %v1236
        %v1239 = vmul.f32 %v1237, 1.442695
        %v1240 = vpow.pop %v1239
        %v1241 = vmul.f32 %v1238, 1.442695
        %v1242 = vpow.pop %v1241
        %v1243 = vsel %vm1105, %v1240, 0.0
        %1244 = vadd.xlane.f32.xlu0 %v1243
        %v1245 = vpop.xlane.xlu0 %1244
        %v1246 = vsel %vm1105, %v1242, 0.0
        %1247 = vadd.xlane.f32.xlu0 %v1246
        %v1248 = vpop.xlane.xlu0 %1247
        %v1249 = vrcp.pop %v1245
        %v1250 = vrcp.pop %v1248
        %v1251 = vmul.f32 %v1240, %v1249
        %v1252 = vmul.f32 %v1242, %v1250
        %v1253 = vpack.c.bf16 %v1252, %v1251
        %1254 = vrot.lane.b32.xlu0 %v1043, 56
        %v1255 = vpop.permute.xlu0 %1254
        %v1258 = vsel %vm1105, %v1253, 0
        %1260 = vmatprep.subr.bf16.mxu0 0
        %1261 = vmatpush1.bf16.msra.mxu0 %v1255
        %1262 = vmatprep.subr.bf16.mxu0 0
        %1263 = vmatpush1.bf16.msra.mxu0 0
        %1264 = vmatprep.subr.bf16.mxu0 0
        %1265 = vmatpush1.bf16.msra.mxu0 0
        %1266 = vmatprep.subr.bf16.mxu0 0
        %1267 = vmatpush1.bf16.msra.mxu0 0
        %1268 = vmatprep.subr.bf16.mxu0 0
        %1269 = vmatpush1.bf16.msra.mxu0 0
        %1270 = vmatprep.subr.bf16.mxu0 0
        %1271 = vmatpush1.bf16.msra.mxu0 0
        %1272 = vmatprep.subr.bf16.mxu0 0
        %1273 = vmatpush1.bf16.msra.mxu0 0
        %1274 = vmatprep.subr.bf16.mxu0 0
        %1275 = vmatpush1.bf16.msra.mxu0 0
        %1276 = vmatprep.subr.bf16.mxu0 0
        %1277 = vmatpush1.bf16.msra.mxu0 0
        %1278 = vmatprep.subr.bf16.mxu0 0
        %1279 = vmatpush1.bf16.msra.mxu0 0
        %1280 = vmatprep.subr.bf16.mxu0 0
        %1281 = vmatpush1.bf16.msra.mxu0 0
        %1282 = vmatprep.subr.bf16.mxu0 0
        %1283 = vmatpush1.bf16.msra.mxu0 0
        %1284 = vmatprep.subr.bf16.mxu0 0
        %1285 = vmatpush1.bf16.msra.mxu0 0
        %1286 = vmatprep.subr.bf16.mxu0 0
        %1287 = vmatpush1.bf16.msra.mxu0 0
        %1288 = vmatprep.subr.bf16.mxu0 0
        %1289 = vmatpush1.bf16.msra.mxu0 0
        %1290 = vmatprep.subr.bf16.mxu0 0
        %1291 = vmatpush1.bf16.msra.mxu0 0
        %1292 = vmatprep.mubr.bf16.mxu0 0
        %1293 = vmatmul.mubr.bf16.gmra.mrb[0].mxu0 %v1258
        %v1294 = vpop.f32.mrb[0].mxu0
        %v1295 = vadd.f32 0.0, %v1294
        %v1296 = vpop.f32.mrb[0].mxu0
        %v1297 = vpop.f32.mrb[0].mxu0
        %v1298 = vadd.f32 0.0, %v1297
        %v1299 = vpop.f32.mrb[0].mxu0
        %1300 = vdwg.mxu0
        %1301 = vrot.lane.b32.xlu0 %v1043, 112
        %v1302 = vpop.permute.xlu0 %1301
        %1303 = vrot.lane.b32.xlu0 %v1043, 80
        %v1304 = vpop.permute.xlu0 %1303
        %v1306 = vsel %vm1047, %v1302, 0
        %v1309 = vsel %vm1047, %v1304, 0
        %1311 = vmatprep.subr.bf16.mxu0 0
        %1312 = vmatpush1.bf16.xpose.msra.mxu0 %v1309
        %1313 = vmatprep.subr.bf16.mxu0 0
        %1314 = vmatpush1.bf16.xpose.msra.mxu0 0
        %1315 = vmatprep.subr.bf16.mxu0 0
        %1316 = vmatpush1.bf16.xpose.msra.mxu0 0
        %1317 = vmatprep.subr.bf16.mxu0 0
        %1318 = vmatpush1.bf16.xpose.msra.mxu0 0
        %1319 = vmatprep.subr.bf16.mxu0 0
        %1320 = vmatpush1.bf16.xpose.msra.mxu0 0
        %1321 = vmatprep.subr.bf16.mxu0 0
        %1322 = vmatpush1.bf16.xpose.msra.mxu0 0
        %1323 = vmatprep.subr.bf16.mxu0 0
        %1324 = vmatpush1.bf16.xpose.msra.mxu0 0
        %1325 = vmatprep.subr.bf16.mxu0 0
        %1326 = vmatpush1.bf16.xpose.msra.mxu0 0
        %1327 = vmatprep.subr.bf16.mxu0 0
        %1328 = vmatpush1.bf16.xpose.msra.mxu0 0
        %1329 = vmatprep.subr.bf16.mxu0 0
        %1330 = vmatpush1.bf16.xpose.msra.mxu0 0
        %1331 = vmatprep.subr.bf16.mxu0 0
        %1332 = vmatpush1.bf16.xpose.msra.mxu0 0
        %1333 = vmatprep.subr.bf16.mxu0 0
        %1334 = vmatpush1.bf16.xpose.msra.mxu0 0
        %1335 = vmatprep.subr.bf16.mxu0 0
        %1336 = vmatpush1.bf16.xpose.msra.mxu0 0
        %1337 = vmatprep.subr.bf16.mxu0 0
        %1338 = vmatpush1.bf16.xpose.msra.mxu0 0
        %1339 = vmatprep.subr.bf16.mxu0 0
        %1340 = vmatpush1.bf16.xpose.msra.mxu0 0
        %1341 = vmatprep.subr.bf16.mxu0 0
        %1342 = vmatpush1.bf16.xpose.msra.mxu0 0
        %1343 = vmatprep.mubr.bf16.mxu0 0
        %1344 = vmatmul.mubr.bf16.gmra.mrb[0].mxu0 %v1306
        %v1345 = vpop.f32.mrb[0].mxu0
        %v1346 = vadd.f32 0.0, %v1345
        %v1347 = vpop.f32.mrb[0].mxu0
        %v1348 = vpop.f32.mrb[0].mxu0
        %v1349 = vadd.f32 0.0, %v1348
        %v1350 = vpop.f32.mrb[0].mxu0
        %1351 = vdwg.mxu0
        %v1352 = vmul.f32 %v1346, 0.35355338
        %v1353 = vmul.f32 %v1349, 0.35355338
        %v1354 = vadd.f32 %v1352, %v1101
        %v1355 = vadd.f32 %v1353, %v1101
        %v1356 = vsel %vm1105, %v1354, -inf
        %1357 = vmax.xlane.f32.xlu0 %v1356
        %v1358 = vpop.xlane.xlu0 %1357
        %v1359 = vsel %vm1105, %v1355, -inf
        %1360 = vmax.xlane.f32.xlu0 %v1359
        %v1361 = vpop.xlane.xlu0 %1360
        %v1362 = vsub.f32 %v1354, %v1358
        %v1363 = vsub.f32 %v1355, %v1361
        %v1364 = vmul.f32 %v1362, 1.442695
        %v1365 = vpow.pop %v1364
        %v1366 = vmul.f32 %v1363, 1.442695
        %v1367 = vpow.pop %v1366
        %v1368 = vsel %vm1105, %v1365, 0.0
        %1369 = vadd.xlane.f32.xlu0 %v1368
        %v1370 = vpop.xlane.xlu0 %1369
        %v1371 = vsel %vm1105, %v1367, 0.0
        %1372 = vadd.xlane.f32.xlu0 %v1371
        %v1373 = vpop.xlane.xlu0 %1372
        %v1374 = vrcp.pop %v1370
        %v1375 = vrcp.pop %v1373
        %v1376 = vmul.f32 %v1365, %v1374
        %v1377 = vmul.f32 %v1367, %v1375
        %v1378 = vpack.c.bf16 %v1377, %v1376
        %1379 = vrot.lane.b32.xlu0 %v1043, 48
        %v1380 = vpop.permute.xlu0 %1379
        %v1383 = vsel %vm1105, %v1378, 0
        %1385 = vmatprep.subr.bf16.mxu0 0
        %1386 = vmatpush1.bf16.msra.mxu0 %v1380
        %1387 = vmatprep.subr.bf16.mxu0 0
        %1388 = vmatpush1.bf16.msra.mxu0 0
        %1389 = vmatprep.subr.bf16.mxu0 0
        %1390 = vmatpush1.bf16.msra.mxu0 0
        %1391 = vmatprep.subr.bf16.mxu0 0
        %1392 = vmatpush1.bf16.msra.mxu0 0
        %1393 = vmatprep.subr.bf16.mxu0 0
        %1394 = vmatpush1.bf16.msra.mxu0 0
        %1395 = vmatprep.subr.bf16.mxu0 0
        %1396 = vmatpush1.bf16.msra.mxu0 0
        %1397 = vmatprep.subr.bf16.mxu0 0
        %1398 = vmatpush1.bf16.msra.mxu0 0
        %1399 = vmatprep.subr.bf16.mxu0 0
        %1400 = vmatpush1.bf16.msra.mxu0 0
        %1401 = vmatprep.subr.bf16.mxu0 0
        %1402 = vmatpush1.bf16.msra.mxu0 0
        %1403 = vmatprep.subr.bf16.mxu0 0
        %1404 = vmatpush1.bf16.msra.mxu0 0
        %1405 = vmatprep.subr.bf16.mxu0 0
        %1406 = vmatpush1.bf16.msra.mxu0 0
        %1407 = vmatprep.subr.bf16.mxu0 0
        %1408 = vmatpush1.bf16.msra.mxu0 0
        %1409 = vmatprep.subr.bf16.mxu0 0
        %1410 = vmatpush1.bf16.msra.mxu0 0
        %1411 = vmatprep.subr.bf16.mxu0 0
        %1412 = vmatpush1.bf16.msra.mxu0 0
        %1413 = vmatprep.subr.bf16.mxu0 0
        %1414 = vmatpush1.bf16.msra.mxu0 0
        %1415 = vmatprep.subr.bf16.mxu0 0
        %1416 = vmatpush1.bf16.msra.mxu0 0
        %1417 = vmatprep.mubr.bf16.mxu0 0
        %1418 = vmatmul.mubr.bf16.gmra.mrb[0].mxu0 %v1383
        %v1419 = vpop.f32.mrb[0].mxu0
        %v1420 = vadd.f32 0.0, %v1419
        %v1421 = vpop.f32.mrb[0].mxu0
        %v1422 = vpop.f32.mrb[0].mxu0
        %v1423 = vadd.f32 0.0, %v1422
        %v1424 = vpop.f32.mrb[0].mxu0
        %1425 = vdwg.mxu0
        %1426 = vrot.lane.b32.xlu0 %v1043, 104
        %v1427 = vpop.permute.xlu0 %1426
        %1428 = vrot.lane.b32.xlu0 %v1043, 72
        %v1429 = vpop.permute.xlu0 %1428
        %v1431 = vsel %vm1047, %v1427, 0
        %v1434 = vsel %vm1047, %v1429, 0
        %1436 = vmatprep.subr.bf16.mxu0 0
        %1437 = vmatpush1.bf16.xpose.msra.mxu0 %v1434
        %1438 = vmatprep.subr.bf16.mxu0 0
        %1439 = vmatpush1.bf16.xpose.msra.mxu0 0
        %1440 = vmatprep.subr.bf16.mxu0 0
        %1441 = vmatpush1.bf16.xpose.msra.mxu0 0
        %1442 = vmatprep.subr.bf16.mxu0 0
        %1443 = vmatpush1.bf16.xpose.msra.mxu0 0
        %1444 = vmatprep.subr.bf16.mxu0 0
        %1445 = vmatpush1.bf16.xpose.msra.mxu0 0
        %1446 = vmatprep.subr.bf16.mxu0 0
        %1447 = vmatpush1.bf16.xpose.msra.mxu0 0
        %1448 = vmatprep.subr.bf16.mxu0 0
        %1449 = vmatpush1.bf16.xpose.msra.mxu0 0
        %1450 = vmatprep.subr.bf16.mxu0 0
        %1451 = vmatpush1.bf16.xpose.msra.mxu0 0
        %1452 = vmatprep.subr.bf16.mxu0 0
        %1453 = vmatpush1.bf16.xpose.msra.mxu0 0
        %1454 = vmatprep.subr.bf16.mxu0 0
        %1455 = vmatpush1.bf16.xpose.msra.mxu0 0
        %1456 = vmatprep.subr.bf16.mxu0 0
        %1457 = vmatpush1.bf16.xpose.msra.mxu0 0
        %1458 = vmatprep.subr.bf16.mxu0 0
        %1459 = vmatpush1.bf16.xpose.msra.mxu0 0
        %1460 = vmatprep.subr.bf16.mxu0 0
        %1461 = vmatpush1.bf16.xpose.msra.mxu0 0
        %1462 = vmatprep.subr.bf16.mxu0 0
        %1463 = vmatpush1.bf16.xpose.msra.mxu0 0
        %1464 = vmatprep.subr.bf16.mxu0 0
        %1465 = vmatpush1.bf16.xpose.msra.mxu0 0
        %1466 = vmatprep.subr.bf16.mxu0 0
        %1467 = vmatpush1.bf16.xpose.msra.mxu0 0
        %1468 = vmatprep.mubr.bf16.mxu0 0
        %1469 = vmatmul.mubr.bf16.gmra.mrb[0].mxu0 %v1431
        %v1470 = vpop.f32.mrb[0].mxu0
        %v1471 = vadd.f32 0.0, %v1470
        %v1472 = vpop.f32.mrb[0].mxu0
        %v1473 = vpop.f32.mrb[0].mxu0
        %v1474 = vadd.f32 0.0, %v1473
        %v1475 = vpop.f32.mrb[0].mxu0
        %1476 = vdwg.mxu0
        %v1477 = vmul.f32 %v1471, 0.35355338
        %v1478 = vmul.f32 %v1474, 0.35355338
        %v1479 = vadd.f32 %v1477, %v1101
        %v1480 = vadd.f32 %v1478, %v1101
        %v1481 = vsel %vm1105, %v1479, -inf
        %1482 = vmax.xlane.f32.xlu0 %v1481
        %v1483 = vpop.xlane.xlu0 %1482
        %v1484 = vsel %vm1105, %v1480, -inf
        %1485 = vmax.xlane.f32.xlu0 %v1484
        %v1486 = vpop.xlane.xlu0 %1485
        %v1487 = vsub.f32 %v1479, %v1483
        %v1488 = vsub.f32 %v1480, %v1486
        %v1489 = vmul.f32 %v1487, 1.442695
        %v1490 = vpow.pop %v1489
        %v1491 = vmul.f32 %v1488, 1.442695
        %v1492 = vpow.pop %v1491
        %v1493 = vsel %vm1105, %v1490, 0.0
        %1494 = vadd.xlane.f32.xlu0 %v1493
        %v1495 = vpop.xlane.xlu0 %1494
        %v1496 = vsel %vm1105, %v1492, 0.0
        %1497 = vadd.xlane.f32.xlu0 %v1496
        %v1498 = vpop.xlane.xlu0 %1497
        %v1499 = vrcp.pop %v1495
        %v1500 = vrcp.pop %v1498
        %v1501 = vmul.f32 %v1490, %v1499
        %v1502 = vmul.f32 %v1492, %v1500
        %v1503 = vpack.c.bf16 %v1502, %v1501
        %1504 = vrot.lane.b32.xlu0 %v1043, 40
        %v1505 = vpop.permute.xlu0 %1504
        %v1508 = vsel %vm1105, %v1503, 0
        %1510 = vmatprep.subr.bf16.mxu0 0
        %1511 = vmatpush1.bf16.msra.mxu0 %v1505
        %1512 = vmatprep.subr.bf16.mxu0 0
        %1513 = vmatpush1.bf16.msra.mxu0 0
        %1514 = vmatprep.subr.bf16.mxu0 0
        %1515 = vmatpush1.bf16.msra.mxu0 0
        %1516 = vmatprep.subr.bf16.mxu0 0
        %1517 = vmatpush1.bf16.msra.mxu0 0
        %1518 = vmatprep.subr.bf16.mxu0 0
        %1519 = vmatpush1.bf16.msra.mxu0 0
        %1520 = vmatprep.subr.bf16.mxu0 0
        %1521 = vmatpush1.bf16.msra.mxu0 0
        %1522 = vmatprep.subr.bf16.mxu0 0
        %1523 = vmatpush1.bf16.msra.mxu0 0
        %1524 = vmatprep.subr.bf16.mxu0 0
        %1525 = vmatpush1.bf16.msra.mxu0 0
        %1526 = vmatprep.subr.bf16.mxu0 0
        %1527 = vmatpush1.bf16.msra.mxu0 0
        %1528 = vmatprep.subr.bf16.mxu0 0
        %1529 = vmatpush1.bf16.msra.mxu0 0
        %1530 = vmatprep.subr.bf16.mxu0 0
        %1531 = vmatpush1.bf16.msra.mxu0 0
        %1532 = vmatprep.subr.bf16.mxu0 0
        %1533 = vmatpush1.bf16.msra.mxu0 0
        %1534 = vmatprep.subr.bf16.mxu0 0
        %1535 = vmatpush1.bf16.msra.mxu0 0
        %1536 = vmatprep.subr.bf16.mxu0 0
        %1537 = vmatpush1.bf16.msra.mxu0 0
        %1538 = vmatprep.subr.bf16.mxu0 0
        %1539 = vmatpush1.bf16.msra.mxu0 0
        %1540 = vmatprep.subr.bf16.mxu0 0
        %1541 = vmatpush1.bf16.msra.mxu0 0
        %1542 = vmatprep.mubr.bf16.mxu0 0
        %1543 = vmatmul.mubr.bf16.gmra.mrb[0].mxu0 %v1508
        %v1544 = vpop.f32.mrb[0].mxu0
        %v1545 = vadd.f32 0.0, %v1544
        %v1546 = vpop.f32.mrb[0].mxu0
        %v1547 = vpop.f32.mrb[0].mxu0
        %v1548 = vadd.f32 0.0, %v1547
        %v1549 = vpop.f32.mrb[0].mxu0
        %1550 = vdwg.mxu0
        %1553 = vrot.lane.b32.xlu0 %v1295, 8
        %v1554 = vpop.permute.xlu0 %1553
        %1555 = vrot.lane.b32.xlu0 %v1298, 8
        %v1556 = vpop.permute.xlu0 %1555
        %1561 = vrot.lane.b32.xlu0 %v1420, 16
        %v1562 = vpop.permute.xlu0 %1561
        %1563 = vrot.lane.b32.xlu0 %v1423, 16
        %v1564 = vpop.permute.xlu0 %1563
        %1569 = vrot.lane.b32.xlu0 %v1545, 24
        %v1570 = vpop.permute.xlu0 %1569
        %1571 = vrot.lane.b32.xlu0 %v1548, 24
        %v1572 = vpop.permute.xlu0 %1571
        %v1575 = vsel %vm1047, %v1170, %v1554
        %v1576 = vsel %vm1047, %v1173, %v1556
        %v1577 = vsel %vm1105, %v1575, %v1562
        %v1578 = vsel %vm1105, %v1576, %v1564
        %vm1579 = vcmask 195584
        %v1580 = vsel %vm1579, %v1577, %v1570
        %v1581 = vsel %vm1579, %v1578, %v1572
        %v1582 = vld [vmem:[%s8] sm:$0xf]
        %v1583 = vld [vmem:[%s8 + $0x4] sm:$0xf]
        %v1584 = vld [vmem:[%s8 + $0x8] sm:$0xf]
        %v1585 = vld [vmem:[%s8 + $0xc] sm:$0xf]
        %v1586 = vld [vmem:[%s9] sm:$0x1]
        %v1587 = vpack.c.bf16 %v1581, %v1580
        %v1589 = vlaneseq
        %v1590 = vshrl.u32 %v1589, 7
        %v1591 = vsub.s32 0, %v1590
        %v1592 = vrot.slane %v1586, %v1591
        %v1598 = vunpack.c.l.b16 %v1582
        %v1599 = vunpack.c.l.b16 %v1583
        %v1600 = vunpack.c.l.b16 %v1584
        %v1601 = vunpack.c.l.b16 %v1585
        %v1602 = vpack.c.b16 %v1599, %v1598
        %v1603 = vpack.c.b16 %v1601, %v1600
        %v1607 = vsel %vm931, %v1587, 0
        %1609 = vmatprep.subr.bf16.mxu0 0
        %1610 = vmatpush1.bf16.msra.mxu0 %v1602
        %1611 = vmatprep.subr.bf16.mxu0 0
        %1612 = vmatpush1.bf16.msra.mxu0 %v1603
        %1613 = vmatprep.subr.bf16.mxu0 0
        %1614 = vmatpush1.bf16.msra.mxu0 0
        %1615 = vmatprep.subr.bf16.mxu0 0
        %1616 = vmatpush1.bf16.msra.mxu0 0
        %1617 = vmatprep.subr.bf16.mxu0 0
        %1618 = vmatpush1.bf16.msra.mxu0 0
        %1619 = vmatprep.subr.bf16.mxu0 0
        %1620 = vmatpush1.bf16.msra.mxu0 0
        %1621 = vmatprep.subr.bf16.mxu0 0
        %1622 = vmatpush1.bf16.msra.mxu0 0
        %1623 = vmatprep.subr.bf16.mxu0 0
        %1624 = vmatpush1.bf16.msra.mxu0 0
        %1625 = vmatprep.subr.bf16.mxu0 0
        %1626 = vmatpush1.bf16.msra.mxu0 0
        %1627 = vmatprep.subr.bf16.mxu0 0
        %1628 = vmatpush1.bf16.msra.mxu0 0
        %1629 = vmatprep.subr.bf16.mxu0 0
        %1630 = vmatpush1.bf16.msra.mxu0 0
        %1631 = vmatprep.subr.bf16.mxu0 0
        %1632 = vmatpush1.bf16.msra.mxu0 0
        %1633 = vmatprep.subr.bf16.mxu0 0
        %1634 = vmatpush1.bf16.msra.mxu0 0
        %1635 = vmatprep.subr.bf16.mxu0 0
        %1636 = vmatpush1.bf16.msra.mxu0 0
        %1637 = vmatprep.subr.bf16.mxu0 0
        %1638 = vmatpush1.bf16.msra.mxu0 0
        %1639 = vmatprep.subr.bf16.mxu0 0
        %1640 = vmatpush1.bf16.msra.mxu0 0
        %1641 = vmatprep.mubr.bf16.mxu0 0
        %1642 = vmatmul.mubr.bf16.gmra.mrb[0].mxu0 %v1607
        %v1643 = vpop.f32.mrb[0].mxu0
        %v1644 = vadd.f32 %v1592, %v1643
        %v1645 = vpop.f32.mrb[0].mxu0
        %v1646 = vpop.f32.mrb[0].mxu0
        %v1647 = vadd.f32 %v1592, %v1646
        %v1648 = vpop.f32.mrb[0].mxu0
        %1649 = vdwg.mxu0
        %v1650 = vadd.f32 %v973, %v1644
        %v1651 = vadd.f32 %v974, %v1647
        %v1652 = vld [vmem:[%s10] sm:$0x1]
        %v1653 = vld [vmem:[%s11] sm:$0x1]
        %v1654 = vsel %vm931, %v1650, 0.0
        %1655 = vadd.xlane.f32.xlu0 %v1654
        %v1656 = vpop.xlane.xlu0 %1655
        %v1657 = vsel %vm931, %v1651, 0.0
        %1658 = vadd.xlane.f32.xlu0 %v1657
        %v1659 = vpop.xlane.xlu0 %1658
        %v1660 = vmul.f32 %v1656, %v938
        %v1661 = vmul.f32 %v1659, %v938
        %v1662 = vsub.f32 %v1650, %v1660
        %v1663 = vsub.f32 %v1651, %v1661
        %v1664 = vmul.f32 %v1662, %v1662
        %v1665 = vmul.f32 %v1663, %v1663
        %v1666 = vsel %vm931, %v1664, 0.0
        %1667 = vadd.xlane.f32.xlu0 %v1666
        %v1668 = vpop.xlane.xlu0 %1667
        %v1669 = vsel %vm931, %v1665, 0.0
        %1670 = vadd.xlane.f32.xlu0 %v1669
        %v1671 = vpop.xlane.xlu0 %1670
        %v1672 = vmul.f32 %v1668, %v938
        %v1673 = vmul.f32 %v1671, %v938
        %v1674 = vadd.f32 %v1672, 1e-12
        %v1675 = vadd.f32 %v1673, 1e-12
        %v1676 = vrsqrt.pop %v1674
        %v1677 = vrsqrt.pop %v1675
        %v1678 = vmul.f32 %v1662, %v1676
        %v1679 = vmul.f32 %v1663, %v1677
        %v1681 = vlaneseq
        %v1682 = vshrl.u32 %v1681, 7
        %v1683 = vsub.s32 0, %v1682
        %v1684 = vrot.slane %v1652, %v1683
        %v1686 = vmul.f32 %v1678, %v1684
        %v1687 = vmul.f32 %v1679, %v1684
        %v1689 = vlaneseq
        %v1690 = vshrl.u32 %v1689, 7
        %v1691 = vsub.s32 0, %v1690
        %v1692 = vrot.slane %v1653, %v1691
        %v1694 = vadd.f32 %v1686, %v1692
        %v1695 = vadd.f32 %v1687, %v1692
        %v1696 = vld [vmem:[%s12] sm:$0xf]
        %v1697 = vld [vmem:[%s12 + $0x4] sm:$0xf]
        %v1698 = vld [vmem:[%s12 + $0x8] sm:$0xf]
        %v1699 = vld [vmem:[%s12 + $0xc] sm:$0xf]
        %v1700 = vld [vmem:[%s13] sm:$0x1]
        %v1701 = vpack.c.bf16 %v1695, %v1694
        %v1703 = vlaneseq
        %v1704 = vshrl.u32 %v1703, 7
        %v1705 = vsub.s32 0, %v1704
        %v1706 = vrot.slane %v1700, %v1705
        %v1712 = vunpack.c.l.b16 %v1696
        %v1713 = vunpack.c.l.b16 %v1697
        %v1714 = vunpack.c.l.b16 %v1698
        %v1715 = vunpack.c.l.b16 %v1699
        %v1716 = vpack.c.b16 %v1713, %v1712
        %v1717 = vpack.c.b16 %v1715, %v1714
        %v1721 = vsel %vm931, %v1701, 0
        %1723 = vmatprep.subr.bf16.mxu0 0
        %1724 = vmatpush1.bf16.msra.mxu0 %v1716
        %1725 = vmatprep.subr.bf16.mxu0 0
        %1726 = vmatpush1.bf16.msra.mxu0 %v1717
        %1727 = vmatprep.subr.bf16.mxu0 0
        %1728 = vmatpush1.bf16.msra.mxu0 0
        %1729 = vmatprep.subr.bf16.mxu0 0
        %1730 = vmatpush1.bf16.msra.mxu0 0
        %1731 = vmatprep.subr.bf16.mxu0 0
        %1732 = vmatpush1.bf16.msra.mxu0 0
        %1733 = vmatprep.subr.bf16.mxu0 0
        %1734 = vmatpush1.bf16.msra.mxu0 0
        %1735 = vmatprep.subr.bf16.mxu0 0
        %1736 = vmatpush1.bf16.msra.mxu0 0
        %1737 = vmatprep.subr.bf16.mxu0 0
        %1738 = vmatpush1.bf16.msra.mxu0 0
        %1739 = vmatprep.subr.bf16.mxu0 0
        %1740 = vmatpush1.bf16.msra.mxu0 0
        %1741 = vmatprep.subr.bf16.mxu0 0
        %1742 = vmatpush1.bf16.msra.mxu0 0
        %1743 = vmatprep.subr.bf16.mxu0 0
        %1744 = vmatpush1.bf16.msra.mxu0 0
        %1745 = vmatprep.subr.bf16.mxu0 0
        %1746 = vmatpush1.bf16.msra.mxu0 0
        %1747 = vmatprep.subr.bf16.mxu0 0
        %1748 = vmatpush1.bf16.msra.mxu0 0
        %1749 = vmatprep.subr.bf16.mxu0 0
        %1750 = vmatpush1.bf16.msra.mxu0 0
        %1751 = vmatprep.subr.bf16.mxu0 0
        %1752 = vmatpush1.bf16.msra.mxu0 0
        %1753 = vmatprep.subr.bf16.mxu0 0
        %1754 = vmatpush1.bf16.msra.mxu0 0
        %1755 = vmatprep.mubr.bf16.mxu0 0
        %1756 = vmatmul.mubr.bf16.gmra.mrb[0].mxu0 %v1721
        %v1757 = vpop.f32.mrb[0].mxu0
        %v1758 = vadd.f32 %v1706, %v1757
        %v1759 = vpop.f32.mrb[0].mxu0
        %v1760 = vpop.f32.mrb[0].mxu0
        %v1761 = vadd.f32 %v1706, %v1760
        %v1762 = vpop.f32.mrb[0].mxu0
        %1763 = vdwg.mxu0
        %v1764 = vmul.f32 %v1758, %v1758
        %v1765 = vmul.f32 %v1761, %v1761
        %v1766 = vmul.f32 %v1758, %v1764
        %v1767 = vmul.f32 %v1761, %v1765
        %v1768 = vmul.f32 %v1766, 0.044715
        %v1769 = vmul.f32 %v1767, 0.044715
        %v1770 = vadd.f32 %v1758, %v1768
        %v1771 = vadd.f32 %v1761, %v1769
        %v1772 = vmul.f32 %v1770, 0.7978846
        %v1773 = vmul.f32 %v1771, 0.7978846
        %v1774 = vtanh.pop %v1772
        %v1775 = vtanh.pop %v1773
        %v1776 = vadd.f32 %v1774, 1.0
        %v1777 = vadd.f32 %v1775, 1.0
        %v1778 = vmul.f32 %v1776, 0.5
        %v1779 = vmul.f32 %v1777, 0.5
        %v1780 = vmul.f32 %v1758, %v1778
        %v1781 = vmul.f32 %v1761, %v1779
        %v1782 = vld [vmem:[%s14] sm:$0xf]
        %v1783 = vld [vmem:[%s14 + $0x4] sm:$0xf]
        %v1784 = vld [vmem:[%s14 + $0x8] sm:$0xf]
        %v1785 = vld [vmem:[%s14 + $0xc] sm:$0xf]
        %v1786 = vld [vmem:[%s14 + $0x10] sm:$0xf]
        %v1787 = vld [vmem:[%s14 + $0x14] sm:$0xf]
        %v1788 = vld [vmem:[%s14 + $0x18] sm:$0xf]
        %v1789 = vld [vmem:[%s14 + $0x1c] sm:$0xf]
        %v1790 = vld [vmem:[%s15] sm:$0x1]
        %v1791 = vpack.c.bf16 %v1781, %v1780
        %v1793 = vlaneseq
        %v1794 = vshrl.u32 %v1793, 7
        %v1795 = vsub.s32 0, %v1794
        %v1796 = vrot.slane %v1790, %v1795
        %v1806 = vunpack.c.l.b16 %v1782
        %v1807 = vunpack.c.l.b16 %v1783
        %v1808 = vunpack.c.l.b16 %v1784
        %v1809 = vunpack.c.l.b16 %v1785
        %v1810 = vunpack.c.l.b16 %v1786
        %v1811 = vunpack.c.l.b16 %v1787
        %v1812 = vunpack.c.l.b16 %v1788
        %v1813 = vunpack.c.l.b16 %v1789
        %v1814 = vpack.c.b16 %v1807, %v1806
        %v1815 = vpack.c.b16 %v1809, %v1808
        %v1816 = vpack.c.b16 %v1811, %v1810
        %v1817 = vpack.c.b16 %v1813, %v1812
        %vm1822 = vcmask 523264
        %v1824 = vsel %vm1822, %v1791, 0
        %1826 = vmatprep.subr.bf16.mxu0 0
        %1827 = vmatpush1.bf16.msra.mxu0 %v1814
        %1828 = vmatprep.subr.bf16.mxu0 0
        %1829 = vmatpush1.bf16.msra.mxu0 %v1815
        %1830 = vmatprep.subr.bf16.mxu0 0
        %1831 = vmatpush1.bf16.msra.mxu0 %v1816
        %1832 = vmatprep.subr.bf16.mxu0 0
        %1833 = vmatpush1.bf16.msra.mxu0 %v1817
        %1834 = vmatprep.subr.bf16.mxu0 0
        %1835 = vmatpush1.bf16.msra.mxu0 0
        %1836 = vmatprep.subr.bf16.mxu0 0
        %1837 = vmatpush1.bf16.msra.mxu0 0
        %1838 = vmatprep.subr.bf16.mxu0 0
        %1839 = vmatpush1.bf16.msra.mxu0 0
        %1840 = vmatprep.subr.bf16.mxu0 0
        %1841 = vmatpush1.bf16.msra.mxu0 0
        %1842 = vmatprep.subr.bf16.mxu0 0
        %1843 = vmatpush1.bf16.msra.mxu0 0
        %1844 = vmatprep.subr.bf16.mxu0 0
        %1845 = vmatpush1.bf16.msra.mxu0 0
        %1846 = vmatprep.subr.bf16.mxu0 0
        %1847 = vmatpush1.bf16.msra.mxu0 0
        %1848 = vmatprep.subr.bf16.mxu0 0
        %1849 = vmatpush1.bf16.msra.mxu0 0
        %1850 = vmatprep.subr.bf16.mxu0 0
        %1851 = vmatpush1.bf16.msra.mxu0 0
        %1852 = vmatprep.subr.bf16.mxu0 0
        %1853 = vmatpush1.bf16.msra.mxu0 0
        %1854 = vmatprep.subr.bf16.mxu0 0
        %1855 = vmatpush1.bf16.msra.mxu0 0
        %1856 = vmatprep.subr.bf16.mxu0 0
        %1857 = vmatpush1.bf16.msra.mxu0 0
        %1858 = vmatprep.mubr.bf16.mxu0 0
        %1859 = vmatmul.mubr.bf16.gmra.mrb[0].mxu0 %v1824
        %v1860 = vpop.f32.mrb[0].mxu0
        %v1861 = vadd.f32 %v1796, %v1860
        %v1862 = vpop.f32.mrb[0].mxu0
        %v1863 = vpop.f32.mrb[0].mxu0
        %v1864 = vadd.f32 %v1796, %v1863
        %v1865 = vpop.f32.mrb[0].mxu0
        %1866 = vdwg.mxu0
        %v1867 = vadd.f32 %v1694, %v1861
        %v1868 = vadd.f32 %v1695, %v1864
        %v1869 = vld [vmem:[%s16] sm:$0x1]
        %v1870 = vld [vmem:[%s17] sm:$0x1]
        %v1871 = vsel %vm931, %v1867, 0.0
        %1872 = vadd.xlane.f32.xlu0 %v1871
        %v1873 = vpop.xlane.xlu0 %1872
        %v1874 = vsel %vm931, %v1868, 0.0
        %1875 = vadd.xlane.f32.xlu0 %v1874
        %v1876 = vpop.xlane.xlu0 %1875
        %v1877 = vmul.f32 %v1873, %v938
        %v1878 = vmul.f32 %v1876, %v938
        %v1879 = vsub.f32 %v1867, %v1877
        %v1880 = vsub.f32 %v1868, %v1878
        %v1881 = vmul.f32 %v1879, %v1879
        %v1882 = vmul.f32 %v1880, %v1880
        %v1883 = vsel %vm931, %v1881, 0.0
        %1884 = vadd.xlane.f32.xlu0 %v1883
        %v1885 = vpop.xlane.xlu0 %1884
        %v1886 = vsel %vm931, %v1882, 0.0
        %1887 = vadd.xlane.f32.xlu0 %v1886
        %v1888 = vpop.xlane.xlu0 %1887
        %v1889 = vmul.f32 %v1885, %v938
        %v1890 = vmul.f32 %v1888, %v938
        %v1891 = vadd.f32 %v1889, 1e-12
        %v1892 = vadd.f32 %v1890, 1e-12
        %v1893 = vrsqrt.pop %v1891
        %v1894 = vrsqrt.pop %v1892
        %v1895 = vmul.f32 %v1879, %v1893
        %v1896 = vmul.f32 %v1880, %v1894
        %v1898 = vlaneseq
        %v1899 = vshrl.u32 %v1898, 7
        %v1900 = vsub.s32 0, %v1899
        %v1901 = vrot.slane %v1869, %v1900
        %v1903 = vmul.f32 %v1895, %v1901
        %v1904 = vmul.f32 %v1896, %v1901
        %v1906 = vlaneseq
        %v1907 = vshrl.u32 %v1906, 7
        %v1908 = vsub.s32 0, %v1907
        %v1909 = vrot.slane %v1870, %v1908
        %v1911 = vadd.f32 %v1903, %v1909
        %v1912 = vadd.f32 %v1904, %v1909
        %s1913 = scalar_lea.vmem %s6, 16
        %v1914 = vld [vmem:[%s1913] sm:$0xf]
        %v1915 = vld [vmem:[%s1913 + $0x4] sm:$0xf]
        %v1916 = vld [vmem:[%s1913 + $0x8] sm:$0xf]
        %v1917 = vld [vmem:[%s1913 + $0xc] sm:$0xf]
        %s1918 = scalar_lea.vmem %s7, 1
        %v1919 = vld [vmem:[%s1918] sm:$0x1]
        %v1920 = vpack.c.bf16 %v1912, %v1911
        %v1922 = vlaneseq
        %v1923 = vshrl.u32 %v1922, 7
        %v1924 = vsub.s32 0, %v1923
        %v1925 = vrot.slane %v1919, %v1924
        %v1931 = vunpack.c.l.b16 %v1914
        %v1932 = vunpack.c.l.b16 %v1915
        %v1933 = vunpack.c.l.b16 %v1916
        %v1934 = vunpack.c.l.b16 %v1917
        %v1935 = vpack.c.b16 %v1932, %v1931
        %v1936 = vpack.c.b16 %v1934, %v1933
        %v1940 = vsel %vm931, %v1920, 0
        %1942 = vmatprep.subr.bf16.mxu0 0
        %1943 = vmatpush1.bf16.msra.mxu0 %v1935
        %1944 = vmatprep.subr.bf16.mxu0 0
        %1945 = vmatpush1.bf16.msra.mxu0 %v1936
        %1946 = vmatprep.subr.bf16.mxu0 0
        %1947 = vmatpush1.bf16.msra.mxu0 0
        %1948 = vmatprep.subr.bf16.mxu0 0
        %1949 = vmatpush1.bf16.msra.mxu0 0
        %1950 = vmatprep.subr.bf16.mxu0 0
        %1951 = vmatpush1.bf16.msra.mxu0 0
        %1952 = vmatprep.subr.bf16.mxu0 0
        %1953 = vmatpush1.bf16.msra.mxu0 0
        %1954 = vmatprep.subr.bf16.mxu0 0
        %1955 = vmatpush1.bf16.msra.mxu0 0
        %1956 = vmatprep.subr.bf16.mxu0 0
        %1957 = vmatpush1.bf16.msra.mxu0 0
        %1958 = vmatprep.subr.bf16.mxu0 0
        %1959 = vmatpush1.bf16.msra.mxu0 0
        %1960 = vmatprep.subr.bf16.mxu0 0
        %1961 = vmatpush1.bf16.msra.mxu0 0
        %1962 = vmatprep.subr.bf16.mxu0 0
        %1963 = vmatpush1.bf16.msra.mxu0 0
        %1964 = vmatprep.subr.bf16.mxu0 0
        %1965 = vmatpush1.bf16.msra.mxu0 0
        %1966 = vmatprep.subr.bf16.mxu0 0
        %1967 = vmatpush1.bf16.msra.mxu0 0
        %1968 = vmatprep.subr.bf16.mxu0 0
        %1969 = vmatpush1.bf16.msra.mxu0 0
        %1970 = vmatprep.subr.bf16.mxu0 0
        %1971 = vmatpush1.bf16.msra.mxu0 0
        %1972 = vmatprep.subr.bf16.mxu0 0
        %1973 = vmatpush1.bf16.msra.mxu0 0
        %1974 = vmatprep.mubr.bf16.mxu0 0
        %1975 = vmatmul.mubr.bf16.gmra.mrb[0].mxu0 %v1940
        %v1976 = vpop.f32.mrb[0].mxu0
        %v1977 = vadd.f32 %v1925, %v1976
        %v1978 = vpop.f32.mrb[0].mxu0
        %v1979 = vpop.f32.mrb[0].mxu0
        %v1980 = vadd.f32 %v1925, %v1979
        %v1981 = vpop.f32.mrb[0].mxu0
        %1982 = vdwg.mxu0
        %v1983 = vpack.c.bf16 %v1980, %v1977
        %1985 = vrot.lane.b32.xlu0 %v1983, 96
        %v1986 = vpop.permute.xlu0 %1985
        %v1988 = vsel %vm1047, %v1983, 0
        %v1991 = vsel %vm1047, %v1986, 0
        %1993 = vmatprep.subr.bf16.mxu0 0
        %1994 = vmatpush1.bf16.xpose.msra.mxu0 %v1991
        %1995 = vmatprep.subr.bf16.mxu0 0
        %1996 = vmatpush1.bf16.xpose.msra.mxu0 0
        %1997 = vmatprep.subr.bf16.mxu0 0
        %1998 = vmatpush1.bf16.xpose.msra.mxu0 0
        %1999 = vmatprep.subr.bf16.mxu0 0
        %2000 = vmatpush1.bf16.xpose.msra.mxu0 0
        %2001 = vmatprep.subr.bf16.mxu0 0
        %2002 = vmatpush1.bf16.xpose.msra.mxu0 0
        %2003 = vmatprep.subr.bf16.mxu0 0
        %2004 = vmatpush1.bf16.xpose.msra.mxu0 0
        %2005 = vmatprep.subr.bf16.mxu0 0
        %2006 = vmatpush1.bf16.xpose.msra.mxu0 0
        %2007 = vmatprep.subr.bf16.mxu0 0
        %2008 = vmatpush1.bf16.xpose.msra.mxu0 0
        %2009 = vmatprep.subr.bf16.mxu0 0
        %2010 = vmatpush1.bf16.xpose.msra.mxu0 0
        %2011 = vmatprep.subr.bf16.mxu0 0
        %2012 = vmatpush1.bf16.xpose.msra.mxu0 0
        %2013 = vmatprep.subr.bf16.mxu0 0
        %2014 = vmatpush1.bf16.xpose.msra.mxu0 0
        %2015 = vmatprep.subr.bf16.mxu0 0
        %2016 = vmatpush1.bf16.xpose.msra.mxu0 0
        %2017 = vmatprep.subr.bf16.mxu0 0
        %2018 = vmatpush1.bf16.xpose.msra.mxu0 0
        %2019 = vmatprep.subr.bf16.mxu0 0
        %2020 = vmatpush1.bf16.xpose.msra.mxu0 0
        %2021 = vmatprep.subr.bf16.mxu0 0
        %2022 = vmatpush1.bf16.xpose.msra.mxu0 0
        %2023 = vmatprep.subr.bf16.mxu0 0
        %2024 = vmatpush1.bf16.xpose.msra.mxu0 0
        %2025 = vmatprep.mubr.bf16.mxu0 0
        %2026 = vmatmul.mubr.bf16.gmra.mrb[0].mxu0 %v1988
        %v2027 = vpop.f32.mrb[0].mxu0
        %v2028 = vadd.f32 0.0, %v2027
        %v2029 = vpop.f32.mrb[0].mxu0
        %v2030 = vpop.f32.mrb[0].mxu0
        %v2031 = vadd.f32 0.0, %v2030
        %v2032 = vpop.f32.mrb[0].mxu0
        %2033 = vdwg.mxu0
        %v2034 = vmul.f32 %v2028, 0.35355338
        %v2035 = vmul.f32 %v2031, 0.35355338
        %v2036 = vadd.f32 %v2034, %v1101
        %v2037 = vadd.f32 %v2035, %v1101
        %v2038 = vsel %vm1105, %v2036, -inf
        %2039 = vmax.xlane.f32.xlu0 %v2038
        %v2040 = vpop.xlane.xlu0 %2039
        %v2041 = vsel %vm1105, %v2037, -inf
        %2042 = vmax.xlane.f32.xlu0 %v2041
        %v2043 = vpop.xlane.xlu0 %2042
        %v2044 = vsub.f32 %v2036, %v2040
        %v2045 = vsub.f32 %v2037, %v2043
        %v2046 = vmul.f32 %v2044, 1.442695
        %v2047 = vpow.pop %v2046
        %v2048 = vmul.f32 %v2045, 1.442695
        %v2049 = vpow.pop %v2048
        %v2050 = vsel %vm1105, %v2047, 0.0
        %2051 = vadd.xlane.f32.xlu0 %v2050
        %v2052 = vpop.xlane.xlu0 %2051
        %v2053 = vsel %vm1105, %v2049, 0.0
        %2054 = vadd.xlane.f32.xlu0 %v2053
        %v2055 = vpop.xlane.xlu0 %2054
        %v2056 = vrcp.pop %v2052
        %v2057 = vrcp.pop %v2055
        %v2058 = vmul.f32 %v2047, %v2056
        %v2059 = vmul.f32 %v2049, %v2057
        %v2060 = vpack.c.bf16 %v2059, %v2058
        %2061 = vrot.lane.b32.xlu0 %v1983, 64
        %v2062 = vpop.permute.xlu0 %2061
        %v2065 = vsel %vm1105, %v2060, 0
        %2067 = vmatprep.subr.bf16.mxu0 0
        %2068 = vmatpush1.bf16.msra.mxu0 %v2062
        %2069 = vmatprep.subr.bf16.mxu0 0
        %2070 = vmatpush1.bf16.msra.mxu0 0
        %2071 = vmatprep.subr.bf16.mxu0 0
        %2072 = vmatpush1.bf16.msra.mxu0 0
        %2073 = vmatprep.subr.bf16.mxu0 0
        %2074 = vmatpush1.bf16.msra.mxu0 0
        %2075 = vmatprep.subr.bf16.mxu0 0
        %2076 = vmatpush1.bf16.msra.mxu0 0
        %2077 = vmatprep.subr.bf16.mxu0 0
        %2078 = vmatpush1.bf16.msra.mxu0 0
        %2079 = vmatprep.subr.bf16.mxu0 0
        %2080 = vmatpush1.bf16.msra.mxu0 0
        %2081 = vmatprep.subr.bf16.mxu0 0
        %2082 = vmatpush1.bf16.msra.mxu0 0
        %2083 = vmatprep.subr.bf16.mxu0 0
        %2084 = vmatpush1.bf16.msra.mxu0 0
        %2085 = vmatprep.subr.bf16.mxu0 0
        %2086 = vmatpush1.bf16.msra.mxu0 0
        %2087 = vmatprep.subr.bf16.mxu0 0
        %2088 = vmatpush1.bf16.msra.mxu0 0
        %2089 = vmatprep.subr.bf16.mxu0 0
        %2090 = vmatpush1.bf16.msra.mxu0 0
        %2091 = vmatprep.subr.bf16.mxu0 0
        %2092 = vmatpush1.bf16.msra.mxu0 0
        %2093 = vmatprep.subr.bf16.mxu0 0
        %2094 = vmatpush1.bf16.msra.mxu0 0
        %2095 = vmatprep.subr.bf16.mxu0 0
        %2096 = vmatpush1.bf16.msra.mxu0 0
        %2097 = vmatprep.subr.bf16.mxu0 0
        %2098 = vmatpush1.bf16.msra.mxu0 0
        %2099 = vmatprep.mubr.bf16.mxu0 0
        %2100 = vmatmul.mubr.bf16.gmra.mrb[0].mxu0 %v2065
        %v2101 = vpop.f32.mrb[0].mxu0
        %v2102 = vadd.f32 0.0, %v2101
        %v2103 = vpop.f32.mrb[0].mxu0
        %v2104 = vpop.f32.mrb[0].mxu0
        %v2105 = vadd.f32 0.0, %v2104
        %v2106 = vpop.f32.mrb[0].mxu0
        %2107 = vdwg.mxu0
        %2108 = vrot.lane.b32.xlu0 %v1983, 120
        %v2109 = vpop.permute.xlu0 %2108
        %2110 = vrot.lane.b32.xlu0 %v1983, 88
        %v2111 = vpop.permute.xlu0 %2110
        %v2113 = vsel %vm1047, %v2109, 0
        %v2116 = vsel %vm1047, %v2111, 0
        %2118 = vmatprep.subr.bf16.mxu0 0
        %2119 = vmatpush1.bf16.xpose.msra.mxu0 %v2116
        %2120 = vmatprep.subr.bf16.mxu0 0
        %2121 = vmatpush1.bf16.xpose.msra.mxu0 0
        %2122 = vmatprep.subr.bf16.mxu0 0
        %2123 = vmatpush1.bf16.xpose.msra.mxu0 0
        %2124 = vmatprep.subr.bf16.mxu0 0
        %2125 = vmatpush1.bf16.xpose.msra.mxu0 0
        %2126 = vmatprep.subr.bf16.mxu0 0
        %2127 = vmatpush1.bf16.xpose.msra.mxu0 0
        %2128 = vmatprep.subr.bf16.mxu0 0
        %2129 = vmatpush1.bf16.xpose.msra.mxu0 0
        %2130 = vmatprep.subr.bf16.mxu0 0
        %2131 = vmatpush1.bf16.xpose.msra.mxu0 0
        %2132 = vmatprep.subr.bf16.mxu0 0
        %2133 = vmatpush1.bf16.xpose.msra.mxu0 0
        %2134 = vmatprep.subr.bf16.mxu0 0
        %2135 = vmatpush1.bf16.xpose.msra.mxu0 0
        %2136 = vmatprep.subr.bf16.mxu0 0
        %2137 = vmatpush1.bf16.xpose.msra.mxu0 0
        %2138 = vmatprep.subr.bf16.mxu0 0
        %2139 = vmatpush1.bf16.xpose.msra.mxu0 0
        %2140 = vmatprep.subr.bf16.mxu0 0
        %2141 = vmatpush1.bf16.xpose.msra.mxu0 0
        %2142 = vmatprep.subr.bf16.mxu0 0
        %2143 = vmatpush1.bf16.xpose.msra.mxu0 0
        %2144 = vmatprep.subr.bf16.mxu0 0
        %2145 = vmatpush1.bf16.xpose.msra.mxu0 0
        %2146 = vmatprep.subr.bf16.mxu0 0
        %2147 = vmatpush1.bf16.xpose.msra.mxu0 0
        %2148 = vmatprep.subr.bf16.mxu0 0
        %2149 = vmatpush1.bf16.xpose.msra.mxu0 0
        %2150 = vmatprep.mubr.bf16.mxu0 0
        %2151 = vmatmul.mubr.bf16.gmra.mrb[0].mxu0 %v2113
        %v2152 = vpop.f32.mrb[0].mxu0
        %v2153 = vadd.f32 0.0, %v2152
        %v2154 = vpop.f32.mrb[0].mxu0
        %v2155 = vpop.f32.mrb[0].mxu0
        %v2156 = vadd.f32 0.0, %v2155
        %v2157 = vpop.f32.mrb[0].mxu0
        %2158 = vdwg.mxu0
        %v2159 = vmul.f32 %v2153, 0.35355338
        %v2160 = vmul.f32 %v2156, 0.35355338
        %v2161 = vadd.f32 %v2159, %v1101
        %v2162 = vadd.f32 %v2160, %v1101
        %v2163 = vsel %vm1105, %v2161, -inf
        %2164 = vmax.xlane.f32.xlu0 %v2163
        %v2165 = vpop.xlane.xlu0 %2164
        %v2166 = vsel %vm1105, %v2162, -inf
        %2167 = vmax.xlane.f32.xlu0 %v2166
        %v2168 = vpop.xlane.xlu0 %2167
        %v2169 = vsub.f32 %v2161, %v2165
        %v2170 = vsub.f32 %v2162, %v2168
        %v2171 = vmul.f32 %v2169, 1.442695
        %v2172 = vpow.pop %v2171
        %v2173 = vmul.f32 %v2170, 1.442695
        %v2174 = vpow.pop %v2173
        %v2175 = vsel %vm1105, %v2172, 0.0
        %2176 = vadd.xlane.f32.xlu0 %v2175
        %v2177 = vpop.xlane.xlu0 %2176
        %v2178 = vsel %vm1105, %v2174, 0.0
        %2179 = vadd.xlane.f32.xlu0 %v2178
        %v2180 = vpop.xlane.xlu0 %2179
        %v2181 = vrcp.pop %v2177
        %v2182 = vrcp.pop %v2180
        %v2183 = vmul.f32 %v2172, %v2181
        %v2184 = vmul.f32 %v2174, %v2182
        %v2185 = vpack.c.bf16 %v2184, %v2183
        %2186 = vrot.lane.b32.xlu0 %v1983, 56
        %v2187 = vpop.permute.xlu0 %2186
        %v2190 = vsel %vm1105, %v2185, 0
        %2192 = vmatprep.subr.bf16.mxu0 0
        %2193 = vmatpush1.bf16.msra.mxu0 %v2187
        %2194 = vmatprep.subr.bf16.mxu0 0
        %2195 = vmatpush1.bf16.msra.mxu0 0
        %2196 = vmatprep.subr.bf16.mxu0 0
        %2197 = vmatpush1.bf16.msra.mxu0 0
        %2198 = vmatprep.subr.bf16.mxu0 0
        %2199 = vmatpush1.bf16.msra.mxu0 0
        %2200 = vmatprep.subr.bf16.mxu0 0
        %2201 = vmatpush1.bf16.msra.mxu0 0
        %2202 = vmatprep.subr.bf16.mxu0 0
        %2203 = vmatpush1.bf16.msra.mxu0 0
        %2204 = vmatprep.subr.bf16.mxu0 0
        %2205 = vmatpush1.bf16.msra.mxu0 0
        %2206 = vmatprep.subr.bf16.mxu0 0
        %2207 = vmatpush1.bf16.msra.mxu0 0
        %2208 = vmatprep.subr.bf16.mxu0 0
        %2209 = vmatpush1.bf16.msra.mxu0 0
        %2210 = vmatprep.subr.bf16.mxu0 0
        %2211 = vmatpush1.bf16.msra.mxu0 0
        %2212 = vmatprep.subr.bf16.mxu0 0
        %2213 = vmatpush1.bf16.msra.mxu0 0
        %2214 = vmatprep.subr.bf16.mxu0 0
        %2215 = vmatpush1.bf16.msra.mxu0 0
        %2216 = vmatprep.subr.bf16.mxu0 0
        %2217 = vmatpush1.bf16.msra.mxu0 0
        %2218 = vmatprep.subr.bf16.mxu0 0
        %2219 = vmatpush1.bf16.msra.mxu0 0
        %2220 = vmatprep.subr.bf16.mxu0 0
        %2221 = vmatpush1.bf16.msra.mxu0 0
        %2222 = vmatprep.subr.bf16.mxu0 0
        %2223 = vmatpush1.bf16.msra.mxu0 0
        %2224 = vmatprep.mubr.bf16.mxu0 0
        %2225 = vmatmul.mubr.bf16.gmra.mrb[0].mxu0 %v2190
        %v2226 = vpop.f32.mrb[0].mxu0
        %v2227 = vadd.f32 0.0, %v2226
        %v2228 = vpop.f32.mrb[0].mxu0
        %v2229 = vpop.f32.mrb[0].mxu0
        %v2230 = vadd.f32 0.0, %v2229
        %v2231 = vpop.f32.mrb[0].mxu0
        %2232 = vdwg.mxu0
        %2233 = vrot.lane.b32.xlu0 %v1983, 112
        %v2234 = vpop.permute.xlu0 %2233
        %2235 = vrot.lane.b32.xlu0 %v1983, 80
        %v2236 = vpop.permute.xlu0 %2235
        %v2238 = vsel %vm1047, %v2234, 0
        %v2241 = vsel %vm1047, %v2236, 0
        %2243 = vmatprep.subr.bf16.mxu0 0
        %2244 = vmatpush1.bf16.xpose.msra.mxu0 %v2241
        %2245 = vmatprep.subr.bf16.mxu0 0
        %2246 = vmatpush1.bf16.xpose.msra.mxu0 0
        %2247 = vmatprep.subr.bf16.mxu0 0
        %2248 = vmatpush1.bf16.xpose.msra.mxu0 0
        %2249 = vmatprep.subr.bf16.mxu0 0
        %2250 = vmatpush1.bf16.xpose.msra.mxu0 0
        %2251 = vmatprep.subr.bf16.mxu0 0
        %2252 = vmatpush1.bf16.xpose.msra.mxu0 0
        %2253 = vmatprep.subr.bf16.mxu0 0
        %2254 = vmatpush1.bf16.xpose.msra.mxu0 0
        %2255 = vmatprep.subr.bf16.mxu0 0
        %2256 = vmatpush1.bf16.xpose.msra.mxu0 0
        %2257 = vmatprep.subr.bf16.mxu0 0
        %2258 = vmatpush1.bf16.xpose.msra.mxu0 0
        %2259 = vmatprep.subr.bf16.mxu0 0
        %2260 = vmatpush1.bf16.xpose.msra.mxu0 0
        %2261 = vmatprep.subr.bf16.mxu0 0
        %2262 = vmatpush1.bf16.xpose.msra.mxu0 0
        %2263 = vmatprep.subr.bf16.mxu0 0
        %2264 = vmatpush1.bf16.xpose.msra.mxu0 0
        %2265 = vmatprep.subr.bf16.mxu0 0
        %2266 = vmatpush1.bf16.xpose.msra.mxu0 0
        %2267 = vmatprep.subr.bf16.mxu0 0
        %2268 = vmatpush1.bf16.xpose.msra.mxu0 0
        %2269 = vmatprep.subr.bf16.mxu0 0
        %2270 = vmatpush1.bf16.xpose.msra.mxu0 0
        %2271 = vmatprep.subr.bf16.mxu0 0
        %2272 = vmatpush1.bf16.xpose.msra.mxu0 0
        %2273 = vmatprep.subr.bf16.mxu0 0
        %2274 = vmatpush1.bf16.xpose.msra.mxu0 0
        %2275 = vmatprep.mubr.bf16.mxu0 0
        %2276 = vmatmul.mubr.bf16.gmra.mrb[0].mxu0 %v2238
        %v2277 = vpop.f32.mrb[0].mxu0
        %v2278 = vadd.f32 0.0, %v2277
        %v2279 = vpop.f32.mrb[0].mxu0
        %v2280 = vpop.f32.mrb[0].mxu0
        %v2281 = vadd.f32 0.0, %v2280
        %v2282 = vpop.f32.mrb[0].mxu0
        %2283 = vdwg.mxu0
        %v2284 = vmul.f32 %v2278, 0.35355338
        %v2285 = vmul.f32 %v2281, 0.35355338
        %v2286 = vadd.f32 %v2284, %v1101
        %v2287 = vadd.f32 %v2285, %v1101
        %v2288 = vsel %vm1105, %v2286, -inf
        %2289 = vmax.xlane.f32.xlu0 %v2288
        %v2290 = vpop.xlane.xlu0 %2289
        %v2291 = vsel %vm1105, %v2287, -inf
        %2292 = vmax.xlane.f32.xlu0 %v2291
        %v2293 = vpop.xlane.xlu0 %2292
        %v2294 = vsub.f32 %v2286, %v2290
        %v2295 = vsub.f32 %v2287, %v2293
        %v2296 = vmul.f32 %v2294, 1.442695
        %v2297 = vpow.pop %v2296
        %v2298 = vmul.f32 %v2295, 1.442695
        %v2299 = vpow.pop %v2298
        %v2300 = vsel %vm1105, %v2297, 0.0
        %2301 = vadd.xlane.f32.xlu0 %v2300
        %v2302 = vpop.xlane.xlu0 %2301
        %v2303 = vsel %vm1105, %v2299, 0.0
        %2304 = vadd.xlane.f32.xlu0 %v2303
        %v2305 = vpop.xlane.xlu0 %2304
        %v2306 = vrcp.pop %v2302
        %v2307 = vrcp.pop %v2305
        %v2308 = vmul.f32 %v2297, %v2306
        %v2309 = vmul.f32 %v2299, %v2307
        %v2310 = vpack.c.bf16 %v2309, %v2308
        %2311 = vrot.lane.b32.xlu0 %v1983, 48
        %v2312 = vpop.permute.xlu0 %2311
        %v2315 = vsel %vm1105, %v2310, 0
        %2317 = vmatprep.subr.bf16.mxu0 0
        %2318 = vmatpush1.bf16.msra.mxu0 %v2312
        %2319 = vmatprep.subr.bf16.mxu0 0
        %2320 = vmatpush1.bf16.msra.mxu0 0
        %2321 = vmatprep.subr.bf16.mxu0 0
        %2322 = vmatpush1.bf16.msra.mxu0 0
        %2323 = vmatprep.subr.bf16.mxu0 0
        %2324 = vmatpush1.bf16.msra.mxu0 0
        %2325 = vmatprep.subr.bf16.mxu0 0
        %2326 = vmatpush1.bf16.msra.mxu0 0
        %2327 = vmatprep.subr.bf16.mxu0 0
        %2328 = vmatpush1.bf16.msra.mxu0 0
        %2329 = vmatprep.subr.bf16.mxu0 0
        %2330 = vmatpush1.bf16.msra.mxu0 0
        %2331 = vmatprep.subr.bf16.mxu0 0
        %2332 = vmatpush1.bf16.msra.mxu0 0
        %2333 = vmatprep.subr.bf16.mxu0 0
        %2334 = vmatpush1.bf16.msra.mxu0 0
        %2335 = vmatprep.subr.bf16.mxu0 0
        %2336 = vmatpush1.bf16.msra.mxu0 0
        %2337 = vmatprep.subr.bf16.mxu0 0
        %2338 = vmatpush1.bf16.msra.mxu0 0
        %2339 = vmatprep.subr.bf16.mxu0 0
        %2340 = vmatpush1.bf16.msra.mxu0 0
        %2341 = vmatprep.subr.bf16.mxu0 0
        %2342 = vmatpush1.bf16.msra.mxu0 0
        %2343 = vmatprep.subr.bf16.mxu0 0
        %2344 = vmatpush1.bf16.msra.mxu0 0
        %2345 = vmatprep.subr.bf16.mxu0 0
        %2346 = vmatpush1.bf16.msra.mxu0 0
        %2347 = vmatprep.subr.bf16.mxu0 0
        %2348 = vmatpush1.bf16.msra.mxu0 0
        %2349 = vmatprep.mubr.bf16.mxu0 0
        %2350 = vmatmul.mubr.bf16.gmra.mrb[0].mxu0 %v2315
        %v2351 = vpop.f32.mrb[0].mxu0
        %v2352 = vadd.f32 0.0, %v2351
        %v2353 = vpop.f32.mrb[0].mxu0
        %v2354 = vpop.f32.mrb[0].mxu0
        %v2355 = vadd.f32 0.0, %v2354
        %v2356 = vpop.f32.mrb[0].mxu0
        %2357 = vdwg.mxu0
        %2358 = vrot.lane.b32.xlu0 %v1983, 104
        %v2359 = vpop.permute.xlu0 %2358
        %2360 = vrot.lane.b32.xlu0 %v1983, 72
        %v2361 = vpop.permute.xlu0 %2360
        %v2363 = vsel %vm1047, %v2359, 0
        %v2366 = vsel %vm1047, %v2361, 0
        %2368 = vmatprep.subr.bf16.mxu0 0
        %2369 = vmatpush1.bf16.xpose.msra.mxu0 %v2366
        %2370 = vmatprep.subr.bf16.mxu0 0
        %2371 = vmatpush1.bf16.xpose.msra.mxu0 0
        %2372 = vmatprep.subr.bf16.mxu0 0
        %2373 = vmatpush1.bf16.xpose.msra.mxu0 0
        %2374 = vmatprep.subr.bf16.mxu0 0
        %2375 = vmatpush1.bf16.xpose.msra.mxu0 0
        %2376 = vmatprep.subr.bf16.mxu0 0
        %2377 = vmatpush1.bf16.xpose.msra.mxu0 0
        %2378 = vmatprep.subr.bf16.mxu0 0
        %2379 = vmatpush1.bf16.xpose.msra.mxu0 0
        %2380 = vmatprep.subr.bf16.mxu0 0
        %2381 = vmatpush1.bf16.xpose.msra.mxu0 0
        %2382 = vmatprep.subr.bf16.mxu0 0
        %2383 = vmatpush1.bf16.xpose.msra.mxu0 0
        %2384 = vmatprep.subr.bf16.mxu0 0
        %2385 = vmatpush1.bf16.xpose.msra.mxu0 0
        %2386 = vmatprep.subr.bf16.mxu0 0
        %2387 = vmatpush1.bf16.xpose.msra.mxu0 0
        %2388 = vmatprep.subr.bf16.mxu0 0
        %2389 = vmatpush1.bf16.xpose.msra.mxu0 0
        %2390 = vmatprep.subr.bf16.mxu0 0
        %2391 = vmatpush1.bf16.xpose.msra.mxu0 0
        %2392 = vmatprep.subr.bf16.mxu0 0
        %2393 = vmatpush1.bf16.xpose.msra.mxu0 0
        %2394 = vmatprep.subr.bf16.mxu0 0
        %2395 = vmatpush1.bf16.xpose.msra.mxu0 0
        %2396 = vmatprep.subr.bf16.mxu0 0
        %2397 = vmatpush1.bf16.xpose.msra.mxu0 0
        %2398 = vmatprep.subr.bf16.mxu0 0
        %2399 = vmatpush1.bf16.xpose.msra.mxu0 0
        %2400 = vmatprep.mubr.bf16.mxu0 0
        %2401 = vmatmul.mubr.bf16.gmra.mrb[0].mxu0 %v2363
        %v2402 = vpop.f32.mrb[0].mxu0
        %v2403 = vadd.f32 0.0, %v2402
        %v2404 = vpop.f32.mrb[0].mxu0
        %v2405 = vpop.f32.mrb[0].mxu0
        %v2406 = vadd.f32 0.0, %v2405
        %v2407 = vpop.f32.mrb[0].mxu0
        %2408 = vdwg.mxu0
        %v2409 = vmul.f32 %v2403, 0.35355338
        %v2410 = vmul.f32 %v2406, 0.35355338
        %v2411 = vadd.f32 %v2409, %v1101
        %v2412 = vadd.f32 %v2410, %v1101
        %v2413 = vsel %vm1105, %v2411, -inf
        %2414 = vmax.xlane.f32.xlu0 %v2413
        %v2415 = vpop.xlane.xlu0 %2414
        %v2416 = vsel %vm1105, %v2412, -inf
        %2417 = vmax.xlane.f32.xlu0 %v2416
        %v2418 = vpop.xlane.xlu0 %2417
        %v2419 = vsub.f32 %v2411, %v2415
        %v2420 = vsub.f32 %v2412, %v2418
        %v2421 = vmul.f32 %v2419, 1.442695
        %v2422 = vpow.pop %v2421
        %v2423 = vmul.f32 %v2420, 1.442695
        %v2424 = vpow.pop %v2423
        %v2425 = vsel %vm1105, %v2422, 0.0
        %2426 = vadd.xlane.f32.xlu0 %v2425
        %v2427 = vpop.xlane.xlu0 %2426
        %v2428 = vsel %vm1105, %v2424, 0.0
        %2429 = vadd.xlane.f32.xlu0 %v2428
        %v2430 = vpop.xlane.xlu0 %2429
        %v2431 = vrcp.pop %v2427
        %v2432 = vrcp.pop %v2430
        %v2433 = vmul.f32 %v2422, %v2431
        %v2434 = vmul.f32 %v2424, %v2432
        %v2435 = vpack.c.bf16 %v2434, %v2433
        %2436 = vrot.lane.b32.xlu0 %v1983, 40
        %v2437 = vpop.permute.xlu0 %2436
        %v2440 = vsel %vm1105, %v2435, 0
        %2442 = vmatprep.subr.bf16.mxu0 0
        %2443 = vmatpush1.bf16.msra.mxu0 %v2437
        %2444 = vmatprep.subr.bf16.mxu0 0
        %2445 = vmatpush1.bf16.msra.mxu0 0
        %2446 = vmatprep.subr.bf16.mxu0 0
        %2447 = vmatpush1.bf16.msra.mxu0 0
        %2448 = vmatprep.subr.bf16.mxu0 0
        %2449 = vmatpush1.bf16.msra.mxu0 0
        %2450 = vmatprep.subr.bf16.mxu0 0
        %2451 = vmatpush1.bf16.msra.mxu0 0
        %2452 = vmatprep.subr.bf16.mxu0 0
        %2453 = vmatpush1.bf16.msra.mxu0 0
        %2454 = vmatprep.subr.bf16.mxu0 0
        %2455 = vmatpush1.bf16.msra.mxu0 0
        %2456 = vmatprep.subr.bf16.mxu0 0
        %2457 = vmatpush1.bf16.msra.mxu0 0
        %2458 = vmatprep.subr.bf16.mxu0 0
        %2459 = vmatpush1.bf16.msra.mxu0 0
        %2460 = vmatprep.subr.bf16.mxu0 0
        %2461 = vmatpush1.bf16.msra.mxu0 0
        %2462 = vmatprep.subr.bf16.mxu0 0
        %2463 = vmatpush1.bf16.msra.mxu0 0
        %2464 = vmatprep.subr.bf16.mxu0 0
        %2465 = vmatpush1.bf16.msra.mxu0 0
        %2466 = vmatprep.subr.bf16.mxu0 0
        %2467 = vmatpush1.bf16.msra.mxu0 0
        %2468 = vmatprep.subr.bf16.mxu0 0
        %2469 = vmatpush1.bf16.msra.mxu0 0
        %2470 = vmatprep.subr.bf16.mxu0 0
        %2471 = vmatpush1.bf16.msra.mxu0 0
        %2472 = vmatprep.subr.bf16.mxu0 0
        %2473 = vmatpush1.bf16.msra.mxu0 0
        %2474 = vmatprep.mubr.bf16.mxu0 0
        %2475 = vmatmul.mubr.bf16.gmra.mrb[0].mxu0 %v2440
        %v2476 = vpop.f32.mrb[0].mxu0
        %v2477 = vadd.f32 0.0, %v2476
        %v2478 = vpop.f32.mrb[0].mxu0
        %v2479 = vpop.f32.mrb[0].mxu0
        %v2480 = vadd.f32 0.0, %v2479
        %v2481 = vpop.f32.mrb[0].mxu0
        %2482 = vdwg.mxu0
        %2485 = vrot.lane.b32.xlu0 %v2227, 8
        %v2486 = vpop.permute.xlu0 %2485
        %2487 = vrot.lane.b32.xlu0 %v2230, 8
        %v2488 = vpop.permute.xlu0 %2487
        %2493 = vrot.lane.b32.xlu0 %v2352, 16
        %v2494 = vpop.permute.xlu0 %2493
        %2495 = vrot.lane.b32.xlu0 %v2355, 16
        %v2496 = vpop.permute.xlu0 %2495
        %2501 = vrot.lane.b32.xlu0 %v2477, 24
        %v2502 = vpop.permute.xlu0 %2501
        %2503 = vrot.lane.b32.xlu0 %v2480, 24
        %v2504 = vpop.permute.xlu0 %2503
        %v2507 = vsel %vm1047, %v2102, %v2486
        %v2508 = vsel %vm1047, %v2105, %v2488
        %v2509 = vsel %vm1105, %v2507, %v2494
        %v2510 = vsel %vm1105, %v2508, %v2496
        %v2511 = vsel %vm1579, %v2509, %v2502
        %v2512 = vsel %vm1579, %v2510, %v2504
        %s2513 = scalar_lea.vmem %s8, 16
        %v2514 = vld [vmem:[%s2513] sm:$0xf]
        %v2515 = vld [vmem:[%s2513 + $0x4] sm:$0xf]
        %v2516 = vld [vmem:[%s2513 + $0x8] sm:$0xf]
        %v2517 = vld [vmem:[%s2513 + $0xc] sm:$0xf]
        %s2518 = scalar_lea.vmem %s9, 1
        %v2519 = vld [vmem:[%s2518] sm:$0x1]
        %v2520 = vpack.c.bf16 %v2512, %v2511
        %v2522 = vlaneseq
        %v2523 = vshrl.u32 %v2522, 7
        %v2524 = vsub.s32 0, %v2523
        %v2525 = vrot.slane %v2519, %v2524
        %v2531 = vunpack.c.l.b16 %v2514
        %v2532 = vunpack.c.l.b16 %v2515
        %v2533 = vunpack.c.l.b16 %v2516
        %v2534 = vunpack.c.l.b16 %v2517
        %v2535 = vpack.c.b16 %v2532, %v2531
        %v2536 = vpack.c.b16 %v2534, %v2533
        %v2540 = vsel %vm931, %v2520, 0
        %2542 = vmatprep.subr.bf16.mxu0 0
        %2543 = vmatpush1.bf16.msra.mxu0 %v2535
        %2544 = vmatprep.subr.bf16.mxu0 0
        %2545 = vmatpush1.bf16.msra.mxu0 %v2536
        %2546 = vmatprep.subr.bf16.mxu0 0
        %2547 = vmatpush1.bf16.msra.mxu0 0
        %2548 = vmatprep.subr.bf16.mxu0 0
        %2549 = vmatpush1.bf16.msra.mxu0 0
        %2550 = vmatprep.subr.bf16.mxu0 0
        %2551 = vmatpush1.bf16.msra.mxu0 0
        %2552 = vmatprep.subr.bf16.mxu0 0
        %2553 = vmatpush1.bf16.msra.mxu0 0
        %2554 = vmatprep.subr.bf16.mxu0 0
        %2555 = vmatpush1.bf16.msra.mxu0 0
        %2556 = vmatprep.subr.bf16.mxu0 0
        %2557 = vmatpush1.bf16.msra.mxu0 0
        %2558 = vmatprep.subr.bf16.mxu0 0
        %2559 = vmatpush1.bf16.msra.mxu0 0
        %2560 = vmatprep.subr.bf16.mxu0 0
        %2561 = vmatpush1.bf16.msra.mxu0 0
        %2562 = vmatprep.subr.bf16.mxu0 0
        %2563 = vmatpush1.bf16.msra.mxu0 0
        %2564 = vmatprep.subr.bf16.mxu0 0
        %2565 = vmatpush1.bf16.msra.mxu0 0
        %2566 = vmatprep.subr.bf16.mxu0 0
        %2567 = vmatpush1.bf16.msra.mxu0 0
        %2568 = vmatprep.subr.bf16.mxu0 0
        %2569 = vmatpush1.bf16.msra.mxu0 0
        %2570 = vmatprep.subr.bf16.mxu0 0
        %2571 = vmatpush1.bf16.msra.mxu0 0
        %2572 = vmatprep.subr.bf16.mxu0 0
        %2573 = vmatpush1.bf16.msra.mxu0 0
        %2574 = vmatprep.mubr.bf16.mxu0 0
        %2575 = vmatmul.mubr.bf16.gmra.mrb[0].mxu0 %v2540
        %v2576 = vpop.f32.mrb[0].mxu0
        %v2577 = vadd.f32 %v2525, %v2576
        %v2578 = vpop.f32.mrb[0].mxu0
        %v2579 = vpop.f32.mrb[0].mxu0
        %v2580 = vadd.f32 %v2525, %v2579
        %v2581 = vpop.f32.mrb[0].mxu0
        %2582 = vdwg.mxu0
        %v2583 = vadd.f32 %v1911, %v2577
        %v2584 = vadd.f32 %v1912, %v2580
        %s2585 = scalar_lea.vmem %s10, 1
        %v2586 = vld [vmem:[%s2585] sm:$0x1]
        %s2587 = scalar_lea.vmem %s11, 1
        %v2588 = vld [vmem:[%s2587] sm:$0x1]
        %v2589 = vsel %vm931, %v2583, 0.0
        %2590 = vadd.xlane.f32.xlu0 %v2589
        %v2591 = vpop.xlane.xlu0 %2590
        %v2592 = vsel %vm931, %v2584, 0.0
        %2593 = vadd.xlane.f32.xlu0 %v2592
        %v2594 = vpop.xlane.xlu0 %2593
        %v2595 = vmul.f32 %v2591, %v938
        %v2596 = vmul.f32 %v2594, %v938
        %v2597 = vsub.f32 %v2583, %v2595
        %v2598 = vsub.f32 %v2584, %v2596
        %v2599 = vmul.f32 %v2597, %v2597
        %v2600 = vmul.f32 %v2598, %v2598
        %v2601 = vsel %vm931, %v2599, 0.0
        %2602 = vadd.xlane.f32.xlu0 %v2601
        %v2603 = vpop.xlane.xlu0 %2602
        %v2604 = vsel %vm931, %v2600, 0.0
        %2605 = vadd.xlane.f32.xlu0 %v2604
        %v2606 = vpop.xlane.xlu0 %2605
        %v2607 = vmul.f32 %v2603, %v938
        %v2608 = vmul.f32 %v2606, %v938
        %v2609 = vadd.f32 %v2607, 1e-12
        %v2610 = vadd.f32 %v2608, 1e-12
        %v2611 = vrsqrt.pop %v2609
        %v2612 = vrsqrt.pop %v2610
        %v2613 = vmul.f32 %v2597, %v2611
        %v2614 = vmul.f32 %v2598, %v2612
        %v2616 = vlaneseq
        %v2617 = vshrl.u32 %v2616, 7
        %v2618 = vsub.s32 0, %v2617
        %v2619 = vrot.slane %v2586, %v2618
        %v2621 = vmul.f32 %v2613, %v2619
        %v2622 = vmul.f32 %v2614, %v2619
        %v2624 = vlaneseq
        %v2625 = vshrl.u32 %v2624, 7
        %v2626 = vsub.s32 0, %v2625
        %v2627 = vrot.slane %v2588, %v2626
        %v2629 = vadd.f32 %v2621, %v2627
        %v2630 = vadd.f32 %v2622, %v2627
        %s2631 = scalar_lea.vmem %s12, 16
        %v2632 = vld [vmem:[%s2631] sm:$0xf]
        %v2633 = vld [vmem:[%s2631 + $0x4] sm:$0xf]
        %v2634 = vld [vmem:[%s2631 + $0x8] sm:$0xf]
        %v2635 = vld [vmem:[%s2631 + $0xc] sm:$0xf]
        %s2636 = scalar_lea.vmem %s13, 1
        %v2637 = vld [vmem:[%s2636] sm:$0x1]
        %v2638 = vpack.c.bf16 %v2630, %v2629
        %v2640 = vlaneseq
        %v2641 = vshrl.u32 %v2640, 7
        %v2642 = vsub.s32 0, %v2641
        %v2643 = vrot.slane %v2637, %v2642
        %v2649 = vunpack.c.l.b16 %v2632
        %v2650 = vunpack.c.l.b16 %v2633
        %v2651 = vunpack.c.l.b16 %v2634
        %v2652 = vunpack.c.l.b16 %v2635
        %v2653 = vpack.c.b16 %v2650, %v2649
        %v2654 = vpack.c.b16 %v2652, %v2651
        %v2658 = vsel %vm931, %v2638, 0
        %2660 = vmatprep.subr.bf16.mxu0 0
        %2661 = vmatpush1.bf16.msra.mxu0 %v2653
        %2662 = vmatprep.subr.bf16.mxu0 0
        %2663 = vmatpush1.bf16.msra.mxu0 %v2654
        %2664 = vmatprep.subr.bf16.mxu0 0
        %2665 = vmatpush1.bf16.msra.mxu0 0
        %2666 = vmatprep.subr.bf16.mxu0 0
        %2667 = vmatpush1.bf16.msra.mxu0 0
        %2668 = vmatprep.subr.bf16.mxu0 0
        %2669 = vmatpush1.bf16.msra.mxu0 0
        %2670 = vmatprep.subr.bf16.mxu0 0
        %2671 = vmatpush1.bf16.msra.mxu0 0
        %2672 = vmatprep.subr.bf16.mxu0 0
        %2673 = vmatpush1.bf16.msra.mxu0 0
        %2674 = vmatprep.subr.bf16.mxu0 0
        %2675 = vmatpush1.bf16.msra.mxu0 0
        %2676 = vmatprep.subr.bf16.mxu0 0
        %2677 = vmatpush1.bf16.msra.mxu0 0
        %2678 = vmatprep.subr.bf16.mxu0 0
        %2679 = vmatpush1.bf16.msra.mxu0 0
        %2680 = vmatprep.subr.bf16.mxu0 0
        %2681 = vmatpush1.bf16.msra.mxu0 0
        %2682 = vmatprep.subr.bf16.mxu0 0
        %2683 = vmatpush1.bf16.msra.mxu0 0
        %2684 = vmatprep.subr.bf16.mxu0 0
        %2685 = vmatpush1.bf16.msra.mxu0 0
        %2686 = vmatprep.subr.bf16.mxu0 0
        %2687 = vmatpush1.bf16.msra.mxu0 0
        %2688 = vmatprep.subr.bf16.mxu0 0
        %2689 = vmatpush1.bf16.msra.mxu0 0
        %2690 = vmatprep.subr.bf16.mxu0 0
        %2691 = vmatpush1.bf16.msra.mxu0 0
        %2692 = vmatprep.mubr.bf16.mxu0 0
        %2693 = vmatmul.mubr.bf16.gmra.mrb[0].mxu0 %v2658
        %v2694 = vpop.f32.mrb[0].mxu0
        %v2695 = vadd.f32 %v2643, %v2694
        %v2696 = vpop.f32.mrb[0].mxu0
        %v2697 = vpop.f32.mrb[0].mxu0
        %v2698 = vadd.f32 %v2643, %v2697
        %v2699 = vpop.f32.mrb[0].mxu0
        %2700 = vdwg.mxu0
        %v2701 = vmul.f32 %v2695, %v2695
        %v2702 = vmul.f32 %v2698, %v2698
        %v2703 = vmul.f32 %v2695, %v2701
        %v2704 = vmul.f32 %v2698, %v2702
        %v2705 = vmul.f32 %v2703, 0.044715
        %v2706 = vmul.f32 %v2704, 0.044715
        %v2707 = vadd.f32 %v2695, %v2705
        %v2708 = vadd.f32 %v2698, %v2706
        %v2709 = vmul.f32 %v2707, 0.7978846
        %v2710 = vmul.f32 %v2708, 0.7978846
        %v2711 = vtanh.pop %v2709
        %v2712 = vtanh.pop %v2710
        %v2713 = vadd.f32 %v2711, 1.0
        %v2714 = vadd.f32 %v2712, 1.0
        %v2715 = vmul.f32 %v2713, 0.5
        %v2716 = vmul.f32 %v2714, 0.5
        %v2717 = vmul.f32 %v2695, %v2715
        %v2718 = vmul.f32 %v2698, %v2716
        %s2719 = scalar_lea.vmem %s14, 32
        %v2720 = vld [vmem:[%s2719] sm:$0xf]
        %v2721 = vld [vmem:[%s2719 + $0x4] sm:$0xf]
        %v2722 = vld [vmem:[%s2719 + $0x8] sm:$0xf]
        %v2723 = vld [vmem:[%s2719 + $0xc] sm:$0xf]
        %v2724 = vld [vmem:[%s2719 + $0x10] sm:$0xf]
        %v2725 = vld [vmem:[%s2719 + $0x14] sm:$0xf]
        %v2726 = vld [vmem:[%s2719 + $0x18] sm:$0xf]
        %v2727 = vld [vmem:[%s2719 + $0x1c] sm:$0xf]
        %s2728 = scalar_lea.vmem %s15, 1
        %v2729 = vld [vmem:[%s2728] sm:$0x1]
        %v2730 = vpack.c.bf16 %v2718, %v2717
        %v2732 = vlaneseq
        %v2733 = vshrl.u32 %v2732, 7
        %v2734 = vsub.s32 0, %v2733
        %v2735 = vrot.slane %v2729, %v2734
        %v2745 = vunpack.c.l.b16 %v2720
        %v2746 = vunpack.c.l.b16 %v2721
        %v2747 = vunpack.c.l.b16 %v2722
        %v2748 = vunpack.c.l.b16 %v2723
        %v2749 = vunpack.c.l.b16 %v2724
        %v2750 = vunpack.c.l.b16 %v2725
        %v2751 = vunpack.c.l.b16 %v2726
        %v2752 = vunpack.c.l.b16 %v2727
        %v2753 = vpack.c.b16 %v2746, %v2745
        %v2754 = vpack.c.b16 %v2748, %v2747
        %v2755 = vpack.c.b16 %v2750, %v2749
        %v2756 = vpack.c.b16 %v2752, %v2751
        %v2762 = vsel %vm1822, %v2730, 0
        %2764 = vmatprep.subr.bf16.mxu0 0
        %2765 = vmatpush1.bf16.msra.mxu0 %v2753
        %2766 = vmatprep.subr.bf16.mxu0 0
        %2767 = vmatpush1.bf16.msra.mxu0 %v2754
        %2768 = vmatprep.subr.bf16.mxu0 0
        %2769 = vmatpush1.bf16.msra.mxu0 %v2755
        %2770 = vmatprep.subr.bf16.mxu0 0
        %2771 = vmatpush1.bf16.msra.mxu0 %v2756
        %2772 = vmatprep.subr.bf16.mxu0 0
        %2773 = vmatpush1.bf16.msra.mxu0 0
        %2774 = vmatprep.subr.bf16.mxu0 0
        %2775 = vmatpush1.bf16.msra.mxu0 0
        %2776 = vmatprep.subr.bf16.mxu0 0
        %2777 = vmatpush1.bf16.msra.mxu0 0
        %2778 = vmatprep.subr.bf16.mxu0 0
        %2779 = vmatpush1.bf16.msra.mxu0 0
        %2780 = vmatprep.subr.bf16.mxu0 0
        %2781 = vmatpush1.bf16.msra.mxu0 0
        %2782 = vmatprep.subr.bf16.mxu0 0
        %2783 = vmatpush1.bf16.msra.mxu0 0
        %2784 = vmatprep.subr.bf16.mxu0 0
        %2785 = vmatpush1.bf16.msra.mxu0 0
        %2786 = vmatprep.subr.bf16.mxu0 0
        %2787 = vmatpush1.bf16.msra.mxu0 0
        %2788 = vmatprep.subr.bf16.mxu0 0
        %2789 = vmatpush1.bf16.msra.mxu0 0
        %2790 = vmatprep.subr.bf16.mxu0 0
        %2791 = vmatpush1.bf16.msra.mxu0 0
        %2792 = vmatprep.subr.bf16.mxu0 0
        %2793 = vmatpush1.bf16.msra.mxu0 0
        %2794 = vmatprep.subr.bf16.mxu0 0
        %2795 = vmatpush1.bf16.msra.mxu0 0
        %2796 = vmatprep.mubr.bf16.mxu0 0
        %2797 = vmatmul.mubr.bf16.gmra.mrb[0].mxu0 %v2762
        %v2798 = vpop.f32.mrb[0].mxu0
        %v2799 = vadd.f32 %v2735, %v2798
        %v2800 = vpop.f32.mrb[0].mxu0
        %v2801 = vpop.f32.mrb[0].mxu0
        %v2802 = vadd.f32 %v2735, %v2801
        %v2803 = vpop.f32.mrb[0].mxu0
        %2804 = vdwg.mxu0
        %v2805 = vadd.f32 %v2629, %v2799
        %v2806 = vadd.f32 %v2630, %v2802
        %s2807 = scalar_lea.vmem %s16, 1
        %v2808 = vld [vmem:[%s2807] sm:$0x1]
        %s2809 = scalar_lea.vmem %s17, 1
        %v2810 = vld [vmem:[%s2809] sm:$0x1]
        %v2811 = vsel %vm931, %v2805, 0.0
        %2812 = vadd.xlane.f32.xlu0 %v2811
        %v2813 = vpop.xlane.xlu0 %2812
        %v2814 = vsel %vm931, %v2806, 0.0
        %2815 = vadd.xlane.f32.xlu0 %v2814
        %v2816 = vpop.xlane.xlu0 %2815
        %v2817 = vmul.f32 %v2813, %v938
        %v2818 = vmul.f32 %v2816, %v938
        %v2819 = vsub.f32 %v2805, %v2817
        %v2820 = vsub.f32 %v2806, %v2818
        %v2821 = vmul.f32 %v2819, %v2819
        %v2822 = vmul.f32 %v2820, %v2820
        %v2823 = vsel %vm931, %v2821, 0.0
        %2824 = vadd.xlane.f32.xlu0 %v2823
        %v2825 = vpop.xlane.xlu0 %2824
        %v2826 = vsel %vm931, %v2822, 0.0
        %2827 = vadd.xlane.f32.xlu0 %v2826
        %v2828 = vpop.xlane.xlu0 %2827
        %v2829 = vmul.f32 %v2825, %v938
        %v2830 = vmul.f32 %v2828, %v938
        %v2831 = vadd.f32 %v2829, 1e-12
        %v2832 = vadd.f32 %v2830, 1e-12
        %v2833 = vrsqrt.pop %v2831
        %v2834 = vrsqrt.pop %v2832
        %v2835 = vmul.f32 %v2819, %v2833
        %v2836 = vmul.f32 %v2820, %v2834
        %v2838 = vlaneseq
        %v2839 = vshrl.u32 %v2838, 7
        %v2840 = vsub.s32 0, %v2839
        %v2841 = vrot.slane %v2808, %v2840
        %v2843 = vmul.f32 %v2835, %v2841
        %v2844 = vmul.f32 %v2836, %v2841
        %v2846 = vlaneseq
        %v2847 = vshrl.u32 %v2846, 7
        %v2848 = vsub.s32 0, %v2847
        %v2849 = vrot.slane %v2810, %v2848
        %v2851 = vadd.f32 %v2843, %v2849
        %v2852 = vadd.f32 %v2844, %v2849
        %2853 = vst.msk [vmem:[%s877] sm:$0xff] %vm931, %v2851
        %2854 = vst.msk [vmem:[%s877 + $0x8] sm:$0xff] %vm931, %v2852
        %v2855 = vld [vmem:[%s18] sm:$0xff]
        %v2856 = vld [vmem:[%s18 + $0x8] sm:$0xff]
        %v2857 = vld [vmem:[%s18 + $0x10] sm:$0xff]
        %v2858 = vld [vmem:[%s18 + $0x18] sm:$0xff]
        %v2859 = vld [vmem:[%s19] sm:$0x1]
        %v2861 = vsel %vm931, %v2851, 0
        %2863 = vmatprep.subr.mxu0 0.0
        %2864 = vmatpush1.msra.mxu0 %v2855
        %2865 = vmatprep.subr.mxu0 0.0
        %2866 = vmatpush1.msra.mxu0 %v2856
        %2867 = vmatprep.subr.mxu0 0.0
        %2868 = vmatpush1.msra.mxu0 %v2857
        %2869 = vmatprep.subr.mxu0 0.0
        %2870 = vmatpush1.msra.mxu0 %v2858
        %2871 = vmatprep.subr.mxu0 0.0
        %2872 = vmatpush1.msra.mxu0 0.0
        %2873 = vmatprep.subr.mxu0 0.0
        %2874 = vmatpush1.msra.mxu0 0.0
        %2875 = vmatprep.subr.mxu0 0.0
        %2876 = vmatpush1.msra.mxu0 0.0
        %2877 = vmatprep.subr.mxu0 0.0
        %2878 = vmatpush1.msra.mxu0 0.0
        %2879 = vmatprep.subr.mxu0 0.0
        %2880 = vmatpush1.msra.mxu0 0.0
        %2881 = vmatprep.subr.mxu0 0.0
        %2882 = vmatpush1.msra.mxu0 0.0
        %2883 = vmatprep.subr.mxu0 0.0
        %2884 = vmatpush1.msra.mxu0 0.0
        %2885 = vmatprep.subr.mxu0 0.0
        %2886 = vmatpush1.msra.mxu0 0.0
        %2887 = vmatprep.subr.mxu0 0.0
        %2888 = vmatpush1.msra.mxu0 0.0
        %2889 = vmatprep.subr.mxu0 0.0
        %2890 = vmatpush1.msra.mxu0 0.0
        %2891 = vmatprep.subr.mxu0 0.0
        %2892 = vmatpush1.msra.mxu0 0.0
        %2893 = vmatprep.subr.mxu0 0.0
        %2894 = vmatpush1.msra.mxu0 0.0
        %2895 = vmatprep.subr.mxu0 0.0
        %2896 = vmatpush1.msra.mxu0 0.0
        %2897 = vmatprep.subr.mxu0 0.0
        %2898 = vmatpush1.msra.mxu0 0.0
        %2899 = vmatprep.subr.mxu0 0.0
        %2900 = vmatpush1.msra.mxu0 0.0
        %2901 = vmatprep.subr.mxu0 0.0
        %2902 = vmatpush1.msra.mxu0 0.0
        %2903 = vmatprep.subr.mxu0 0.0
        %2904 = vmatpush1.msra.mxu0 0.0
        %2905 = vmatprep.subr.mxu0 0.0
        %2906 = vmatpush1.msra.mxu0 0.0
        %2907 = vmatprep.subr.mxu0 0.0
        %2908 = vmatpush1.msra.mxu0 0.0
        %2909 = vmatprep.subr.mxu0 0.0
        %2910 = vmatpush1.msra.mxu0 0.0
        %2911 = vmatprep.subr.mxu0 0.0
        %2912 = vmatpush1.msra.mxu0 0.0
        %2913 = vmatprep.subr.mxu0 0.0
        %2914 = vmatpush1.msra.mxu0 0.0
        %2915 = vmatprep.subr.mxu0 0.0
        %2916 = vmatpush1.msra.mxu0 0.0
        %2917 = vmatprep.subr.mxu0 0.0
        %2918 = vmatpush1.msra.mxu0 0.0
        %2919 = vmatprep.subr.mxu0 0.0
        %2920 = vmatpush1.msra.mxu0 0.0
        %2921 = vmatprep.subr.mxu0 0.0
        %2922 = vmatpush1.msra.mxu0 0.0
        %2923 = vmatprep.subr.mxu0 0.0
        %2924 = vmatpush1.msra.mxu0 0.0
        %2925 = vmatprep.subr.mxu0 0.0
        %2926 = vmatpush1.msra.mxu0 0.0
        %2927 = vmatprep.mubr.f32.mxu0 0.0
        %2928 = vmatmul.mubr.f32.gmra.mrb[0].mxu0 %v2861
        %v2929 = vpop.f32.mrb[0].mxu0
        %v2930 = vadd.f32 %v2859, %v2929
        %v2931 = vpop.f32.mrb[0].mxu0
        %2932 = vdwg.mxu0
        %v2933 = vtanh.pop %v2930
        %vm2934 = vcmask 253952
        %2935 = vst.msk [vmem:[%s883] sm:$0x1] %vm2934, %v2933
        %v2936 = vld [vmem:[%s22] sm:$0xff]
        %v2937 = vld [vmem:[%s22 + $0x8] sm:$0xff]
        %v2938 = vld [vmem:[%s22 + $0x10] sm:$0xff]
        %v2939 = vld [vmem:[%s22 + $0x18] sm:$0xff]
        %v2940 = vld [vmem:[%s23] sm:$0x1]
        %v2942 = vsel %vm931, %v2933, 0
        %2944 = vmatprep.subr.mxu0 0.0
        %2945 = vmatpush1.msra.mxu0 %v2936
        %2946 = vmatprep.subr.mxu0 0.0
        %2947 = vmatpush1.msra.mxu0 %v2937
        %2948 = vmatprep.subr.mxu0 0.0
        %2949 = vmatpush1.msra.mxu0 %v2938
        %2950 = vmatprep.subr.mxu0 0.0
        %2951 = vmatpush1.msra.mxu0 %v2939
        %2952 = vmatprep.subr.mxu0 0.0
        %2953 = vmatpush1.msra.mxu0 0.0
        %2954 = vmatprep.subr.mxu0 0.0
        %2955 = vmatpush1.msra.mxu0 0.0
        %2956 = vmatprep.subr.mxu0 0.0
        %2957 = vmatpush1.msra.mxu0 0.0
        %2958 = vmatprep.subr.mxu0 0.0
        %2959 = vmatpush1.msra.mxu0 0.0
        %2960 = vmatprep.subr.mxu0 0.0
        %2961 = vmatpush1.msra.mxu0 0.0
        %2962 = vmatprep.subr.mxu0 0.0
        %2963 = vmatpush1.msra.mxu0 0.0
        %2964 = vmatprep.subr.mxu0 0.0
        %2965 = vmatpush1.msra.mxu0 0.0
        %2966 = vmatprep.subr.mxu0 0.0
        %2967 = vmatpush1.msra.mxu0 0.0
        %2968 = vmatprep.subr.mxu0 0.0
        %2969 = vmatpush1.msra.mxu0 0.0
        %2970 = vmatprep.subr.mxu0 0.0
        %2971 = vmatpush1.msra.mxu0 0.0
        %2972 = vmatprep.subr.mxu0 0.0
        %2973 = vmatpush1.msra.mxu0 0.0
        %2974 = vmatprep.subr.mxu0 0.0
        %2975 = vmatpush1.msra.mxu0 0.0
        %2976 = vmatprep.subr.mxu0 0.0
        %2977 = vmatpush1.msra.mxu0 0.0
        %2978 = vmatprep.subr.mxu0 0.0
        %2979 = vmatpush1.msra.mxu0 0.0
        %2980 = vmatprep.subr.mxu0 0.0
        %2981 = vmatpush1.msra.mxu0 0.0
        %2982 = vmatprep.subr.mxu0 0.0
        %2983 = vmatpush1.msra.mxu0 0.0
        %2984 = vmatprep.subr.mxu0 0.0
        %2985 = vmatpush1.msra.mxu0 0.0
        %2986 = vmatprep.subr.mxu0 0.0
        %2987 = vmatpush1.msra.mxu0 0.0
        %2988 = vmatprep.subr.mxu0 0.0
        %2989 = vmatpush1.msra.mxu0 0.0
        %2990 = vmatprep.subr.mxu0 0.0
        %2991 = vmatpush1.msra.mxu0 0.0
        %2992 = vmatprep.subr.mxu0 0.0
        %2993 = vmatpush1.msra.mxu0 0.0
        %2994 = vmatprep.subr.mxu0 0.0
        %2995 = vmatpush1.msra.mxu0 0.0
        %2996 = vmatprep.subr.mxu0 0.0
        %2997 = vmatpush1.msra.mxu0 0.0
        %2998 = vmatprep.subr.mxu0 0.0
        %2999 = vmatpush1.msra.mxu0 0.0
        %3000 = vmatprep.subr.mxu0 0.0
        %3001 = vmatpush1.msra.mxu0 0.0
        %3002 = vmatprep.subr.mxu0 0.0
        %3003 = vmatpush1.msra.mxu0 0.0
        %3004 = vmatprep.subr.mxu0 0.0
        %3005 = vmatpush1.msra.mxu0 0.0
        %3006 = vmatprep.subr.mxu0 0.0
        %3007 = vmatpush1.msra.mxu0 0.0
        %3008 = vmatprep.mubr.f32.mxu0 0.0
        %3009 = vmatmul.mubr.f32.gmra.mrb[0].mxu0 %v2942
        %v3010 = vpop.f32.mrb[0].mxu0
        %v3011 = vadd.f32 %v2940, %v3010
        %v3012 = vpop.f32.mrb[0].mxu0
        %3013 = vdwg.mxu0
        %vm3014 = vcmask 32768
        %3015 = vst.msk [vmem:[%s895] sm:$0x1] %vm3014, %v3011
        %v3016 = vld [vmem:[%s913] sm:$0x3f]
        %v3017 = vlaneseq
        %v3018 = vand.u32 %v3017, 127
        %3019 = vset.pattern.permute.xlu0 0
        %3020 = vperm.xlu0 %3019, %v3016
        %v3021 = vpop.permute.xlu0 %3020
        %vm3022 = vcmp.eq.s32.totalorder %v3018, %v3021
        %v3023 = vsel %vm3022, 1, 0
        %v3024 = vcvt.s32.f32 %v3023
        %v3026 = vsel %vm1105, %v3024, 0
        %3028 = vmatprep.subr.mxu0 0.0
        %3029 = vmatpush1.msra.mxu0 %v2851
        %3030 = vmatprep.subr.mxu0 0.0
        %3031 = vmatpush1.msra.mxu0 %v2852
        %3032 = vmatprep.subr.mxu0 0.0
        %3033 = vmatpush1.msra.mxu0 0.0
        %3034 = vmatprep.subr.mxu0 0.0
        %3035 = vmatpush1.msra.mxu0 0.0
        %3036 = vmatprep.subr.mxu0 0.0
        %3037 = vmatpush1.msra.mxu0 0.0
        %3038 = vmatprep.subr.mxu0 0.0
        %3039 = vmatpush1.msra.mxu0 0.0
        %3040 = vmatprep.subr.mxu0 0.0
        %3041 = vmatpush1.msra.mxu0 0.0
        %3042 = vmatprep.subr.mxu0 0.0
        %3043 = vmatpush1.msra.mxu0 0.0
        %3044 = vmatprep.subr.mxu0 0.0
        %3045 = vmatpush1.msra.mxu0 0.0
        %3046 = vmatprep.subr.mxu0 0.0
        %3047 = vmatpush1.msra.mxu0 0.0
        %3048 = vmatprep.subr.mxu0 0.0
        %3049 = vmatpush1.msra.mxu0 0.0
        %3050 = vmatprep.subr.mxu0 0.0
        %3051 = vmatpush1.msra.mxu0 0.0
        %3052 = vmatprep.subr.mxu0 0.0
        %3053 = vmatpush1.msra.mxu0 0.0
        %3054 = vmatprep.subr.mxu0 0.0
        %3055 = vmatpush1.msra.mxu0 0.0
        %3056 = vmatprep.subr.mxu0 0.0
        %3057 = vmatpush1.msra.mxu0 0.0
        %3058 = vmatprep.subr.mxu0 0.0
        %3059 = vmatpush1.msra.mxu0 0.0
        %3060 = vmatprep.subr.mxu0 0.0
        %3061 = vmatpush1.msra.mxu0 0.0
        %3062 = vmatprep.subr.mxu0 0.0
        %3063 = vmatpush1.msra.mxu0 0.0
        %3064 = vmatprep.subr.mxu0 0.0
        %3065 = vmatpush1.msra.mxu0 0.0
        %3066 = vmatprep.subr.mxu0 0.0
        %3067 = vmatpush1.msra.mxu0 0.0
        %3068 = vmatprep.subr.mxu0 0.0
        %3069 = vmatpush1.msra.mxu0 0.0
        %3070 = vmatprep.subr.mxu0 0.0
        %3071 = vmatpush1.msra.mxu0 0.0
        %3072 = vmatprep.subr.mxu0 0.0
        %3073 = vmatpush1.msra.mxu0 0.0
        %3074 = vmatprep.subr.mxu0 0.0
        %3075 = vmatpush1.msra.mxu0 0.0
        %3076 = vmatprep.subr.mxu0 0.0
        %3077 = vmatpush1.msra.mxu0 0.0
        %3078 = vmatprep.subr.mxu0 0.0
        %3079 = vmatpush1.msra.mxu0 0.0
        %3080 = vmatprep.subr.mxu0 0.0
        %3081 = vmatpush1.msra.mxu0 0.0
        %3082 = vmatprep.subr.mxu0 0.0
        %3083 = vmatpush1.msra.mxu0 0.0
        %3084 = vmatprep.subr.mxu0 0.0
        %3085 = vmatpush1.msra.mxu0 0.0
        %3086 = vmatprep.subr.mxu0 0.0
        %3087 = vmatpush1.msra.mxu0 0.0
        %3088 = vmatprep.subr.mxu0 0.0
        %3089 = vmatpush1.msra.mxu0 0.0
        %3090 = vmatprep.subr.mxu0 0.0
        %3091 = vmatpush1.msra.mxu0 0.0
        %3092 = vmatprep.mubr.f32.mxu0 0.0
        %3093 = vmatmul.mubr.f32.gmra.mrb[0].mxu0 %v3026
        %v3094 = vpop.f32.mrb[0].mxu0
        %v3095 = vadd.f32 0.0, %v3094
        %v3096 = vpop.f32.mrb[0].mxu0
        %3097 = vdwg.mxu0
        %v3098 = vld [vmem:[%s20] sm:$0xff]
        %v3099 = vld [vmem:[%s20 + $0x8] sm:$0xff]
        %v3100 = vld [vmem:[%s20 + $0x10] sm:$0xff]
        %v3101 = vld [vmem:[%s20 + $0x18] sm:$0xff]
        %v3102 = vld [vmem:[%s21] sm:$0x1]
        %v3104 = vlaneseq
        %v3105 = vshrl.u32 %v3104, 7
        %v3106 = vsub.s32 0, %v3105
        %v3107 = vrot.slane %v3102, %v3106
        %v3110 = vsel %vm931, %v3095, 0
        %3112 = vmatprep.subr.mxu0 0.0
        %3113 = vmatpush1.msra.mxu0 %v3098
        %3114 = vmatprep.subr.mxu0 0.0
        %3115 = vmatpush1.msra.mxu0 %v3099
        %3116 = vmatprep.subr.mxu0 0.0
        %3117 = vmatpush1.msra.mxu0 %v3100
        %3118 = vmatprep.subr.mxu0 0.0
        %3119 = vmatpush1.msra.mxu0 %v3101
        %3120 = vmatprep.subr.mxu0 0.0
        %3121 = vmatpush1.msra.mxu0 0.0
        %3122 = vmatprep.subr.mxu0 0.0
        %3123 = vmatpush1.msra.mxu0 0.0
        %3124 = vmatprep.subr.mxu0 0.0
        %3125 = vmatpush1.msra.mxu0 0.0
        %3126 = vmatprep.subr.mxu0 0.0
        %3127 = vmatpush1.msra.mxu0 0.0
        %3128 = vmatprep.subr.mxu0 0.0
        %3129 = vmatpush1.msra.mxu0 0.0
        %3130 = vmatprep.subr.mxu0 0.0
        %3131 = vmatpush1.msra.mxu0 0.0
        %3132 = vmatprep.subr.mxu0 0.0
        %3133 = vmatpush1.msra.mxu0 0.0
        %3134 = vmatprep.subr.mxu0 0.0
        %3135 = vmatpush1.msra.mxu0 0.0
        %3136 = vmatprep.subr.mxu0 0.0
        %3137 = vmatpush1.msra.mxu0 0.0
        %3138 = vmatprep.subr.mxu0 0.0
        %3139 = vmatpush1.msra.mxu0 0.0
        %3140 = vmatprep.subr.mxu0 0.0
        %3141 = vmatpush1.msra.mxu0 0.0
        %3142 = vmatprep.subr.mxu0 0.0
        %3143 = vmatpush1.msra.mxu0 0.0
        %3144 = vmatprep.subr.mxu0 0.0
        %3145 = vmatpush1.msra.mxu0 0.0
        %3146 = vmatprep.subr.mxu0 0.0
        %3147 = vmatpush1.msra.mxu0 0.0
        %3148 = vmatprep.subr.mxu0 0.0
        %3149 = vmatpush1.msra.mxu0 0.0
        %3150 = vmatprep.subr.mxu0 0.0
        %3151 = vmatpush1.msra.mxu0 0.0
        %3152 = vmatprep.subr.mxu0 0.0
        %3153 = vmatpush1.msra.mxu0 0.0
        %3154 = vmatprep.subr.mxu0 0.0
        %3155 = vmatpush1.msra.mxu0 0.0
        %3156 = vmatprep.subr.mxu0 0.0
        %3157 = vmatpush1.msra.mxu0 0.0
        %3158 = vmatprep.subr.mxu0 0.0
        %3159 = vmatpush1.msra.mxu0 0.0
        %3160 = vmatprep.subr.mxu0 0.0
        %3161 = vmatpush1.msra.mxu0 0.0
        %3162 = vmatprep.subr.mxu0 0.0
        %3163 = vmatpush1.msra.mxu0 0.0
        %3164 = vmatprep.subr.mxu0 0.0
        %3165 = vmatpush1.msra.mxu0 0.0
        %3166 = vmatprep.subr.mxu0 0.0
        %3167 = vmatpush1.msra.mxu0 0.0
        %3168 = vmatprep.subr.mxu0 0.0
        %3169 = vmatpush1.msra.mxu0 0.0
        %3170 = vmatprep.subr.mxu0 0.0
        %3171 = vmatpush1.msra.mxu0 0.0
        %3172 = vmatprep.subr.mxu0 0.0
        %3173 = vmatpush1.msra.mxu0 0.0
        %3174 = vmatprep.subr.mxu0 0.0
        %3175 = vmatpush1.msra.mxu0 0.0
        %3176 = vmatprep.mubr.f32.mxu0 0.0
        %3177 = vmatmul.mubr.f32.gmra.mrb[0].mxu0 %v3110
        %v3178 = vpop.f32.mrb[0].mxu0
        %v3179 = vadd.f32 %v3107, %v3178
        %v3180 = vpop.f32.mrb[0].mxu0
        %3181 = vdwg.mxu0
        %vm3182 = vcmask 29696
        %v3183 = vsel %vm3182, %v3179, -inf
        %v3184 = vrot.slane %v3183, 4
        %v3185 = vmax.f32 %v3183, %v3184
        %v3186 = vrot.slane %v3185, 2
        %v3187 = vmax.f32 %v3185, %v3186
        %v3188 = vrot.slane %v3187, 1
        %v3189 = vmax.f32 %v3187, %v3188
        %v3190 = vsub.f32 %v3179, %v3189
        %v3191 = vmul.f32 %v3190, 1.442695
        %v3192 = vpow.pop %v3191
        %v3193 = vsel %vm3182, %v3192, 0.0
        %v3194 = vrot.slane %v3193, 4
        %v3195 = vadd.f32 %v3193, %v3194
        %v3196 = vrot.slane %v3195, 2
        %v3197 = vadd.f32 %v3195, %v3196
        %v3198 = vrot.slane %v3197, 1
        %v3199 = vadd.f32 %v3197, %v3198
        %v3200 = vrcp.pop %v3199
        %v3201 = vmul.f32 %v3192, %v3200
        %3202 = vst.msk [vmem:[%s920] sm:$0x3f] %vm3182, %v3201
        %v3203 = vsel %vm3182, %v3201, -inf
        %3204 = vmax.xlane.f32.xlu0 %v3203
        %v3205 = vpop.xlane.xlu0 %3204
        %vm3206 = vcmp.ge.f32.partialorder %v3201, %v3205
        %v3207 = vsel %vm3206, %v3018, 4
        %v3208 = vsel %vm3182, %v3207, 2147483647
        %v3209 = vand.u32 %v3208, 65535
        %v3210 = vshra.s32 %v3208, 16
        %v3211 = vcvt.s32.f32 %v3209
        %v3212 = vcvt.s32.f32 %v3210
        %3213 = vmin.xlane.f32.xlu0 %v3212
        %v3214 = vpop.xlane.xlu0 %3213
        %vm3215 = vcmp.eq.f32.partialorder %v3212, %v3214
        %v3216 = vsel %vm3215, %v3211, inf
        %3217 = vmin.xlane.f32.xlu0 %v3216
        %v3218 = vpop.xlane.xlu0 %3217
        %v3219 = vcvt.f32.s32 %v3218
        %v3220 = vcvt.f32.s32 %v3214
        %v3221 = vshll.u32 %v3220, 16
        %v3222 = vadd.s32 %v3221, %v3219
        %vm3223 = vcmp.eq.s32.totalorder %v3018, %v3222
        %v3224 = vsel %vm3223, 1, 0
        %v3225 = vcvt.s32.f32 %v3224
        %vm3226 = vcmask 46080
        %v3227 = vsel %vm3226, %v3225, -inf
        %v3228 = vrot.slane %v3227, 4
        %v3229 = vmax.f32 %v3227, %v3228
        %v3230 = vrot.slane %v3229, 2
        %v3231 = vmax.f32 %v3229, %v3230
        %v3232 = vrot.slane %v3231, 1
        %v3233 = vmax.f32 %v3231, %v3232
        %vm3234 = vcmp.eq.f32.partialorder %v3233, 1.0
        %v3235 = vsel %vm3234, 1, 0
        %v3236 = vcvt.s32.f32 %v3235
        %v3237 = vlaneseq
        %v3238 = vshrl.u32 %v3237, 7
        %vm3239 = vcmp.le.s32.totalorder %v3238, %v3018
        %v3240 = vsel %vm3239, 1, 0
        %v3241 = vcvt.s32.f32 %v3240
        %vm3242 = vcmask 48128
        %v3244 = vsel %vm3242, %v3236, 0
        %vm3246 = vcmask 1045504
        %v3248 = vsel %vm3246, %v3241, 0
        %3250 = vmatprep.subr.mxu0 0.0
        %3251 = vmatpush1.msra.mxu0 %v3248
        %3252 = vmatprep.subr.mxu0 0.0
        %3253 = vmatpush1.msra.mxu0 0.0
        %3254 = vmatprep.subr.mxu0 0.0
        %3255 = vmatpush1.msra.mxu0 0.0
        %3256 = vmatprep.subr.mxu0 0.0
        %3257 = vmatpush1.msra.mxu0 0.0
        %3258 = vmatprep.subr.mxu0 0.0
        %3259 = vmatpush1.msra.mxu0 0.0
        %3260 = vmatprep.subr.mxu0 0.0
        %3261 = vmatpush1.msra.mxu0 0.0
        %3262 = vmatprep.subr.mxu0 0.0
        %3263 = vmatpush1.msra.mxu0 0.0
        %3264 = vmatprep.subr.mxu0 0.0
        %3265 = vmatpush1.msra.mxu0 0.0
        %3266 = vmatprep.subr.mxu0 0.0
        %3267 = vmatpush1.msra.mxu0 0.0
        %3268 = vmatprep.subr.mxu0 0.0
        %3269 = vmatpush1.msra.mxu0 0.0
        %3270 = vmatprep.subr.mxu0 0.0
        %3271 = vmatpush1.msra.mxu0 0.0
        %3272 = vmatprep.subr.mxu0 0.0
        %3273 = vmatpush1.msra.mxu0 0.0
        %3274 = vmatprep.subr.mxu0 0.0
        %3275 = vmatpush1.msra.mxu0 0.0
        %3276 = vmatprep.subr.mxu0 0.0
        %3277 = vmatpush1.msra.mxu0 0.0
        %3278 = vmatprep.subr.mxu0 0.0
        %3279 = vmatpush1.msra.mxu0 0.0
        %3280 = vmatprep.subr.mxu0 0.0
        %3281 = vmatpush1.msra.mxu0 0.0
        %3282 = vmatprep.subr.mxu0 0.0
        %3283 = vmatpush1.msra.mxu0 0.0
        %3284 = vmatprep.subr.mxu0 0.0
        %3285 = vmatpush1.msra.mxu0 0.0
        %3286 = vmatprep.subr.mxu0 0.0
        %3287 = vmatpush1.msra.mxu0 0.0
        %3288 = vmatprep.subr.mxu0 0.0
        %3289 = vmatpush1.msra.mxu0 0.0
        %3290 = vmatprep.subr.mxu0 0.0
        %3291 = vmatpush1.msra.mxu0 0.0
        %3292 = vmatprep.subr.mxu0 0.0
        %3293 = vmatpush1.msra.mxu0 0.0
        %3294 = vmatprep.subr.mxu0 0.0
        %3295 = vmatpush1.msra.mxu0 0.0
        %3296 = vmatprep.subr.mxu0 0.0
        %3297 = vmatpush1.msra.mxu0 0.0
        %3298 = vmatprep.subr.mxu0 0.0
        %3299 = vmatpush1.msra.mxu0 0.0
        %3300 = vmatprep.subr.mxu0 0.0
        %3301 = vmatpush1.msra.mxu0 0.0
        %3302 = vmatprep.subr.mxu0 0.0
        %3303 = vmatpush1.msra.mxu0 0.0
        %3304 = vmatprep.subr.mxu0 0.0
        %3305 = vmatpush1.msra.mxu0 0.0
        %3306 = vmatprep.subr.mxu0 0.0
        %3307 = vmatpush1.msra.mxu0 0.0
        %3308 = vmatprep.subr.mxu0 0.0
        %3309 = vmatpush1.msra.mxu0 0.0
        %3310 = vmatprep.subr.mxu0 0.0
        %3311 = vmatpush1.msra.mxu0 0.0
        %3312 = vmatprep.subr.mxu0 0.0
        %3313 = vmatpush1.msra.mxu0 0.0
        %3314 = vmatprep.mubr.f32.mxu0 0.0
        %3315 = vmatmul.mubr.f32.gmra.mrb[0].mxu0 %v3244
        %v3316 = vpop.f32.mrb[0].mxu0
        %v3317 = vadd.f32 0.0, %v3316
        %v3318 = vpop.f32.mrb[0].mxu0
        %3319 = vdwg.mxu0
        %v3320 = vsub.f32 %v3317, 1.0
        %v3321 = vcvt.f32.s32.to.zero.pseudo %v3320
        %v3322 = vlaneseq
        %v3323 = vshrl.u32 %v3322, 7
        %v3324 = vsub.s32 0, %v3323
        %v3325 = vrot.slane %v3321, %v3324
        %vm3326 = vcmp.eq.s32.totalorder %v3238, %v3325
        %v3327 = vsel %vm3326, 1, 0
        %v3328 = vcvt.s32.f32 %v3327
        %v3329 = vmul.f32 %v3236, %v3328
        %v3331 = vsel %vm3242, %v3329, 0
        %v3333 = vsel %vm3246, %v3095, 0
        %3335 = vmatprep.subr.mxu0 0.0
        %3336 = vmatpush1.msra.mxu0 %v3333
        %3337 = vmatprep.subr.mxu0 0.0
        %3338 = vmatpush1.msra.mxu0 0.0
        %3339 = vmatprep.subr.mxu0 0.0
        %3340 = vmatpush1.msra.mxu0 0.0
        %3341 = vmatprep.subr.mxu0 0.0
        %3342 = vmatpush1.msra.mxu0 0.0
        %3343 = vmatprep.subr.mxu0 0.0
        %3344 = vmatpush1.msra.mxu0 0.0
        %3345 = vmatprep.subr.mxu0 0.0
        %3346 = vmatpush1.msra.mxu0 0.0
        %3347 = vmatprep.subr.mxu0 0.0
        %3348 = vmatpush1.msra.mxu0 0.0
        %3349 = vmatprep.subr.mxu0 0.0
        %3350 = vmatpush1.msra.mxu0 0.0
        %3351 = vmatprep.subr.mxu0 0.0
        %3352 = vmatpush1.msra.mxu0 0.0
        %3353 = vmatprep.subr.mxu0 0.0
        %3354 = vmatpush1.msra.mxu0 0.0
        %3355 = vmatprep.subr.mxu0 0.0
        %3356 = vmatpush1.msra.mxu0 0.0
        %3357 = vmatprep.subr.mxu0 0.0
        %3358 = vmatpush1.msra.mxu0 0.0
        %3359 = vmatprep.subr.mxu0 0.0
        %3360 = vmatpush1.msra.mxu0 0.0
        %3361 = vmatprep.subr.mxu0 0.0
        %3362 = vmatpush1.msra.mxu0 0.0
        %3363 = vmatprep.subr.mxu0 0.0
        %3364 = vmatpush1.msra.mxu0 0.0
        %3365 = vmatprep.subr.mxu0 0.0
        %3366 = vmatpush1.msra.mxu0 0.0
        %3367 = vmatprep.subr.mxu0 0.0
        %3368 = vmatpush1.msra.mxu0 0.0
        %3369 = vmatprep.subr.mxu0 0.0
        %3370 = vmatpush1.msra.mxu0 0.0
        %3371 = vmatprep.subr.mxu0 0.0
        %3372 = vmatpush1.msra.mxu0 0.0
        %3373 = vmatprep.subr.mxu0 0.0
        %3374 = vmatpush1.msra.mxu0 0.0
        %3375 = vmatprep.subr.mxu0 0.0
        %3376 = vmatpush1.msra.mxu0 0.0
        %3377 = vmatprep.subr.mxu0 0.0
        %3378 = vmatpush1.msra.mxu0 0.0
        %3379 = vmatprep.subr.mxu0 0.0
        %3380 = vmatpush1.msra.mxu0 0.0
        %3381 = vmatprep.subr.mxu0 0.0
        %3382 = vmatpush1.msra.mxu0 0.0
        %3383 = vmatprep.subr.mxu0 0.0
        %3384 = vmatpush1.msra.mxu0 0.0
        %3385 = vmatprep.subr.mxu0 0.0
        %3386 = vmatpush1.msra.mxu0 0.0
        %3387 = vmatprep.subr.mxu0 0.0
        %3388 = vmatpush1.msra.mxu0 0.0
        %3389 = vmatprep.subr.mxu0 0.0
        %3390 = vmatpush1.msra.mxu0 0.0
        %3391 = vmatprep.subr.mxu0 0.0
        %3392 = vmatpush1.msra.mxu0 0.0
        %3393 = vmatprep.subr.mxu0 0.0
        %3394 = vmatpush1.msra.mxu0 0.0
        %3395 = vmatprep.subr.mxu0 0.0
        %3396 = vmatpush1.msra.mxu0 0.0
        %3397 = vmatprep.subr.mxu0 0.0
        %3398 = vmatpush1.msra.mxu0 0.0
        %3399 = vmatprep.mubr.f32.mxu0 0.0
        %3400 = vmatmul.mubr.f32.gmra.mrb[0].mxu0 %v3331
        %v3401 = vpop.f32.mrb[0].mxu0
        %v3402 = vadd.f32 0.0, %v3401
        %v3403 = vpop.f32.mrb[0].mxu0
        %3404 = vdwg.mxu0
        %vm3405 = vcmask 259072
        %3406 = vst.msk [vmem:[%s924] sm:$0x3f] %vm3405, %v3402
        %s3407 = sand.u32 %s578, 1
        %s3408 = scalar_lea.sflag [#allocation3], %s3407
        %s3409 = sand.u32 %s578, 1
        %s3410 = smul.addr %s3409, 16
        %s3411 = scalar_lea.vmem [#allocation2], %s3410
        %s3412 = sand.u32 %s46, 1
        %s3413 = scalar_lea.sflag [#allocation5], %s3412
        %s3414 = sand.u32 %s604, 1
        %s3415 = scalar_lea.vmem [#allocation4], %s3414
        %p3416 = scmp.lt.s32.totalorder %s46, 1
        %s3417 = scalar_select %p3416, %s46, 1
        %s3418 = smul.addr %s3417, 8
        %s3419 = scalar_lea.vmem %s26, %s3418
        %s3420 = sand.u32 %s46, 1
        %s3421 = scalar_lea.sflag [#allocation5], %s3420
        %s3422 = sand.u32 %s656, 1
        %s3423 = scalar_lea.vmem [#allocation6], %s3422
        %p3424 = scmp.lt.s32.totalorder %s46, 1
        %s3425 = scalar_select %p3424, %s46, 1
        %s3426 = smul.addr %s3425, 8
        %s3427 = scalar_lea.vmem %s28, %s3426
        // Predicated region
        $region117: #{fwd.1} parent=115 // pred_check
          %p3428 = pneg %p588
        $region118: #{fwd.1} parent=115 // pred_check_branch
          %3430 = sbr.rel (%p3428) target = $region120
        $region119: #{fwd.1} parent=115 // pred_region
          %s3432 = ssub.s32 256, 256
          %3433 = vsyncadd %s3408, %s3432
          %s3434 = smul.addr %s46, 2
          %s3435 = smul.addr %s3434, 128
          %s3436 = scalar_lea.hbm %s24, %s3435
          %s3437 = sshll.u32 %s3411, 4
          %s3438 = int_to_ptr.vmem [resolvable:$true] %s3437
          %3443 = dma.vmem_to_hbm [thread:$0]  %s3438, 256, %s3436, %s3408, 128, 128, 8
        $region120: #{fwd.1} parent=115 // pred_fallthru
          _
        // Predicated region
        $region121: #{fwd.1} parent=115 // pred_check
          %p3444 = pneg %p614
        $region122: #{fwd.1} parent=115 // pred_check_branch
          %3446 = sbr.rel (%p3444) target = $region124
        $region123: #{fwd.1} parent=115 // pred_region
          %s3448 = ssub.s32 16, 16
          %3449 = vsyncadd %s3413, %s3448
          %s3450 = smul.addr %s46, 16
          %s3451 = scalar_lea.hbm %s25, %s3450
          %s3453 = sshll.u32 %s3415, 4
          %s3454 = int_to_ptr.vmem [resolvable:$true] %s3453
          %3456 = dma.vmem_to_hbm [thread:$0]  %s3454, 16, %s3451, %s3413
        $region124: #{fwd.1} parent=115 // pred_fallthru
          _
        // Predicated region
        $region125: #{fwd.1} parent=115 // pred_check
          %p3457 = pneg %p640
        $region126: #{fwd.1} parent=115 // pred_check_branch
          %3459 = sbr.rel (%p3457) target = $region128
        $region127: #{fwd.1} parent=115 // pred_region
          _
        $region128: #{fwd.1} parent=115 // pred_fallthru
          _
        // Predicated region
        $region129: #{fwd.1} parent=115 // pred_check
          %p3460 = pneg %p666
        $region130: #{fwd.1} parent=115 // pred_check_branch
          %3462 = sbr.rel (%p3460) target = $region132
        $region131: #{fwd.1} parent=115 // pred_region
          %s3464 = ssub.s32 16, 16
          %3465 = vsyncadd %s3421, %s3464
          %s3466 = smul.addr %s46, 16
          %s3467 = scalar_lea.hbm %s27, %s3466
          %s3469 = sshll.u32 %s3423, 4
          %s3470 = int_to_ptr.vmem [resolvable:$true] %s3469
          %3472 = dma.vmem_to_hbm [thread:$0]  %s3470, 16, %s3467, %s3421
        $region132: #{fwd.1} parent=115 // pred_fallthru
          _
        // Predicated region
        $region133: #{fwd.1} parent=115 // pred_check
          %p3473 = pneg %p692
        $region134: #{fwd.1} parent=115 // pred_check_branch
          %3475 = sbr.rel (%p3473) target = $region136
        $region135: #{fwd.1} parent=115 // pred_region
          _
        $region136: #{fwd.1} parent=115 // pred_fallthru
          _
      $region116: #{fwd.1} parent=5 // pred_fallthru
        _
      %p3476 = scmp.le.s32.totalorder 2, %s41
      // Predicated region
      $region137: #{fwd.1} parent=5 // pred_check
        %p3477 = pneg %p3476
      $region138: #{fwd.1} parent=5 // pred_check_branch
        %3479 = sbr.rel (%p3477) target = $region140
      $region139: #{fwd.1} parent=5 // pred_region
        %s3480 = ssub.s32 %s41, 2
        // Predicated region
        $region141: #{fwd.1} parent=139 // pred_check
          %p3481 = pneg %p594
        $region142: #{fwd.1} parent=139 // pred_check_branch
          %3483 = sbr.rel (%p3481) target = $region144
        $region143: #{fwd.1} parent=139 // pred_region
          %s3484 = sand.u32 %s579, 1
          %s3485 = scalar_lea.sflag [#allocation3], %s3484
          %s3486 = sand.u32 %s579, 1
          %s3487 = smul.addr %s3486, 16
          %s3488 = scalar_lea.vmem [#allocation2], %s3487
          %3489 = dma.done %s3485, 256
        $region144: #{fwd.1} parent=139 // pred_fallthru
          _
        // Predicated region
        $region145: #{fwd.1} parent=139 // pred_check
          %p3490 = pneg %p620
        $region146: #{fwd.1} parent=139 // pred_check_branch
          %3492 = sbr.rel (%p3490) target = $region148
        $region147: #{fwd.1} parent=139 // pred_region
          %s3493 = sand.u32 %s47, 1
          %s3494 = scalar_lea.sflag [#allocation5], %s3493
          %s3495 = sand.u32 %s605, 1
          %s3496 = scalar_lea.vmem [#allocation4], %s3495
          %3497 = dma.done %s3494, 16
        $region148: #{fwd.1} parent=139 // pred_fallthru
          _
        // Predicated region
        $region149: #{fwd.1} parent=139 // pred_check
          %p3498 = pneg %p646
        $region150: #{fwd.1} parent=139 // pred_check_branch
          %3500 = sbr.rel (%p3498) target = $region152
        $region151: #{fwd.1} parent=139 // pred_region
          %p3501 = scmp.lt.s32.totalorder %s47, 1
          %s3502 = scalar_select %p3501, %s47, 1
          %s3503 = smul.addr %s3502, 8
          %s3504 = scalar_lea.vmem %s26, %s3503
        $region152: #{fwd.1} parent=139 // pred_fallthru
          _
        // Predicated region
        $region153: #{fwd.1} parent=139 // pred_check
          %p3505 = pneg %p672
        $region154: #{fwd.1} parent=139 // pred_check_branch
          %3507 = sbr.rel (%p3505) target = $region156
        $region155: #{fwd.1} parent=139 // pred_region
          %s3508 = sand.u32 %s47, 1
          %s3509 = scalar_lea.sflag [#allocation5], %s3508
          %s3510 = sand.u32 %s657, 1
          %s3511 = scalar_lea.vmem [#allocation6], %s3510
          %3512 = dma.done %s3509, 16
        $region156: #{fwd.1} parent=139 // pred_fallthru
          _
        // Predicated region
        $region157: #{fwd.1} parent=139 // pred_check
          %p3513 = pneg %p698
        $region158: #{fwd.1} parent=139 // pred_check_branch
          %3515 = sbr.rel (%p3513) target = $region160
        $region159: #{fwd.1} parent=139 // pred_region
          %p3516 = scmp.lt.s32.totalorder %s47, 1
          %s3517 = scalar_select %p3516, %s47, 1
          %s3518 = smul.addr %s3517, 8
          %s3519 = scalar_lea.vmem %s28, %s3518
        $region160: #{fwd.1} parent=139 // pred_fallthru
          _
      $region140: #{fwd.1} parent=5 // pred_fallthru
        _
    $region6: #{fwd.1} parent=1 // loop_footer
      %s45 = sadd.s32 1, %s41
    $region7: #{fwd.1} parent=1 // loop_footer_branch
      %40 = sbr.rel target = $region3
    $region8: #{fwd.1} parent=1 // loop_exit
      _
    %3520 = vsyncpa [#allocation3], 1
    %s3521 = scalar_lea.sflag [#allocation3], 1
    %3522 = vsyncpa %s3521, 1
    %3523 = vsyncpa [#allocation5], 1
    %s3524 = scalar_lea.sflag [#allocation5], 1
    %3525 = vsyncpa %s3524, 1

</llo_original>
